<compile_context>
chip_gen: v7x
topology: tpu7x:2x2x1
jax: 0.10.0
libtpu: 0.0.40
codegen_flags: <defaults>
</compile_context>

<pallas_src>
import jax
import jax.numpy as jnp
from jax import lax
from jax.experimental import pallas as pl
from jax.experimental.pallas import tpu as pltpu


# ---------------------------------------------------------------------------
# Conv kernel factory: 3x3 conv (padding=1) as im2col + single MXU matmul,
# with per-image BatchNorm statistics.  Optionally fuses the previous layer's
# folded BN scale/shift + ReLU onto the input before the conv.
# ---------------------------------------------------------------------------
def _make_conv_kernel(pre_affine_relu):

    def body(x_ref, scale, shift, w_ref, b_ref, y_ref, s_ref, ss_ref,
             xpad_ref, col_ref):
        r = pl.program_id(1)                                 # row-tile index
        H, W, Cin = x_ref.shape[1], x_ref.shape[2], x_ref.shape[3]
        TH = y_ref.shape[1]
        Cout = y_ref.shape[3]

        # Once per image: optional fused BN+ReLU of the previous layer, then
        # in-kernel zero padding into VMEM, and stats init.
        # (At UNet scale, replace the resident full image with a halo'd
        #  row-tile DMA so the padded image never has to fit VMEM at once.)
        @pl.when(r == 0)
        def _():
            x = x_ref[0].astype(jnp.float32)                 # (H, W, Cin)
            if pre_affine_relu:
                x = jnp.maximum(x * scale[0, :] + shift[0, :], 0.0)
            xpad_ref[...] = jnp.zeros_like(xpad_ref)
            xpad_ref[1:H + 1, 1:W + 1, :] = x
            s_ref[...] = jnp.zeros_like(s_ref)
            ss_ref[...] = jnp.zeros_like(ss_ref)

        # im2col slab for this row tile: (TH, W, 9*Cin) -> (TH*W, 9*Cin).
        row0 = pl.multiple_of(r * TH, TH)
        xt = xpad_ref[pl.ds(row0, TH + 2), :, :]             # (TH+2, W+2, Cin)
        for kh in range(3):
            for kw in range(3):
                j = kh * 3 + kw
                col_ref[:, :, j * Cin:(j + 1) * Cin] = xt[kh:kh + TH,
                                                          kw:kw + W, :]
        cols = col_ref[...].reshape(TH * W, 9 * Cin).astype(jnp.bfloat16)

        # Single MXU matmul (bf16 in, f32 accumulate) + bias.
        acc = jnp.dot(cols, w_ref[...], preferred_element_type=jnp.float32)
        acc = acc + b_ref[0, :]

        # Per-image BatchNorm statistics (f32 accumulators, reduced in wrapper).
        s_ref[0] += jnp.sum(acc, axis=0, keepdims=True)
        ss_ref[0] += jnp.sum(acc * acc, axis=0, keepdims=True)

        # Conv output tile, stored bf16 to halve HBM traffic.
        y_ref[0] = acc.reshape(TH, W, Cout).astype(y_ref.dtype)

    if pre_affine_relu:
        def kernel(x_ref, scale_ref, shift_ref, w_ref, b_ref,
                   y_ref, s_ref, ss_ref, xpad_ref, col_ref):
            body(x_ref, scale_ref[...], shift_ref[...], w_ref, b_ref,
                 y_ref, s_ref, ss_ref, xpad_ref, col_ref)
    else:
        def kernel(x_ref, w_ref, b_ref, y_ref, s_ref, ss_ref,
                   xpad_ref, col_ref):
            body(x_ref, None, None, w_ref, b_ref,
                 y_ref, s_ref, ss_ref, xpad_ref, col_ref)
    return kernel


def _conv_bn_stats(x_nhwc, w_mat, bias, pre_scale, pre_shift, cout, tile_h):
    """Run one conv layer (optionally with fused preceding BN+ReLU).

    Returns (y_bf16 (N,H,W,cout), sum (N,1,cout), sumsq (N,1,cout))."""
    N, H, W, Cin = x_nhwc.shape
    TH = tile_h if H % tile_h == 0 else H
    pre = pre_scale is not None

    kernel = _make_conv_kernel(pre)

    in_specs = [pl.BlockSpec((1, H, W, Cin), lambda n, r: (n, 0, 0, 0))]
    inputs = [x_nhwc]
    if pre:
        in_specs += [pl.BlockSpec((1, Cin), lambda n, r: (0, 0)),
                     pl.BlockSpec((1, Cin), lambda n, r: (0, 0))]
        inputs += [pre_scale, pre_shift]
    in_specs += [pl.BlockSpec((9 * Cin, cout), lambda n, r: (0, 0)),
                 pl.BlockSpec((1, cout), lambda n, r: (0, 0))]
    inputs += [w_mat, bias]

    y, s, ss = pl.pallas_call(
        kernel,
        out_shape=(
            jax.ShapeDtypeStruct((N, H, W, cout), jnp.bfloat16),
            jax.ShapeDtypeStruct((N, 1, cout), jnp.float32),
            jax.ShapeDtypeStruct((N, 1, cout), jnp.float32),
        ),
        grid_spec=pltpu.PrefetchScalarGridSpec(
            num_scalar_prefetch=0,
            grid=(N, H // TH),
            in_specs=in_specs,
            out_specs=[
                pl.BlockSpec((1, TH, W, cout), lambda n, r: (n, r, 0, 0)),
                pl.BlockSpec((1, 1, cout), lambda n, r: (n, 0, 0)),
                pl.BlockSpec((1, 1, cout), lambda n, r: (n, 0, 0)),
            ],
            scratch_shapes=[
                pltpu.VMEM((H + 2, W + 2, Cin), jnp.float32),   # padded image
                pltpu.VMEM((TH, W, 9 * Cin), jnp.float32),      # im2col slab
            ]),
        compiler_params=pltpu.CompilerParams(
            dimension_semantics=("parallel", "arbitrary"),
            vmem_limit_bytes=32 * 1024 * 1024),
    )(*inputs)
    return y, s, ss


# ---------------------------------------------------------------------------
# Final BN + ReLU: pure-bandwidth elementwise pass over large row blocks.
# ---------------------------------------------------------------------------
def _bn_relu_kernel(y_ref, scale_ref, shift_ref, o_ref):
    z = y_ref[...].astype(jnp.float32) * scale_ref[0, :] + shift_ref[0, :]
    o_ref[...] = jnp.maximum(z, 0.0).astype(o_ref.dtype)


def _fold_bn(s, ss, gamma, beta, count, eps):
    # NOTE: E[x^2]-E[x]^2 in f32 is fine at these scales; use a shifted/two-pass
    # scheme for very large N*H*W or activation magnitudes.
    mean = s.sum(axis=(0, 1)) / count
    var = ss.sum(axis=(0, 1)) / count - mean * mean
    inv = lax.rsqrt(var + eps)
    scale = gamma * inv
    shift = beta - mean * scale
    C = scale.shape[0]
    return (scale.reshape(1, C).astype(jnp.float32),
            shift.reshape(1, C).astype(jnp.float32))


def double_conv_forward(x_nchw, params, eps=1e-5, tile_h=8):
    w1, b1, g1, be1 = params["w1"], params["b1"], params["gamma1"], params["beta1"]
    w2, b2, g2, be2 = params["w2"], params["b2"], params["gamma2"], params["beta2"]
    N, Cin, H, W = x_nchw.shape
    Cmid = w1.shape[0]
    Cout = w2.shape[0]

    # Interface-only layout conversion (a model kept NHWC end-to-end skips both
    # full-tensor transpose passes).  bf16 cast is fused into the same pass.
    x = jnp.transpose(x_nchw, (0, 2, 3, 1)).astype(jnp.bfloat16)

    # (O, I, 3, 3) -> (kh, kw, cin, cout) -> (9*Cin, Cout) matmul weights (bf16).
    w1m = jnp.transpose(w1, (2, 3, 1, 0)).reshape(9 * Cin, Cmid).astype(jnp.bfloat16)
    w2m = jnp.transpose(w2, (2, 3, 1, 0)).reshape(9 * Cmid, Cout).astype(jnp.bfloat16)
    b1r = b1.reshape(1, Cmid).astype(jnp.float32)
    b2r = b2.reshape(1, Cout).astype(jnp.float32)

    count = jnp.float32(N * H * W)

    # conv1 + BN1 batch statistics.
    y1, s1, ss1 = _conv_bn_stats(x, w1m, b1r, None, None, Cmid, tile_h)
    scale1, shift1 = _fold_bn(s1, ss1, g1, be1, count, eps)

    # BN1 + ReLU fused into conv2 (+ BN2 batch statistics).
    y2, s2, ss2 = _conv_bn_stats(y1, w2m, b2r, scale1, shift1, Cout, tile_h)
    scale2, shift2 = _fold_bn(s2, ss2, g2, be2, count, eps)

    # Final BN2 + ReLU over large row blocks of the flattened activation.
    P = N * H * W
    RB = max(d for d in range(1, min(P, 4096) + 1) if P % d == 0)
    out_flat = pl.pallas_call(
        _bn_relu_kernel,
        out_shape=jax.ShapeDtypeStruct((P, Cout), jnp.float32),
        grid_spec=pltpu.PrefetchScalarGridSpec(
            num_scalar_prefetch=0,
            grid=(P // RB,),
            in_specs=[pl.BlockSpec((RB, Cout), lambda i: (i, 0)),
                      pl.BlockSpec((1, Cout), lambda i: (0, 0)),
                      pl.BlockSpec((1, Cout), lambda i: (0, 0))],
            out_specs=pl.BlockSpec((RB, Cout), lambda i: (i, 0))),
        compiler_params=pltpu.CompilerParams(
            dimension_semantics=("parallel",),
            vmem_limit_bytes=32 * 1024 * 1024),
        # input_output_aliases is not used: input is bf16, output f32.
    )(y2.reshape(P, Cout), scale2, shift2)

    out = out_flat.reshape(N, H, W, Cout)
    return jnp.transpose(out, (0, 3, 1, 2))     # back to NCHW (PyTorch layout)


def init_params(key, in_channels, mid_channels, out_channels):
    ks = jax.random.split(key, 8)
    return dict(
        w1=jax.random.normal(ks[0], (mid_channels, in_channels, 3, 3),
                             jnp.float32) * 0.2,
        b1=jax.random.normal(ks[1], (mid_channels,), jnp.float32) * 0.1,
        gamma1=1.0 + 0.1 * jax.random.normal(ks[2], (mid_channels,), jnp.float32),
        beta1=0.1 * jax.random.normal(ks[3], (mid_channels,), jnp.float32),
        w2=jax.random.normal(ks[4], (out_channels, mid_channels, 3, 3),
                             jnp.float32) * 0.2,
        b2=jax.random.normal(ks[5], (out_channels,), jnp.float32) * 0.1,
        gamma2=1.0 + 0.1 * jax.random.normal(ks[6], (out_channels,), jnp.float32),
        beta2=0.1 * jax.random.normal(ks[7], (out_channels,), jnp.float32),
    )


def reference_forward(x_nchw, params, eps=1e-5):
    """Pure-JAX f32 reference reproducing the PyTorch DoubleConv forward
    (BatchNorm2d in training mode: batch stats, biased variance)."""
    def conv_bn_relu(x, w, b, gamma, beta):
        y = lax.conv_general_dilated(
            x, w, (1, 1), ((1, 1), (1, 1)),
            dimension_numbers=("NCHW", "OIHW", "NCHW"))
        y = y + b[None, :, None, None]
        mean = y.mean(axis=(0, 2, 3))
        var = y.var(axis=(0, 2, 3))
        y = (y - mean[None, :, None, None]) * lax.rsqrt(var + eps)[None, :, None, None]
        y = y * gamma[None, :, None, None] + beta[None, :, None, None]
        return jnp.maximum(y, 0.0)

    y = conv_bn_relu(x_nchw, params["w1"], params["b1"],
                     params["gamma1"], params["beta1"])
    return conv_bn_relu(y, params["w2"], params["b2"],
                        params["gamma2"], params["beta2"])


if __name__ == "__main__":
    key = jax.random.PRNGKey(0)
    kx, kp = jax.random.split(key)

    N, Cin, Cmid, Cout, H, W = 2, 4, 8, 8, 16, 16
    x = jax.random.normal(kx, (N, Cin, H, W), jnp.float32)
    params = init_params(kp, Cin, Cmid, Cout)

    out = jax.jit(double_conv_forward)(x, params)
    out = jax.block_until_ready(out)

    ref = reference_forward(x, params)
    assert out.shape == (N, Cout, H, W)
    # Tolerance accounts for bf16 activations/weights in the kernels vs an f32
    # reference (f32 accumulation everywhere); structural errors would be O(1).
    assert jnp.allclose(out, ref, atol=5e-2, rtol=5e-2), (
        f"max abs diff {jnp.max(jnp.abs(out - ref))}")

    print("KERNEL_OK")
</pallas_src>

<mosaic_0001>
module attributes {stable_mosaic.version = 11 : i64} {
  func.func @kernel(%arg0: i32, %arg1: i32, %arg2: memref<1x16x16x4xbf16, #tpu.memory_space<vmem>>, %arg3: memref<36x8xbf16, #tpu.memory_space<vmem>>, %arg4: memref<1x8xf32, #tpu.memory_space<vmem>>, %arg5: memref<1x8x16x8xbf16, #tpu.memory_space<vmem>>, %arg6: memref<1x1x8xf32, #tpu.memory_space<vmem>>, %arg7: memref<1x1x8xf32, #tpu.memory_space<vmem>>, %arg8: memref<18x18x4xf32, #tpu.memory_space<vmem>>, %arg9: memref<8x16x36xf32, #tpu.memory_space<vmem>>) attributes {dimension_semantics = [#tpu.dimension_semantics<parallel>, #tpu.dimension_semantics<arbitrary>], iteration_bounds = array<i64: 2, 2>, scalar_prefetch = 0 : i64, scratch_operands = 2 : i64, tpu.core_type = #tpu.core_type<tc>, window_params = [{transform_indices = @transform_0, window_bounds = array<i64: 1, 16, 16, 4>}, {pipeline_mode = #tpu.pipeline_mode<synchronous>, transform_indices = @transform_1, window_bounds = array<i64: 36, 8>}, {pipeline_mode = #tpu.pipeline_mode<synchronous>, transform_indices = @transform_2, window_bounds = array<i64: 1, 8>}, {transform_indices = @transform_3, window_bounds = array<i64: 1, 8, 16, 8>}, {transform_indices = @transform_4, window_bounds = array<i64: 1, 1, 8>}, {transform_indices = @transform_5, window_bounds = array<i64: 1, 1, 8>}]} {
    %c0_i32 = arith.constant 0 : i32
    %0 = arith.cmpi eq, %arg1, %c0_i32 : i32
    %1 = arith.extui %0 : i1 to i32
    %c0_i32_0 = arith.constant 0 : i32
    %2 = arith.cmpi ne, %1, %c0_i32_0 : i32
    scf.if %2 {
      %c0_46 = arith.constant 0 : index
      %c0_47 = arith.constant 0 : index
      %c0_48 = arith.constant 0 : index
      %c0_49 = arith.constant 0 : index
      %57 = vector.load %arg2[%c0_46, %c0_47, %c0_48, %c0_49] : memref<1x16x16x4xbf16, #tpu.memory_space<vmem>>, vector<1x16x16x4xbf16>
      %58 = vector.shape_cast %57 : vector<1x16x16x4xbf16> to vector<16x16x4xbf16>
      %59 = arith.extf %58 : vector<16x16x4xbf16> to vector<16x16x4xf32>
      %cst_50 = arith.constant 0.000000e+00 : f32
      %60 = vector.broadcast %cst_50 : f32 to vector<18x18x4xf32>
      %c0_51 = arith.constant 0 : index
      %c0_52 = arith.constant 0 : index
      %c0_53 = arith.constant 0 : index
      %61 = vector.load %arg8[%c0_51, %c0_52, %c0_53] : memref<18x18x4xf32, #tpu.memory_space<vmem>>, vector<18x18x4xf32>
      tpu.vector_store %arg8[%c0_51, %c0_52, %c0_53], %60 {strides = array<i32>} : memref<18x18x4xf32, #tpu.memory_space<vmem>>, vector<18x18x4xf32>,
      %c1 = arith.constant 1 : index
      %c1_54 = arith.constant 1 : index
      %c0_55 = arith.constant 0 : index
      %62 = vector.load %arg8[%c1, %c1_54, %c0_55] : memref<18x18x4xf32, #tpu.memory_space<vmem>>, vector<16x16x4xf32>
      tpu.vector_store %arg8[%c1, %c1_54, %c0_55], %59 {strides = array<i32>} : memref<18x18x4xf32, #tpu.memory_space<vmem>>, vector<16x16x4xf32>,
      %cst_56 = arith.constant 0.000000e+00 : f32
      %63 = vector.broadcast %cst_56 : f32 to vector<1x1x8xf32>
      %c0_57 = arith.constant 0 : index
      %c0_58 = arith.constant 0 : index
      %c0_59 = arith.constant 0 : index
      %64 = vector.load %arg6[%c0_57, %c0_58, %c0_59] : memref<1x1x8xf32, #tpu.memory_space<vmem>>, vector<1x1x8xf32>
      tpu.vector_store %arg6[%c0_57, %c0_58, %c0_59], %63 {strides = array<i32>} : memref<1x1x8xf32, #tpu.memory_space<vmem>>, vector<1x1x8xf32>,
      %cst_60 = arith.constant 0.000000e+00 : f32
      %65 = vector.broadcast %cst_60 : f32 to vector<1x1x8xf32>
      %c0_61 = arith.constant 0 : index
      %c0_62 = arith.constant 0 : index
      %c0_63 = arith.constant 0 : index
      %66 = vector.load %arg7[%c0_61, %c0_62, %c0_63] : memref<1x1x8xf32, #tpu.memory_space<vmem>>, vector<1x1x8xf32>
      tpu.vector_store %arg7[%c0_61, %c0_62, %c0_63], %65 {strides = array<i32>} : memref<1x1x8xf32, #tpu.memory_space<vmem>>, vector<1x1x8xf32>,
    } else {
    }
    %c8_i32 = arith.constant 8 : i32
    %3 = arith.muli %arg1, %c8_i32 : i32
    %4 = tpu.assume_multiple %3, 8 : i32
    %5 = arith.index_cast %4 : i32 to index
    %c0 = arith.constant 0 : index
    %c0_1 = arith.constant 0 : index
    %6 = vector.load %arg8[%5, %c0, %c0_1] : memref<18x18x4xf32, #tpu.memory_space<vmem>>, vector<10x18x4xf32>
    %7 = vector.extract_strided_slice %6 {offsets = [0, 0, 0], sizes = [8, 16, 4], strides = [1, 1, 1]} : vector<10x18x4xf32> to vector<8x16x4xf32>
    %c0_2 = arith.constant 0 : index
    %c0_3 = arith.constant 0 : index
    %c0_4 = arith.constant 0 : index
    %8 = vector.load %arg9[%c0_2, %c0_3, %c0_4] : memref<8x16x36xf32, #tpu.memory_space<vmem>>, vector<8x16x4xf32>
    tpu.vector_store %arg9[%c0_2, %c0_3, %c0_4], %7 {strides = array<i32>} : memref<8x16x36xf32, #tpu.memory_space<vmem>>, vector<8x16x4xf32>,
    %9 = vector.extract_strided_slice %6 {offsets = [0, 1, 0], sizes = [8, 16, 4], strides = [1, 1, 1]} : vector<10x18x4xf32> to vector<8x16x4xf32>
    %c0_5 = arith.constant 0 : index
    %c0_6 = arith.constant 0 : index
    %c4 = arith.constant 4 : index
    %10 = vector.load %arg9[%c0_5, %c0_6, %c4] : memref<8x16x36xf32, #tpu.memory_space<vmem>>, vector<8x16x4xf32>
    tpu.vector_store %arg9[%c0_5, %c0_6, %c4], %9 {strides = array<i32>} : memref<8x16x36xf32, #tpu.memory_space<vmem>>, vector<8x16x4xf32>,
    %11 = vector.extract_strided_slice %6 {offsets = [0, 2, 0], sizes = [8, 16, 4], strides = [1, 1, 1]} : vector<10x18x4xf32> to vector<8x16x4xf32>
    %c0_7 = arith.constant 0 : index
    %c0_8 = arith.constant 0 : index
    %c8 = arith.constant 8 : index
    %12 = vector.load %arg9[%c0_7, %c0_8, %c8] : memref<8x16x36xf32, #tpu.memory_space<vmem>>, vector<8x16x4xf32>
    tpu.vector_store %arg9[%c0_7, %c0_8, %c8], %11 {strides = array<i32>} : memref<8x16x36xf32, #tpu.memory_space<vmem>>, vector<8x16x4xf32>,
    %13 = vector.extract_strided_slice %6 {offsets = [1, 0, 0], sizes = [8, 16, 4], strides = [1, 1, 1]} : vector<10x18x4xf32> to vector<8x16x4xf32>
    %c0_9 = arith.constant 0 : index
    %c0_10 = arith.constant 0 : index
    %c12 = arith.constant 12 : index
    %14 = vector.load %arg9[%c0_9, %c0_10, %c12] : memref<8x16x36xf32, #tpu.memory_space<vmem>>, vector<8x16x4xf32>
    tpu.vector_store %arg9[%c0_9, %c0_10, %c12], %13 {strides = array<i32>} : memref<8x16x36xf32, #tpu.memory_space<vmem>>, vector<8x16x4xf32>,
    %15 = vector.extract_strided_slice %6 {offsets = [1, 1, 0], sizes = [8, 16, 4], strides = [1, 1, 1]} : vector<10x18x4xf32> to vector<8x16x4xf32>
    %c0_11 = arith.constant 0 : index
    %c0_12 = arith.constant 0 : index
    %c16 = arith.constant 16 : index
    %16 = vector.load %arg9[%c0_11, %c0_12, %c16] : memref<8x16x36xf32, #tpu.memory_space<vmem>>, vector<8x16x4xf32>
    tpu.vector_store %arg9[%c0_11, %c0_12, %c16], %15 {strides = array<i32>} : memref<8x16x36xf32, #tpu.memory_space<vmem>>, vector<8x16x4xf32>,
    %17 = vector.extract_strided_slice %6 {offsets = [1, 2, 0], sizes = [8, 16, 4], strides = [1, 1, 1]} : vector<10x18x4xf32> to vector<8x16x4xf32>
    %c0_13 = arith.constant 0 : index
    %c0_14 = arith.constant 0 : index
    %c20 = arith.constant 20 : index
    %18 = vector.load %arg9[%c0_13, %c0_14, %c20] : memref<8x16x36xf32, #tpu.memory_space<vmem>>, vector<8x16x4xf32>
    tpu.vector_store %arg9[%c0_13, %c0_14, %c20], %17 {strides = array<i32>} : memref<8x16x36xf32, #tpu.memory_space<vmem>>, vector<8x16x4xf32>,
    %19 = vector.extract_strided_slice %6 {offsets = [2, 0, 0], sizes = [8, 16, 4], strides = [1, 1, 1]} : vector<10x18x4xf32> to vector<8x16x4xf32>
    %c0_15 = arith.constant 0 : index
    %c0_16 = arith.constant 0 : index
    %c24 = arith.constant 24 : index
    %20 = vector.load %arg9[%c0_15, %c0_16, %c24] : memref<8x16x36xf32, #tpu.memory_space<vmem>>, vector<8x16x4xf32>
    tpu.vector_store %arg9[%c0_15, %c0_16, %c24], %19 {strides = array<i32>} : memref<8x16x36xf32, #tpu.memory_space<vmem>>, vector<8x16x4xf32>,
    %21 = vector.extract_strided_slice %6 {offsets = [2, 1, 0], sizes = [8, 16, 4], strides = [1, 1, 1]} : vector<10x18x4xf32> to vector<8x16x4xf32>
    %c0_17 = arith.constant 0 : index
    %c0_18 = arith.constant 0 : index
    %c28 = arith.constant 28 : index
    %22 = vector.load %arg9[%c0_17, %c0_18, %c28] : memref<8x16x36xf32, #tpu.memory_space<vmem>>, vector<8x16x4xf32>
    tpu.vector_store %arg9[%c0_17, %c0_18, %c28], %21 {strides = array<i32>} : memref<8x16x36xf32, #tpu.memory_space<vmem>>, vector<8x16x4xf32>,
    %23 = vector.extract_strided_slice %6 {offsets = [2, 2, 0], sizes = [8, 16, 4], strides = [1, 1, 1]} : vector<10x18x4xf32> to vector<8x16x4xf32>
    %c0_19 = arith.constant 0 : index
    %c0_20 = arith.constant 0 : index
    %c32 = arith.constant 32 : index
    %24 = vector.load %arg9[%c0_19, %c0_20, %c32] : memref<8x16x36xf32, #tpu.memory_space<vmem>>, vector<8x16x4xf32>
    tpu.vector_store %arg9[%c0_19, %c0_20, %c32], %23 {strides = array<i32>} : memref<8x16x36xf32, #tpu.memory_space<vmem>>, vector<8x16x4xf32>,
    %c0_21 = arith.constant 0 : index
    %c0_22 = arith.constant 0 : index
    %c0_23 = arith.constant 0 : index
    %25 = vector.load %arg9[%c0_21, %c0_22, %c0_23] : memref<8x16x36xf32, #tpu.memory_space<vmem>>, vector<8x16x36xf32>
    %26 = vector.shape_cast %25 : vector<8x16x36xf32> to vector<128x36xf32>
    %27 = arith.truncf %26 : vector<128x36xf32> to vector<128x36xbf16>
    %c0_24 = arith.constant 0 : index
    %c0_25 = arith.constant 0 : index
    %28 = vector.load %arg3[%c0_24, %c0_25] : memref<36x8xbf16, #tpu.memory_space<vmem>>, vector<36x8xbf16>
    %cst = arith.constant dense<0.000000e+00> : vector<128x8xf32>
    %29 = tpu.matmul %27, %28, %cst {dimension_numbers = #tpu.dot_dimension_numbers<[1], [0], [0], [1], [0, 0, 1, 1], [], []>} : vector<128x36xbf16>, vector<36x8xbf16>, vector<128x8xf32> -> vector<128x8xf32>
    %c0_26 = arith.constant 0 : index
    %c0_27 = arith.constant 0 : index
    %30 = vector.load %arg4[%c0_26, %c0_27] : memref<1x8xf32, #tpu.memory_space<vmem>>, vector<1x8xf32>
    %31 = vector.shape_cast %30 : vector<1x8xf32> to vector<8xf32>
    %32 = vector.shape_cast %31 : vector<8xf32> to vector<1x8xf32>
    %33 = vector.broadcast %32 : vector<1x8xf32> to vector<128x8xf32>
    %34 = arith.addf %29, %33 : vector<128x8xf32>
    %c0_28 = arith.constant 0 : index
    %c0_29 = arith.constant 0 : index
    %c0_30 = arith.constant 0 : index
    %35 = vector.load %arg6[%c0_28, %c0_29, %c0_30] : memref<1x1x8xf32, #tpu.memory_space<vmem>>, vector<1x1x8xf32>
    %36 = vector.shape_cast %35 : vector<1x1x8xf32> to vector<1x8xf32>
    %cst_31 = arith.constant dense<0.000000e+00> : vector<8xf32>
    %37 = vector.multi_reduction <add>, %34, %cst_31 [0] : vector<128x8xf32> to vector<8xf32>
    %38 = vector.shape_cast %37 : vector<8xf32> to vector<1x8xf32>
    %39 = arith.addf %36, %38 : vector<1x8xf32>
    %c0_32 = arith.constant 0 : index
    %c0_33 = arith.constant 0 : index
    %c0_34 = arith.constant 0 : index
    %40 = vector.load %arg6[%c0_32, %c0_33, %c0_34] : memref<1x1x8xf32, #tpu.memory_space<vmem>>, vector<1x1x8xf32>
    %41 = vector.shape_cast %40 : vector<1x1x8xf32> to vector<1x8xf32>
    %42 = vector.shape_cast %39 : vector<1x8xf32> to vector<1x1x8xf32>
    tpu.vector_store %arg6[%c0_32, %c0_33, %c0_34], %42 {strides = array<i32>} : memref<1x1x8xf32, #tpu.memory_space<vmem>>, vector<1x1x8xf32>,
    %c0_35 = arith.constant 0 : index
    %c0_36 = arith.constant 0 : index
    %c0_37 = arith.constant 0 : index
    %43 = vector.load %arg7[%c0_35, %c0_36, %c0_37] : memref<1x1x8xf32, #tpu.memory_space<vmem>>, vector<1x1x8xf32>
    %44 = vector.shape_cast %43 : vector<1x1x8xf32> to vector<1x8xf32>
    %45 = arith.mulf %34, %34 : vector<128x8xf32>
    %cst_38 = arith.constant dense<0.000000e+00> : vector<8xf32>
    %46 = vector.multi_reduction <add>, %45, %cst_38 [0] : vector<128x8xf32> to vector<8xf32>
    %47 = vector.shape_cast %46 : vector<8xf32> to vector<1x8xf32>
    %48 = arith.addf %44, %47 : vector<1x8xf32>
    %c0_39 = arith.constant 0 : index
    %c0_40 = arith.constant 0 : index
    %c0_41 = arith.constant 0 : index
    %49 = vector.load %arg7[%c0_39, %c0_40, %c0_41] : memref<1x1x8xf32, #tpu.memory_space<vmem>>, vector<1x1x8xf32>
    %50 = vector.shape_cast %49 : vector<1x1x8xf32> to vector<1x8xf32>
    %51 = vector.shape_cast %48 : vector<1x8xf32> to vector<1x1x8xf32>
    tpu.vector_store %arg7[%c0_39, %c0_40, %c0_41], %51 {strides = array<i32>} : memref<1x1x8xf32, #tpu.memory_space<vmem>>, vector<1x1x8xf32>,
    %52 = vector.shape_cast %34 : vector<128x8xf32> to vector<8x16x8xf32>
    %53 = arith.truncf %52 : vector<8x16x8xf32> to vector<8x16x8xbf16>
    %c0_42 = arith.constant 0 : index
    %c0_43 = arith.constant 0 : index
    %c0_44 = arith.constant 0 : index
    %c0_45 = arith.constant 0 : index
    %54 = vector.load %arg5[%c0_42, %c0_43, %c0_44, %c0_45] : memref<1x8x16x8xbf16, #tpu.memory_space<vmem>>, vector<1x8x16x8xbf16>
    %55 = vector.shape_cast %54 : vector<1x8x16x8xbf16> to vector<8x16x8xbf16>
    %56 = vector.shape_cast %53 : vector<8x16x8xbf16> to vector<1x8x16x8xbf16>
    tpu.vector_store %arg5[%c0_42, %c0_43, %c0_44, %c0_45], %56 {strides = array<i32>} : memref<1x8x16x8xbf16, #tpu.memory_space<vmem>>, vector<1x8x16x8xbf16>,
    return
  }
  func.func @transform_0(%arg0: i32, %arg1: i32) -> (i32, i32, i32, i32) {
    %c0_i32 = arith.constant 0 : i32
    %c0_i32_0 = arith.constant 0 : i32
    %c0_i32_1 = arith.constant 0 : i32
    %c0_i32_2 = arith.constant 0 : i32
    return %arg0, %c0_i32, %c0_i32_0, %c0_i32_1 : i32, i32, i32, i32
  }
  func.func @transform_1(%arg0: i32, %arg1: i32) -> (i32, i32) {
    %c0_i32 = arith.constant 0 : i32
    %c0_i32_0 = arith.constant 0 : i32
    %c0_i32_1 = arith.constant 0 : i32
    return %c0_i32, %c0_i32_0 : i32, i32
  }
  func.func @transform_2(%arg0: i32, %arg1: i32) -> (i32, i32) {
    %c0_i32 = arith.constant 0 : i32
    %c0_i32_0 = arith.constant 0 : i32
    %c0_i32_1 = arith.constant 0 : i32
    return %c0_i32, %c0_i32_0 : i32, i32
  }
  func.func @transform_3(%arg0: i32, %arg1: i32) -> (i32, i32, i32, i32) {
    %c0_i32 = arith.constant 0 : i32
    %c0_i32_0 = arith.constant 0 : i32
    %c0_i32_1 = arith.constant 0 : i32
    return %arg0, %arg1, %c0_i32, %c0_i32_0 : i32, i32, i32, i32
  }
  func.func @transform_4(%arg0: i32, %arg1: i32) -> (i32, i32, i32) {
    %c0_i32 = arith.constant 0 : i32
    %c0_i32_0 = arith.constant 0 : i32
    %c0_i32_1 = arith.constant 0 : i32
    return %arg0, %c0_i32, %c0_i32_0 : i32, i32, i32
  }
  func.func @transform_5(%arg0: i32, %arg1: i32) -> (i32, i32, i32) {
    %c0_i32 = arith.constant 0 : i32
    %c0_i32_0 = arith.constant 0 : i32
    %c0_i32_1 = arith.constant 0 : i32
    return %arg0, %c0_i32, %c0_i32_0 : i32, i32, i32
  }
}

module attributes {stable_mosaic.version = 11 : i64} {
  func.func @_bn_relu_kernel(%arg0: i32, %arg1: memref<512x8xbf16, #tpu.memory_space<vmem>>, %arg2: memref<1x8xf32, #tpu.memory_space<vmem>>, %arg3: memref<1x8xf32, #tpu.memory_space<vmem>>, %arg4: memref<512x8xf32, #tpu.memory_space<vmem>>) attributes {dimension_semantics = [#tpu.dimension_semantics<parallel>], iteration_bounds = array<i64: 1>, scalar_prefetch = 0 : i64, scratch_operands = 0 : i64, tpu.core_type = #tpu.core_type<tc>, window_params = [{transform_indices = @transform_0, window_bounds = array<i64: 512, 8>}, {pipeline_mode = #tpu.pipeline_mode<synchronous>, transform_indices = @transform_1, window_bounds = array<i64: 1, 8>}, {pipeline_mode = #tpu.pipeline_mode<synchronous>, transform_indices = @transform_2, window_bounds = array<i64: 1, 8>}, {transform_indices = @transform_3, window_bounds = array<i64: 512, 8>}]} {
    %c0 = arith.constant 0 : index
    %c0_0 = arith.constant 0 : index
    %0 = vector.load %arg1[%c0, %c0_0] : memref<512x8xbf16, #tpu.memory_space<vmem>>, vector<512x8xbf16>
    %1 = arith.extf %0 : vector<512x8xbf16> to vector<512x8xf32>
    %c0_1 = arith.constant 0 : index
    %c0_2 = arith.constant 0 : index
    %2 = vector.load %arg2[%c0_1, %c0_2] : memref<1x8xf32, #tpu.memory_space<vmem>>, vector<1x8xf32>
    %3 = vector.shape_cast %2 : vector<1x8xf32> to vector<8xf32>
    %4 = vector.shape_cast %3 : vector<8xf32> to vector<1x8xf32>
    %5 = vector.broadcast %4 : vector<1x8xf32> to vector<512x8xf32>
    %6 = arith.mulf %1, %5 : vector<512x8xf32>
    %c0_3 = arith.constant 0 : index
    %c0_4 = arith.constant 0 : index
    %7 = vector.load %arg3[%c0_3, %c0_4] : memref<1x8xf32, #tpu.memory_space<vmem>>, vector<1x8xf32>
    %8 = vector.shape_cast %7 : vector<1x8xf32> to vector<8xf32>
    %9 = vector.shape_cast %8 : vector<8xf32> to vector<1x8xf32>
    %10 = vector.broadcast %9 : vector<1x8xf32> to vector<512x8xf32>
    %11 = arith.addf %6, %10 : vector<512x8xf32>
    %cst = arith.constant 0.000000e+00 : f32
    %12 = vector.broadcast %cst : f32 to vector<512x8xf32>
    %13 = arith.maximumf %11, %12 : vector<512x8xf32>
    %c0_5 = arith.constant 0 : index
    %c0_6 = arith.constant 0 : index
    %14 = vector.load %arg4[%c0_5, %c0_6] : memref<512x8xf32, #tpu.memory_space<vmem>>, vector<512x8xf32>
    tpu.vector_store %arg4[%c0_5, %c0_6], %13 {strides = array<i32>} : memref<512x8xf32, #tpu.memory_space<vmem>>, vector<512x8xf32>,
    return
  }
  func.func @transform_0(%arg0: i32) -> (i32, i32) {
    %c0_i32 = arith.constant 0 : i32
    %c0_i32_0 = arith.constant 0 : i32
    return %arg0, %c0_i32 : i32, i32
  }
  func.func @transform_1(%arg0: i32) -> (i32, i32) {
    %c0_i32 = arith.constant 0 : i32
    %c0_i32_0 = arith.constant 0 : i32
    %c0_i32_1 = arith.constant 0 : i32
    return %c0_i32, %c0_i32_0 : i32, i32
  }
  func.func @transform_2(%arg0: i32) -> (i32, i32) {
    %c0_i32 = arith.constant 0 : i32
    %c0_i32_0 = arith.constant 0 : i32
    %c0_i32_1 = arith.constant 0 : i32
    return %c0_i32, %c0_i32_0 : i32, i32
  }
  func.func @transform_3(%arg0: i32) -> (i32, i32) {
    %c0_i32 = arith.constant 0 : i32
    %c0_i32_0 = arith.constant 0 : i32
    return %arg0, %c0_i32 : i32, i32
  }
}

module attributes {stable_mosaic.version = 11 : i64} {
  func.func @kernel(%arg0: i32, %arg1: i32, %arg2: memref<1x16x16x8xbf16, #tpu.memory_space<vmem>>, %arg3: memref<1x8xf32, #tpu.memory_space<vmem>>, %arg4: memref<1x8xf32, #tpu.memory_space<vmem>>, %arg5: memref<72x8xbf16, #tpu.memory_space<vmem>>, %arg6: memref<1x8xf32, #tpu.memory_space<vmem>>, %arg7: memref<1x8x16x8xbf16, #tpu.memory_space<vmem>>, %arg8: memref<1x1x8xf32, #tpu.memory_space<vmem>>, %arg9: memref<1x1x8xf32, #tpu.memory_space<vmem>>, %arg10: memref<18x18x8xf32, #tpu.memory_space<vmem>>, %arg11: memref<8x16x72xf32, #tpu.memory_space<vmem>>) attributes {dimension_semantics = [#tpu.dimension_semantics<parallel>, #tpu.dimension_semantics<arbitrary>], iteration_bounds = array<i64: 2, 2>, scalar_prefetch = 0 : i64, scratch_operands = 2 : i64, tpu.core_type = #tpu.core_type<tc>, window_params = [{transform_indices = @transform_0, window_bounds = array<i64: 1, 16, 16, 8>}, {pipeline_mode = #tpu.pipeline_mode<synchronous>, transform_indices = @transform_1, window_bounds = array<i64: 1, 8>}, {pipeline_mode = #tpu.pipeline_mode<synchronous>, transform_indices = @transform_2, window_bounds = array<i64: 1, 8>}, {pipeline_mode = #tpu.pipeline_mode<synchronous>, transform_indices = @transform_3, window_bounds = array<i64: 72, 8>}, {pipeline_mode = #tpu.pipeline_mode<synchronous>, transform_indices = @transform_4, window_bounds = array<i64: 1, 8>}, {transform_indices = @transform_5, window_bounds = array<i64: 1, 8, 16, 8>}, {transform_indices = @transform_6, window_bounds = array<i64: 1, 1, 8>}, {transform_indices = @transform_7, window_bounds = array<i64: 1, 1, 8>}]} {
    %c0 = arith.constant 0 : index
    %c0_0 = arith.constant 0 : index
    %0 = vector.load %arg3[%c0, %c0_0] : memref<1x8xf32, #tpu.memory_space<vmem>>, vector<1x8xf32>
    %c0_1 = arith.constant 0 : index
    %c0_2 = arith.constant 0 : index
    %1 = vector.load %arg4[%c0_1, %c0_2] : memref<1x8xf32, #tpu.memory_space<vmem>>, vector<1x8xf32>
    %c0_i32 = arith.constant 0 : i32
    %2 = arith.cmpi eq, %arg1, %c0_i32 : i32
    %3 = arith.extui %2 : i1 to i32
    %c0_i32_3 = arith.constant 0 : i32
    %4 = arith.cmpi ne, %3, %c0_i32_3 : i32
    scf.if %4 {
      %c0_50 = arith.constant 0 : index
      %c0_51 = arith.constant 0 : index
      %c0_52 = arith.constant 0 : index
      %c0_53 = arith.constant 0 : index
      %59 = vector.load %arg2[%c0_50, %c0_51, %c0_52, %c0_53] : memref<1x16x16x8xbf16, #tpu.memory_space<vmem>>, vector<1x16x16x8xbf16>
      %60 = vector.shape_cast %59 : vector<1x16x16x8xbf16> to vector<16x16x8xbf16>
      %61 = arith.extf %60 : vector<16x16x8xbf16> to vector<16x16x8xf32>
      %62 = vector.shape_cast %0 : vector<1x8xf32> to vector<8xf32>
      %63 = vector.shape_cast %62 : vector<8xf32> to vector<1x1x8xf32>
      %64 = vector.broadcast %63 : vector<1x1x8xf32> to vector<16x16x8xf32>
      %65 = arith.mulf %61, %64 : vector<16x16x8xf32>
      %66 = vector.shape_cast %1 : vector<1x8xf32> to vector<8xf32>
      %67 = vector.shape_cast %66 : vector<8xf32> to vector<1x1x8xf32>
      %68 = vector.broadcast %67 : vector<1x1x8xf32> to vector<16x16x8xf32>
      %69 = arith.addf %65, %68 : vector<16x16x8xf32>
      %cst_54 = arith.constant 0.000000e+00 : f32
      %70 = vector.broadcast %cst_54 : f32 to vector<16x16x8xf32>
      %71 = arith.maximumf %69, %70 : vector<16x16x8xf32>
      %cst_55 = arith.constant 0.000000e+00 : f32
      %72 = vector.broadcast %cst_55 : f32 to vector<18x18x8xf32>
      %c0_56 = arith.constant 0 : index
      %c0_57 = arith.constant 0 : index
      %c0_58 = arith.constant 0 : index
      %73 = vector.load %arg10[%c0_56, %c0_57, %c0_58] : memref<18x18x8xf32, #tpu.memory_space<vmem>>, vector<18x18x8xf32>
      tpu.vector_store %arg10[%c0_56, %c0_57, %c0_58], %72 {strides = array<i32>} : memref<18x18x8xf32, #tpu.memory_space<vmem>>, vector<18x18x8xf32>,
      %c1 = arith.constant 1 : index
      %c1_59 = arith.constant 1 : index
      %c0_60 = arith.constant 0 : index
      %74 = vector.load %arg10[%c1, %c1_59, %c0_60] : memref<18x18x8xf32, #tpu.memory_space<vmem>>, vector<16x16x8xf32>
      tpu.vector_store %arg10[%c1, %c1_59, %c0_60], %71 {strides = array<i32>} : memref<18x18x8xf32, #tpu.memory_space<vmem>>, vector<16x16x8xf32>,
      %cst_61 = arith.constant 0.000000e+00 : f32
      %75 = vector.broadcast %cst_61 : f32 to vector<1x1x8xf32>
      %c0_62 = arith.constant 0 : index
      %c0_63 = arith.constant 0 : index
      %c0_64 = arith.constant 0 : index
      %76 = vector.load %arg8[%c0_62, %c0_63, %c0_64] : memref<1x1x8xf32, #tpu.memory_space<vmem>>, vector<1x1x8xf32>
      tpu.vector_store %arg8[%c0_62, %c0_63, %c0_64], %75 {strides = array<i32>} : memref<1x1x8xf32, #tpu.memory_space<vmem>>, vector<1x1x8xf32>,
      %cst_65 = arith.constant 0.000000e+00 : f32
      %77 = vector.broadcast %cst_65 : f32 to vector<1x1x8xf32>
      %c0_66 = arith.constant 0 : index
      %c0_67 = arith.constant 0 : index
      %c0_68 = arith.constant 0 : index
      %78 = vector.load %arg9[%c0_66, %c0_67, %c0_68] : memref<1x1x8xf32, #tpu.memory_space<vmem>>, vector<1x1x8xf32>
      tpu.vector_store %arg9[%c0_66, %c0_67, %c0_68], %77 {strides = array<i32>} : memref<1x1x8xf32, #tpu.memory_space<vmem>>, vector<1x1x8xf32>,
    } else {
    }
    %c8_i32 = arith.constant 8 : i32
    %5 = arith.muli %arg1, %c8_i32 : i32
    %6 = tpu.assume_multiple %5, 8 : i32
    %7 = arith.index_cast %6 : i32 to index
    %c0_4 = arith.constant 0 : index
    %c0_5 = arith.constant 0 : index
    %8 = vector.load %arg10[%7, %c0_4, %c0_5] : memref<18x18x8xf32, #tpu.memory_space<vmem>>, vector<10x18x8xf32>
    %9 = vector.extract_strided_slice %8 {offsets = [0, 0, 0], sizes = [8, 16, 8], strides = [1, 1, 1]} : vector<10x18x8xf32> to vector<8x16x8xf32>
    %c0_6 = arith.constant 0 : index
    %c0_7 = arith.constant 0 : index
    %c0_8 = arith.constant 0 : index
    %10 = vector.load %arg11[%c0_6, %c0_7, %c0_8] : memref<8x16x72xf32, #tpu.memory_space<vmem>>, vector<8x16x8xf32>
    tpu.vector_store %arg11[%c0_6, %c0_7, %c0_8], %9 {strides = array<i32>} : memref<8x16x72xf32, #tpu.memory_space<vmem>>, vector<8x16x8xf32>,
    %11 = vector.extract_strided_slice %8 {offsets = [0, 1, 0], sizes = [8, 16, 8], strides = [1, 1, 1]} : vector<10x18x8xf32> to vector<8x16x8xf32>
    %c0_9 = arith.constant 0 : index
    %c0_10 = arith.constant 0 : index
    %c8 = arith.constant 8 : index
    %12 = vector.load %arg11[%c0_9, %c0_10, %c8] : memref<8x16x72xf32, #tpu.memory_space<vmem>>, vector<8x16x8xf32>
    tpu.vector_store %arg11[%c0_9, %c0_10, %c8], %11 {strides = array<i32>} : memref<8x16x72xf32, #tpu.memory_space<vmem>>, vector<8x16x8xf32>,
    %13 = vector.extract_strided_slice %8 {offsets = [0, 2, 0], sizes = [8, 16, 8], strides = [1, 1, 1]} : vector<10x18x8xf32> to vector<8x16x8xf32>
    %c0_11 = arith.constant 0 : index
    %c0_12 = arith.constant 0 : index
    %c16 = arith.constant 16 : index
    %14 = vector.load %arg11[%c0_11, %c0_12, %c16] : memref<8x16x72xf32, #tpu.memory_space<vmem>>, vector<8x16x8xf32>
    tpu.vector_store %arg11[%c0_11, %c0_12, %c16], %13 {strides = array<i32>} : memref<8x16x72xf32, #tpu.memory_space<vmem>>, vector<8x16x8xf32>,
    %15 = vector.extract_strided_slice %8 {offsets = [1, 0, 0], sizes = [8, 16, 8], strides = [1, 1, 1]} : vector<10x18x8xf32> to vector<8x16x8xf32>
    %c0_13 = arith.constant 0 : index
    %c0_14 = arith.constant 0 : index
    %c24 = arith.constant 24 : index
    %16 = vector.load %arg11[%c0_13, %c0_14, %c24] : memref<8x16x72xf32, #tpu.memory_space<vmem>>, vector<8x16x8xf32>
    tpu.vector_store %arg11[%c0_13, %c0_14, %c24], %15 {strides = array<i32>} : memref<8x16x72xf32, #tpu.memory_space<vmem>>, vector<8x16x8xf32>,
    %17 = vector.extract_strided_slice %8 {offsets = [1, 1, 0], sizes = [8, 16, 8], strides = [1, 1, 1]} : vector<10x18x8xf32> to vector<8x16x8xf32>
    %c0_15 = arith.constant 0 : index
    %c0_16 = arith.constant 0 : index
    %c32 = arith.constant 32 : index
    %18 = vector.load %arg11[%c0_15, %c0_16, %c32] : memref<8x16x72xf32, #tpu.memory_space<vmem>>, vector<8x16x8xf32>
    tpu.vector_store %arg11[%c0_15, %c0_16, %c32], %17 {strides = array<i32>} : memref<8x16x72xf32, #tpu.memory_space<vmem>>, vector<8x16x8xf32>,
    %19 = vector.extract_strided_slice %8 {offsets = [1, 2, 0], sizes = [8, 16, 8], strides = [1, 1, 1]} : vector<10x18x8xf32> to vector<8x16x8xf32>
    %c0_17 = arith.constant 0 : index
    %c0_18 = arith.constant 0 : index
    %c40 = arith.constant 40 : index
    %20 = vector.load %arg11[%c0_17, %c0_18, %c40] : memref<8x16x72xf32, #tpu.memory_space<vmem>>, vector<8x16x8xf32>
    tpu.vector_store %arg11[%c0_17, %c0_18, %c40], %19 {strides = array<i32>} : memref<8x16x72xf32, #tpu.memory_space<vmem>>, vector<8x16x8xf32>,
    %21 = vector.extract_strided_slice %8 {offsets = [2, 0, 0], sizes = [8, 16, 8], strides = [1, 1, 1]} : vector<10x18x8xf32> to vector<8x16x8xf32>
    %c0_19 = arith.constant 0 : index
    %c0_20 = arith.constant 0 : index
    %c48 = arith.constant 48 : index
    %22 = vector.load %arg11[%c0_19, %c0_20, %c48] : memref<8x16x72xf32, #tpu.memory_space<vmem>>, vector<8x16x8xf32>
    tpu.vector_store %arg11[%c0_19, %c0_20, %c48], %21 {strides = array<i32>} : memref<8x16x72xf32, #tpu.memory_space<vmem>>, vector<8x16x8xf32>,
    %23 = vector.extract_strided_slice %8 {offsets = [2, 1, 0], sizes = [8, 16, 8], strides = [1, 1, 1]} : vector<10x18x8xf32> to vector<8x16x8xf32>
    %c0_21 = arith.constant 0 : index
    %c0_22 = arith.constant 0 : index
    %c56 = arith.constant 56 : index
    %24 = vector.load %arg11[%c0_21, %c0_22, %c56] : memref<8x16x72xf32, #tpu.memory_space<vmem>>, vector<8x16x8xf32>
    tpu.vector_store %arg11[%c0_21, %c0_22, %c56], %23 {strides = array<i32>} : memref<8x16x72xf32, #tpu.memory_space<vmem>>, vector<8x16x8xf32>,
    %25 = vector.extract_strided_slice %8 {offsets = [2, 2, 0], sizes = [8, 16, 8], strides = [1, 1, 1]} : vector<10x18x8xf32> to vector<8x16x8xf32>
    %c0_23 = arith.constant 0 : index
    %c0_24 = arith.constant 0 : index
    %c64 = arith.constant 64 : index
    %26 = vector.load %arg11[%c0_23, %c0_24, %c64] : memref<8x16x72xf32, #tpu.memory_space<vmem>>, vector<8x16x8xf32>
    tpu.vector_store %arg11[%c0_23, %c0_24, %c64], %25 {strides = array<i32>} : memref<8x16x72xf32, #tpu.memory_space<vmem>>, vector<8x16x8xf32>,
    %c0_25 = arith.constant 0 : index
    %c0_26 = arith.constant 0 : index
    %c0_27 = arith.constant 0 : index
    %27 = vector.load %arg11[%c0_25, %c0_26, %c0_27] : memref<8x16x72xf32, #tpu.memory_space<vmem>>, vector<8x16x72xf32>
    %28 = vector.shape_cast %27 : vector<8x16x72xf32> to vector<128x72xf32>
    %29 = arith.truncf %28 : vector<128x72xf32> to vector<128x72xbf16>
    %c0_28 = arith.constant 0 : index
    %c0_29 = arith.constant 0 : index
    %30 = vector.load %arg5[%c0_28, %c0_29] : memref<72x8xbf16, #tpu.memory_space<vmem>>, vector<72x8xbf16>
    %cst = arith.constant dense<0.000000e+00> : vector<128x8xf32>
    %31 = tpu.matmul %29, %30, %cst {dimension_numbers = #tpu.dot_dimension_numbers<[1], [0], [0], [1], [0, 0, 1, 1], [], []>} : vector<128x72xbf16>, vector<72x8xbf16>, vector<128x8xf32> -> vector<128x8xf32>
    %c0_30 = arith.constant 0 : index
    %c0_31 = arith.constant 0 : index
    %32 = vector.load %arg6[%c0_30, %c0_31] : memref<1x8xf32, #tpu.memory_space<vmem>>, vector<1x8xf32>
    %33 = vector.shape_cast %32 : vector<1x8xf32> to vector<8xf32>
    %34 = vector.shape_cast %33 : vector<8xf32> to vector<1x8xf32>
    %35 = vector.broadcast %34 : vector<1x8xf32> to vector<128x8xf32>
    %36 = arith.addf %31, %35 : vector<128x8xf32>
    %c0_32 = arith.constant 0 : index
    %c0_33 = arith.constant 0 : index
    %c0_34 = arith.constant 0 : index
    %37 = vector.load %arg8[%c0_32, %c0_33, %c0_34] : memref<1x1x8xf32, #tpu.memory_space<vmem>>, vector<1x1x8xf32>
    %38 = vector.shape_cast %37 : vector<1x1x8xf32> to vector<1x8xf32>
    %cst_35 = arith.constant dense<0.000000e+00> : vector<8xf32>
    %39 = vector.multi_reduction <add>, %36, %cst_35 [0] : vector<128x8xf32> to vector<8xf32>
    %40 = vector.shape_cast %39 : vector<8xf32> to vector<1x8xf32>
    %41 = arith.addf %38, %40 : vector<1x8xf32>
    %c0_36 = arith.constant 0 : index
    %c0_37 = arith.constant 0 : index
    %c0_38 = arith.constant 0 : index
    %42 = vector.load %arg8[%c0_36, %c0_37, %c0_38] : memref<1x1x8xf32, #tpu.memory_space<vmem>>, vector<1x1x8xf32>
    %43 = vector.shape_cast %42 : vector<1x1x8xf32> to vector<1x8xf32>
    %44 = vector.shape_cast %41 : vector<1x8xf32> to vector<1x1x8xf32>
    tpu.vector_store %arg8[%c0_36, %c0_37, %c0_38], %44 {strides = array<i32>} : memref<1x1x8xf32, #tpu.memory_space<vmem>>, vector<1x1x8xf32>,
    %c0_39 = arith.constant 0 : index
    %c0_40 = arith.constant 0 : index
    %c0_41 = arith.constant 0 : index
    %45 = vector.load %arg9[%c0_39, %c0_40, %c0_41] : memref<1x1x8xf32, #tpu.memory_space<vmem>>, vector<1x1x8xf32>
    %46 = vector.shape_cast %45 : vector<1x1x8xf32> to vector<1x8xf32>
    %47 = arith.mulf %36, %36 : vector<128x8xf32>
    %cst_42 = arith.constant dense<0.000000e+00> : vector<8xf32>
    %48 = vector.multi_reduction <add>, %47, %cst_42 [0] : vector<128x8xf32> to vector<8xf32>
    %49 = vector.shape_cast %48 : vector<8xf32> to vector<1x8xf32>
    %50 = arith.addf %46, %49 : vector<1x8xf32>
    %c0_43 = arith.constant 0 : index
    %c0_44 = arith.constant 0 : index
    %c0_45 = arith.constant 0 : index
    %51 = vector.load %arg9[%c0_43, %c0_44, %c0_45] : memref<1x1x8xf32, #tpu.memory_space<vmem>>, vector<1x1x8xf32>
    %52 = vector.shape_cast %51 : vector<1x1x8xf32> to vector<1x8xf32>
    %53 = vector.shape_cast %50 : vector<1x8xf32> to vector<1x1x8xf32>
    tpu.vector_store %arg9[%c0_43, %c0_44, %c0_45], %53 {strides = array<i32>} : memref<1x1x8xf32, #tpu.memory_space<vmem>>, vector<1x1x8xf32>,
    %54 = vector.shape_cast %36 : vector<128x8xf32> to vector<8x16x8xf32>
    %55 = arith.truncf %54 : vector<8x16x8xf32> to vector<8x16x8xbf16>
    %c0_46 = arith.constant 0 : index
    %c0_47 = arith.constant 0 : index
    %c0_48 = arith.constant 0 : index
    %c0_49 = arith.constant 0 : index
    %56 = vector.load %arg7[%c0_46, %c0_47, %c0_48, %c0_49] : memref<1x8x16x8xbf16, #tpu.memory_space<vmem>>, vector<1x8x16x8xbf16>
    %57 = vector.shape_cast %56 : vector<1x8x16x8xbf16> to vector<8x16x8xbf16>
    %58 = vector.shape_cast %55 : vector<8x16x8xbf16> to vector<1x8x16x8xbf16>
    tpu.vector_store %arg7[%c0_46, %c0_47, %c0_48, %c0_49], %58 {strides = array<i32>} : memref<1x8x16x8xbf16, #tpu.memory_space<vmem>>, vector<1x8x16x8xbf16>,
    return
  }
  func.func @transform_0(%arg0: i32, %arg1: i32) -> (i32, i32, i32, i32) {
    %c0_i32 = arith.constant 0 : i32
    %c0_i32_0 = arith.constant 0 : i32
    %c0_i32_1 = arith.constant 0 : i32
    %c0_i32_2 = arith.constant 0 : i32
    return %arg0, %c0_i32, %c0_i32_0, %c0_i32_1 : i32, i32, i32, i32
  }
  func.func @transform_1(%arg0: i32, %arg1: i32) -> (i32, i32) {
    %c0_i32 = arith.constant 0 : i32
    %c0_i32_0 = arith.constant 0 : i32
    %c0_i32_1 = arith.constant 0 : i32
    return %c0_i32, %c0_i32_0 : i32, i32
  }
  func.func @transform_2(%arg0: i32, %arg1: i32) -> (i32, i32) {
    %c0_i32 = arith.constant 0 : i32
    %c0_i32_0 = arith.constant 0 : i32
    %c0_i32_1 = arith.constant 0 : i32
    return %c0_i32, %c0_i32_0 : i32, i32
  }
  func.func @transform_3(%arg0: i32, %arg1: i32) -> (i32, i32) {
    %c0_i32 = arith.constant 0 : i32
    %c0_i32_0 = arith.constant 0 : i32
    %c0_i32_1 = arith.constant 0 : i32
    return %c0_i32, %c0_i32_0 : i32, i32
  }
  func.func @transform_4(%arg0: i32, %arg1: i32) -> (i32, i32) {
    %c0_i32 = arith.constant 0 : i32
    %c0_i32_0 = arith.constant 0 : i32
    %c0_i32_1 = arith.constant 0 : i32
    return %c0_i32, %c0_i32_0 : i32, i32
  }
  func.func @transform_5(%arg0: i32, %arg1: i32) -> (i32, i32, i32, i32) {
    %c0_i32 = arith.constant 0 : i32
    %c0_i32_0 = arith.constant 0 : i32
    %c0_i32_1 = arith.constant 0 : i32
    return %arg0, %arg1, %c0_i32, %c0_i32_0 : i32, i32, i32, i32
  }
  func.func @transform_6(%arg0: i32, %arg1: i32) -> (i32, i32, i32) {
    %c0_i32 = arith.constant 0 : i32
    %c0_i32_0 = arith.constant 0 : i32
    %c0_i32_1 = arith.constant 0 : i32
    return %arg0, %c0_i32, %c0_i32_0 : i32, i32, i32
  }
  func.func @transform_7(%arg0: i32, %arg1: i32) -> (i32, i32, i32) {
    %c0_i32 = arith.constant 0 : i32
    %c0_i32_0 = arith.constant 0 : i32
    %c0_i32_1 = arith.constant 0 : i32
    return %arg0, %c0_i32, %c0_i32_0 : i32, i32, i32
  }
}

</mosaic_0001>

<llo_original>
// kernel: double_conv_forward.5
$region0: #{double_conv_forward.5}
  #allocation0 [shape = 'u32[]', space=smem, size = 0x4, offset = 0x4, fixed_abs, tag = 'smem constant byte address 0x4 - core index']
  #allocation1 [shape = 'u32[144,128]{1,0:T(1,128)}', space=vmem, size = 0x12000, scoped, tag = 'internal scratch']
  %s0 = inlined_call_operand.vmem [shape: bf16[512,8], index: 0, kind: input, shape index: {}]
  %s1 = inlined_call_operand.vmem [shape: f32[1,8], index: 1, kind: input, shape index: {}]
  %s2 = inlined_call_operand.vmem [shape: f32[1,8], index: 2, kind: input, shape index: {}]
  %s3 = inlined_call_operand.vmem [shape: f32[512,8], index: 3, kind: output, shape index: {}]
  %s4 = sld [smem:[#allocation0]]
  $region22: #{double_conv_forward.5} parent=0
    _
  %s6 = ssub.s32 1, %s4
  %s7 = scalar_select 0, %s6, %s4
  // Predicated region
  $region2: #{double_conv_forward.5} parent=0 // pred_check
    _
  $region3: #{double_conv_forward.5} parent=0 // pred_check_branch
    %9 = sbr.rel (0) target = $region5
  $region4: #{double_conv_forward.5} parent=0 // pred_region
    _
  $region5: #{double_conv_forward.5} parent=0 // pred_fallthru
    _
  // Predicated region
  $region6: #{double_conv_forward.5} parent=0 // pred_check
    _
  $region7: #{double_conv_forward.5} parent=0 // pred_check_branch
    %11 = sbr.rel (0) target = $region9
  $region8: #{double_conv_forward.5} parent=0 // pred_region
    _
  $region9: #{double_conv_forward.5} parent=0 // pred_fallthru
    _
  // Predicated region
  $region10: #{double_conv_forward.5} parent=0 // pred_check
    _
  $region11: #{double_conv_forward.5} parent=0 // pred_check_branch
    %13 = sbr.rel (0) target = $region13
  $region12: #{double_conv_forward.5} parent=0 // pred_region
    _
  $region13: #{double_conv_forward.5} parent=0 // pred_fallthru
    _
  %v14 = vld [vmem:[%s0] sm:$0xf]
  %v15 = vld [vmem:[%s0 + $0x4] sm:$0xf]
  %v16 = vld [vmem:[%s0 + $0x8] sm:$0xf]
  %v17 = vld [vmem:[%s0 + $0xc] sm:$0xf]
  %v18 = vld [vmem:[%s0 + $0x10] sm:$0xf]
  %v19 = vld [vmem:[%s0 + $0x14] sm:$0xf]
  %v20 = vld [vmem:[%s0 + $0x18] sm:$0xf]
  %v21 = vld [vmem:[%s0 + $0x1c] sm:$0xf]
  %v22 = vld [vmem:[%s0 + $0x20] sm:$0xf]
  %v23 = vld [vmem:[%s0 + $0x24] sm:$0xf]
  %v24 = vld [vmem:[%s0 + $0x28] sm:$0xf]
  %v25 = vld [vmem:[%s0 + $0x2c] sm:$0xf]
  %v26 = vld [vmem:[%s0 + $0x30] sm:$0xf]
  %v27 = vld [vmem:[%s0 + $0x34] sm:$0xf]
  %v28 = vld [vmem:[%s0 + $0x38] sm:$0xf]
  %v29 = vld [vmem:[%s0 + $0x3c] sm:$0xf]
  %v30 = vld [vmem:[%s0 + $0x40] sm:$0xf]
  %v31 = vld [vmem:[%s0 + $0x44] sm:$0xf]
  %v32 = vld [vmem:[%s0 + $0x48] sm:$0xf]
  %v33 = vld [vmem:[%s0 + $0x4c] sm:$0xf]
  %v34 = vld [vmem:[%s0 + $0x50] sm:$0xf]
  %v35 = vld [vmem:[%s0 + $0x54] sm:$0xf]
  %v36 = vld [vmem:[%s0 + $0x58] sm:$0xf]
  %v37 = vld [vmem:[%s0 + $0x5c] sm:$0xf]
  %v38 = vld [vmem:[%s0 + $0x60] sm:$0xf]
  %v39 = vld [vmem:[%s0 + $0x64] sm:$0xf]
  %v40 = vld [vmem:[%s0 + $0x68] sm:$0xf]
  %v41 = vld [vmem:[%s0 + $0x6c] sm:$0xf]
  %v42 = vld [vmem:[%s0 + $0x70] sm:$0xf]
  %v43 = vld [vmem:[%s0 + $0x74] sm:$0xf]
  %v44 = vld [vmem:[%s0 + $0x78] sm:$0xf]
  %v45 = vld [vmem:[%s0 + $0x7c] sm:$0xf]
  %v46 = vld [vmem:[%s0 + $0x80] sm:$0xf]
  %v47 = vld [vmem:[%s0 + $0x84] sm:$0xf]
  %v48 = vld [vmem:[%s0 + $0x88] sm:$0xf]
  %v49 = vld [vmem:[%s0 + $0x8c] sm:$0xf]
  %v50 = vld [vmem:[%s0 + $0x90] sm:$0xf]
  %v51 = vld [vmem:[%s0 + $0x94] sm:$0xf]
  %v52 = vld [vmem:[%s0 + $0x98] sm:$0xf]
  %v53 = vld [vmem:[%s0 + $0x9c] sm:$0xf]
  %v54 = vld [vmem:[%s0 + $0xa0] sm:$0xf]
  %v55 = vld [vmem:[%s0 + $0xa4] sm:$0xf]
  %v56 = vld [vmem:[%s0 + $0xa8] sm:$0xf]
  %v57 = vld [vmem:[%s0 + $0xac] sm:$0xf]
  %v58 = vld [vmem:[%s0 + $0xb0] sm:$0xf]
  %v59 = vld [vmem:[%s0 + $0xb4] sm:$0xf]
  %v60 = vld [vmem:[%s0 + $0xb8] sm:$0xf]
  %v61 = vld [vmem:[%s0 + $0xbc] sm:$0xf]
  %v62 = vld [vmem:[%s0 + $0xc0] sm:$0xf]
  %v63 = vld [vmem:[%s0 + $0xc4] sm:$0xf]
  %v64 = vld [vmem:[%s0 + $0xc8] sm:$0xf]
  %v65 = vld [vmem:[%s0 + $0xcc] sm:$0xf]
  %v66 = vld [vmem:[%s0 + $0xd0] sm:$0xf]
  %v67 = vld [vmem:[%s0 + $0xd4] sm:$0xf]
  %v68 = vld [vmem:[%s0 + $0xd8] sm:$0xf]
  %v69 = vld [vmem:[%s0 + $0xdc] sm:$0xf]
  %v70 = vld [vmem:[%s0 + $0xe0] sm:$0xf]
  %v71 = vld [vmem:[%s0 + $0xe4] sm:$0xf]
  %v72 = vld [vmem:[%s0 + $0xe8] sm:$0xf]
  %v73 = vld [vmem:[%s0 + $0xec] sm:$0xf]
  %v74 = vld [vmem:[%s0 + $0xf0] sm:$0xf]
  %v75 = vld [vmem:[%s0 + $0xf4] sm:$0xf]
  %v76 = vld [vmem:[%s0 + $0xf8] sm:$0xf]
  %v77 = vld [vmem:[%s0 + $0xfc] sm:$0xf]
  %v78 = vunpack.c.l.bf16 %v14
  %v79 = vunpack.c.l.bf16 %v15
  %v80 = vunpack.c.l.bf16 %v16
  %v81 = vunpack.c.l.bf16 %v17
  %v82 = vunpack.c.l.bf16 %v18
  %v83 = vunpack.c.l.bf16 %v19
  %v84 = vunpack.c.l.bf16 %v20
  %v85 = vunpack.c.l.bf16 %v21
  %v86 = vunpack.c.l.bf16 %v22
  %v87 = vunpack.c.l.bf16 %v23
  %v88 = vunpack.c.l.bf16 %v24
  %v89 = vunpack.c.l.bf16 %v25
  %v90 = vunpack.c.l.bf16 %v26
  %v91 = vunpack.c.l.bf16 %v27
  %v92 = vunpack.c.l.bf16 %v28
  %v93 = vunpack.c.l.bf16 %v29
  %v94 = vunpack.c.l.bf16 %v30
  %v95 = vunpack.c.l.bf16 %v31
  %v96 = vunpack.c.l.bf16 %v32
  %v97 = vunpack.c.l.bf16 %v33
  %v98 = vunpack.c.l.bf16 %v34
  %v99 = vunpack.c.l.bf16 %v35
  %v100 = vunpack.c.l.bf16 %v36
  %v101 = vunpack.c.l.bf16 %v37
  %v102 = vunpack.c.l.bf16 %v38
  %v103 = vunpack.c.l.bf16 %v39
  %v104 = vunpack.c.l.bf16 %v40
  %v105 = vunpack.c.l.bf16 %v41
  %v106 = vunpack.c.l.bf16 %v42
  %v107 = vunpack.c.l.bf16 %v43
  %v108 = vunpack.c.l.bf16 %v44
  %v109 = vunpack.c.l.bf16 %v45
  %v110 = vunpack.c.l.bf16 %v46
  %v111 = vunpack.c.l.bf16 %v47
  %v112 = vunpack.c.l.bf16 %v48
  %v113 = vunpack.c.l.bf16 %v49
  %v114 = vunpack.c.l.bf16 %v50
  %v115 = vunpack.c.l.bf16 %v51
  %v116 = vunpack.c.l.bf16 %v52
  %v117 = vunpack.c.l.bf16 %v53
  %v118 = vunpack.c.l.bf16 %v54
  %v119 = vunpack.c.l.bf16 %v55
  %v120 = vunpack.c.l.bf16 %v56
  %v121 = vunpack.c.l.bf16 %v57
  %v122 = vunpack.c.l.bf16 %v58
  %v123 = vunpack.c.l.bf16 %v59
  %v124 = vunpack.c.l.bf16 %v60
  %v125 = vunpack.c.l.bf16 %v61
  %v126 = vunpack.c.l.bf16 %v62
  %v127 = vunpack.c.l.bf16 %v63
  %v128 = vunpack.c.l.bf16 %v64
  %v129 = vunpack.c.l.bf16 %v65
  %v130 = vunpack.c.l.bf16 %v66
  %v131 = vunpack.c.l.bf16 %v67
  %v132 = vunpack.c.l.bf16 %v68
  %v133 = vunpack.c.l.bf16 %v69
  %v134 = vunpack.c.l.bf16 %v70
  %v135 = vunpack.c.l.bf16 %v71
  %v136 = vunpack.c.l.bf16 %v72
  %v137 = vunpack.c.l.bf16 %v73
  %v138 = vunpack.c.l.bf16 %v74
  %v139 = vunpack.c.l.bf16 %v75
  %v140 = vunpack.c.l.bf16 %v76
  %v141 = vunpack.c.l.bf16 %v77
  %v142 = vld [vmem:[%s1] sm:$0x1]
  %v144 = vlaneseq
  %v145 = vshrl.u32 %v144, 7
  %v146 = vsub.s32 0, %v145
  %v147 = vrot.slane %v142, %v146
  %v149 = vmul.f32 %v78, %v147
  %v150 = vmul.f32 %v79, %v147
  %v151 = vmul.f32 %v80, %v147
  %v152 = vmul.f32 %v81, %v147
  %v153 = vmul.f32 %v82, %v147
  %v154 = vmul.f32 %v83, %v147
  %v155 = vmul.f32 %v84, %v147
  %v156 = vmul.f32 %v85, %v147
  %v157 = vmul.f32 %v86, %v147
  %v158 = vmul.f32 %v87, %v147
  %v159 = vmul.f32 %v88, %v147
  %v160 = vmul.f32 %v89, %v147
  %v161 = vmul.f32 %v90, %v147
  %v162 = vmul.f32 %v91, %v147
  %v163 = vmul.f32 %v92, %v147
  %v164 = vmul.f32 %v93, %v147
  %v165 = vmul.f32 %v94, %v147
  %v166 = vmul.f32 %v95, %v147
  %v167 = vmul.f32 %v96, %v147
  %v168 = vmul.f32 %v97, %v147
  %v169 = vmul.f32 %v98, %v147
  %v170 = vmul.f32 %v99, %v147
  %v171 = vmul.f32 %v100, %v147
  %v172 = vmul.f32 %v101, %v147
  %v173 = vmul.f32 %v102, %v147
  %v174 = vmul.f32 %v103, %v147
  %v175 = vmul.f32 %v104, %v147
  %v176 = vmul.f32 %v105, %v147
  %v177 = vmul.f32 %v106, %v147
  %v178 = vmul.f32 %v107, %v147
  %v179 = vmul.f32 %v108, %v147
  %v180 = vmul.f32 %v109, %v147
  %v181 = vmul.f32 %v110, %v147
  %v182 = vmul.f32 %v111, %v147
  %v183 = vmul.f32 %v112, %v147
  %v184 = vmul.f32 %v113, %v147
  %v185 = vmul.f32 %v114, %v147
  %v186 = vmul.f32 %v115, %v147
  %v187 = vmul.f32 %v116, %v147
  %v188 = vmul.f32 %v117, %v147
  %v189 = vmul.f32 %v118, %v147
  %v190 = vmul.f32 %v119, %v147
  %v191 = vmul.f32 %v120, %v147
  %v192 = vmul.f32 %v121, %v147
  %v193 = vmul.f32 %v122, %v147
  %v194 = vmul.f32 %v123, %v147
  %v195 = vmul.f32 %v124, %v147
  %v196 = vmul.f32 %v125, %v147
  %v197 = vmul.f32 %v126, %v147
  %v198 = vmul.f32 %v127, %v147
  %v199 = vmul.f32 %v128, %v147
  %v200 = vmul.f32 %v129, %v147
  %v201 = vmul.f32 %v130, %v147
  %v202 = vmul.f32 %v131, %v147
  %v203 = vmul.f32 %v132, %v147
  %v204 = vmul.f32 %v133, %v147
  %v205 = vmul.f32 %v134, %v147
  %v206 = vmul.f32 %v135, %v147
  %v207 = vmul.f32 %v136, %v147
  %v208 = vmul.f32 %v137, %v147
  %v209 = vmul.f32 %v138, %v147
  %v210 = vmul.f32 %v139, %v147
  %v211 = vmul.f32 %v140, %v147
  %v212 = vmul.f32 %v141, %v147
  %v213 = vld [vmem:[%s2] sm:$0x1]
  %v215 = vlaneseq
  %v216 = vshrl.u32 %v215, 7
  %v217 = vsub.s32 0, %v216
  %v218 = vrot.slane %v213, %v217
  %v220 = vadd.f32 %v149, %v218
  %v221 = vadd.f32 %v150, %v218
  %v222 = vadd.f32 %v151, %v218
  %v223 = vadd.f32 %v152, %v218
  %v224 = vadd.f32 %v153, %v218
  %v225 = vadd.f32 %v154, %v218
  %v226 = vadd.f32 %v155, %v218
  %v227 = vadd.f32 %v156, %v218
  %v228 = vadd.f32 %v157, %v218
  %v229 = vadd.f32 %v158, %v218
  %v230 = vadd.f32 %v159, %v218
  %v231 = vadd.f32 %v160, %v218
  %v232 = vadd.f32 %v161, %v218
  %v233 = vadd.f32 %v162, %v218
  %v234 = vadd.f32 %v163, %v218
  %v235 = vadd.f32 %v164, %v218
  %v236 = vadd.f32 %v165, %v218
  %v237 = vadd.f32 %v166, %v218
  %v238 = vadd.f32 %v167, %v218
  %v239 = vadd.f32 %v168, %v218
  %v240 = vadd.f32 %v169, %v218
  %v241 = vadd.f32 %v170, %v218
  %v242 = vadd.f32 %v171, %v218
  %v243 = vadd.f32 %v172, %v218
  %v244 = vadd.f32 %v173, %v218
  %v245 = vadd.f32 %v174, %v218
  %v246 = vadd.f32 %v175, %v218
  %v247 = vadd.f32 %v176, %v218
  %v248 = vadd.f32 %v177, %v218
  %v249 = vadd.f32 %v178, %v218
  %v250 = vadd.f32 %v179, %v218
  %v251 = vadd.f32 %v180, %v218
  %v252 = vadd.f32 %v181, %v218
  %v253 = vadd.f32 %v182, %v218
  %v254 = vadd.f32 %v183, %v218
  %v255 = vadd.f32 %v184, %v218
  %v256 = vadd.f32 %v185, %v218
  %v257 = vadd.f32 %v186, %v218
  %v258 = vadd.f32 %v187, %v218
  %v259 = vadd.f32 %v188, %v218
  %v260 = vadd.f32 %v189, %v218
  %v261 = vadd.f32 %v190, %v218
  %v262 = vadd.f32 %v191, %v218
  %v263 = vadd.f32 %v192, %v218
  %v264 = vadd.f32 %v193, %v218
  %v265 = vadd.f32 %v194, %v218
  %v266 = vadd.f32 %v195, %v218
  %v267 = vadd.f32 %v196, %v218
  %v268 = vadd.f32 %v197, %v218
  %v269 = vadd.f32 %v198, %v218
  %v270 = vadd.f32 %v199, %v218
  %v271 = vadd.f32 %v200, %v218
  %v272 = vadd.f32 %v201, %v218
  %v273 = vadd.f32 %v202, %v218
  %v274 = vadd.f32 %v203, %v218
  %v275 = vadd.f32 %v204, %v218
  %v276 = vadd.f32 %v205, %v218
  %v277 = vadd.f32 %v206, %v218
  %v278 = vadd.f32 %v207, %v218
  %v279 = vadd.f32 %v208, %v218
  %v280 = vadd.f32 %v209, %v218
  %v281 = vadd.f32 %v210, %v218
  %v282 = vadd.f32 %v211, %v218
  %v283 = vadd.f32 %v212, %v218
  %v284 = vmax.f32 %v220, 0.0
  %v285 = vmax.f32 %v221, 0.0
  %v286 = vmax.f32 %v222, 0.0
  %v287 = vmax.f32 %v223, 0.0
  %v288 = vmax.f32 %v224, 0.0
  %v289 = vmax.f32 %v225, 0.0
  %v290 = vmax.f32 %v226, 0.0
  %v291 = vmax.f32 %v227, 0.0
  %v292 = vmax.f32 %v228, 0.0
  %v293 = vmax.f32 %v229, 0.0
  %v294 = vmax.f32 %v230, 0.0
  %v295 = vmax.f32 %v231, 0.0
  %v296 = vmax.f32 %v232, 0.0
  %v297 = vmax.f32 %v233, 0.0
  %v298 = vmax.f32 %v234, 0.0
  %v299 = vmax.f32 %v235, 0.0
  %v300 = vmax.f32 %v236, 0.0
  %v301 = vmax.f32 %v237, 0.0
  %v302 = vmax.f32 %v238, 0.0
  %v303 = vmax.f32 %v239, 0.0
  %v304 = vmax.f32 %v240, 0.0
  %v305 = vmax.f32 %v241, 0.0
  %v306 = vmax.f32 %v242, 0.0
  %v307 = vmax.f32 %v243, 0.0
  %v308 = vmax.f32 %v244, 0.0
  %v309 = vmax.f32 %v245, 0.0
  %v310 = vmax.f32 %v246, 0.0
  %v311 = vmax.f32 %v247, 0.0
  %v312 = vmax.f32 %v248, 0.0
  %v313 = vmax.f32 %v249, 0.0
  %v314 = vmax.f32 %v250, 0.0
  %v315 = vmax.f32 %v251, 0.0
  %v316 = vmax.f32 %v252, 0.0
  %v317 = vmax.f32 %v253, 0.0
  %v318 = vmax.f32 %v254, 0.0
  %v319 = vmax.f32 %v255, 0.0
  %v320 = vmax.f32 %v256, 0.0
  %v321 = vmax.f32 %v257, 0.0
  %v322 = vmax.f32 %v258, 0.0
  %v323 = vmax.f32 %v259, 0.0
  %v324 = vmax.f32 %v260, 0.0
  %v325 = vmax.f32 %v261, 0.0
  %v326 = vmax.f32 %v262, 0.0
  %v327 = vmax.f32 %v263, 0.0
  %v328 = vmax.f32 %v264, 0.0
  %v329 = vmax.f32 %v265, 0.0
  %v330 = vmax.f32 %v266, 0.0
  %v331 = vmax.f32 %v267, 0.0
  %v332 = vmax.f32 %v268, 0.0
  %v333 = vmax.f32 %v269, 0.0
  %v334 = vmax.f32 %v270, 0.0
  %v335 = vmax.f32 %v271, 0.0
  %v336 = vmax.f32 %v272, 0.0
  %v337 = vmax.f32 %v273, 0.0
  %v338 = vmax.f32 %v274, 0.0
  %v339 = vmax.f32 %v275, 0.0
  %v340 = vmax.f32 %v276, 0.0
  %v341 = vmax.f32 %v277, 0.0
  %v342 = vmax.f32 %v278, 0.0
  %v343 = vmax.f32 %v279, 0.0
  %v344 = vmax.f32 %v280, 0.0
  %v345 = vmax.f32 %v281, 0.0
  %v346 = vmax.f32 %v282, 0.0
  %v347 = vmax.f32 %v283, 0.0
  %vm348 = vcmask 64512
  %349 = vst.msk [vmem:[%s3] sm:$0xff] %vm348, %v284
  %350 = vst.msk [vmem:[%s3 + $0x8] sm:$0xff] %vm348, %v285
  %351 = vst.msk [vmem:[%s3 + $0x10] sm:$0xff] %vm348, %v286
  %352 = vst.msk [vmem:[%s3 + $0x18] sm:$0xff] %vm348, %v287
  %353 = vst.msk [vmem:[%s3 + $0x20] sm:$0xff] %vm348, %v288
  %354 = vst.msk [vmem:[%s3 + $0x28] sm:$0xff] %vm348, %v289
  %355 = vst.msk [vmem:[%s3 + $0x30] sm:$0xff] %vm348, %v290
  %356 = vst.msk [vmem:[%s3 + $0x38] sm:$0xff] %vm348, %v291
  %357 = vst.msk [vmem:[%s3 + $0x40] sm:$0xff] %vm348, %v292
  %358 = vst.msk [vmem:[%s3 + $0x48] sm:$0xff] %vm348, %v293
  %359 = vst.msk [vmem:[%s3 + $0x50] sm:$0xff] %vm348, %v294
  %360 = vst.msk [vmem:[%s3 + $0x58] sm:$0xff] %vm348, %v295
  %361 = vst.msk [vmem:[%s3 + $0x60] sm:$0xff] %vm348, %v296
  %362 = vst.msk [vmem:[%s3 + $0x68] sm:$0xff] %vm348, %v297
  %363 = vst.msk [vmem:[%s3 + $0x70] sm:$0xff] %vm348, %v298
  %364 = vst.msk [vmem:[%s3 + $0x78] sm:$0xff] %vm348, %v299
  %365 = vst.msk [vmem:[%s3 + $0x80] sm:$0xff] %vm348, %v300
  %366 = vst.msk [vmem:[%s3 + $0x88] sm:$0xff] %vm348, %v301
  %367 = vst.msk [vmem:[%s3 + $0x90] sm:$0xff] %vm348, %v302
  %368 = vst.msk [vmem:[%s3 + $0x98] sm:$0xff] %vm348, %v303
  %369 = vst.msk [vmem:[%s3 + $0xa0] sm:$0xff] %vm348, %v304
  %370 = vst.msk [vmem:[%s3 + $0xa8] sm:$0xff] %vm348, %v305
  %371 = vst.msk [vmem:[%s3 + $0xb0] sm:$0xff] %vm348, %v306
  %372 = vst.msk [vmem:[%s3 + $0xb8] sm:$0xff] %vm348, %v307
  %373 = vst.msk [vmem:[%s3 + $0xc0] sm:$0xff] %vm348, %v308
  %374 = vst.msk [vmem:[%s3 + $0xc8] sm:$0xff] %vm348, %v309
  %375 = vst.msk [vmem:[%s3 + $0xd0] sm:$0xff] %vm348, %v310
  %376 = vst.msk [vmem:[%s3 + $0xd8] sm:$0xff] %vm348, %v311
  %377 = vst.msk [vmem:[%s3 + $0xe0] sm:$0xff] %vm348, %v312
  %378 = vst.msk [vmem:[%s3 + $0xe8] sm:$0xff] %vm348, %v313
  %379 = vst.msk [vmem:[%s3 + $0xf0] sm:$0xff] %vm348, %v314
  %380 = vst.msk [vmem:[%s3 + $0xf8] sm:$0xff] %vm348, %v315
  %381 = vst.msk [vmem:[%s3 + $0x100] sm:$0xff] %vm348, %v316
  %382 = vst.msk [vmem:[%s3 + $0x108] sm:$0xff] %vm348, %v317
  %383 = vst.msk [vmem:[%s3 + $0x110] sm:$0xff] %vm348, %v318
  %384 = vst.msk [vmem:[%s3 + $0x118] sm:$0xff] %vm348, %v319
  %385 = vst.msk [vmem:[%s3 + $0x120] sm:$0xff] %vm348, %v320
  %386 = vst.msk [vmem:[%s3 + $0x128] sm:$0xff] %vm348, %v321
  %387 = vst.msk [vmem:[%s3 + $0x130] sm:$0xff] %vm348, %v322
  %388 = vst.msk [vmem:[%s3 + $0x138] sm:$0xff] %vm348, %v323
  %389 = vst.msk [vmem:[%s3 + $0x140] sm:$0xff] %vm348, %v324
  %390 = vst.msk [vmem:[%s3 + $0x148] sm:$0xff] %vm348, %v325
  %391 = vst.msk [vmem:[%s3 + $0x150] sm:$0xff] %vm348, %v326
  %392 = vst.msk [vmem:[%s3 + $0x158] sm:$0xff] %vm348, %v327
  %393 = vst.msk [vmem:[%s3 + $0x160] sm:$0xff] %vm348, %v328
  %394 = vst.msk [vmem:[%s3 + $0x168] sm:$0xff] %vm348, %v329
  %395 = vst.msk [vmem:[%s3 + $0x170] sm:$0xff] %vm348, %v330
  %396 = vst.msk [vmem:[%s3 + $0x178] sm:$0xff] %vm348, %v331
  %397 = vst.msk [vmem:[%s3 + $0x180] sm:$0xff] %vm348, %v332
  %398 = vst.msk [vmem:[%s3 + $0x188] sm:$0xff] %vm348, %v333
  %399 = vst.msk [vmem:[%s3 + $0x190] sm:$0xff] %vm348, %v334
  %400 = vst.msk [vmem:[%s3 + $0x198] sm:$0xff] %vm348, %v335
  %401 = vst.msk [vmem:[%s3 + $0x1a0] sm:$0xff] %vm348, %v336
  %402 = vst.msk [vmem:[%s3 + $0x1a8] sm:$0xff] %vm348, %v337
  %403 = vst.msk [vmem:[%s3 + $0x1b0] sm:$0xff] %vm348, %v338
  %404 = vst.msk [vmem:[%s3 + $0x1b8] sm:$0xff] %vm348, %v339
  %405 = vst.msk [vmem:[%s3 + $0x1c0] sm:$0xff] %vm348, %v340
  %406 = vst.msk [vmem:[%s3 + $0x1c8] sm:$0xff] %vm348, %v341
  %407 = vst.msk [vmem:[%s3 + $0x1d0] sm:$0xff] %vm348, %v342
  %408 = vst.msk [vmem:[%s3 + $0x1d8] sm:$0xff] %vm348, %v343
  %409 = vst.msk [vmem:[%s3 + $0x1e0] sm:$0xff] %vm348, %v344
  %410 = vst.msk [vmem:[%s3 + $0x1e8] sm:$0xff] %vm348, %v345
  %411 = vst.msk [vmem:[%s3 + $0x1f0] sm:$0xff] %vm348, %v346
  %412 = vst.msk [vmem:[%s3 + $0x1f8] sm:$0xff] %vm348, %v347
  // Predicated region
  $region14: #{double_conv_forward.5} parent=0 // pred_check
    _
  $region15: #{double_conv_forward.5} parent=0 // pred_check_branch
    %414 = sbr.rel (0) target = $region17
  $region16: #{double_conv_forward.5} parent=0 // pred_region
    _
  $region17: #{double_conv_forward.5} parent=0 // pred_fallthru
    _
  // Predicated region
  $region18: #{double_conv_forward.5} parent=0 // pred_check
    _
  $region19: #{double_conv_forward.5} parent=0 // pred_check_branch
    %416 = sbr.rel (0) target = $region21
  $region20: #{double_conv_forward.5} parent=0 // pred_region
    _
  $region21: #{double_conv_forward.5} parent=0 // pred_fallthru
    _

// kernel: double_conv_forward.4
$region0: #{double_conv_forward.4}
  #allocation0 [shape = 'u32[]', space=smem, size = 0x4, offset = 0x4, fixed_abs, tag = 'smem constant byte address 0x4 - core index']
  #allocation1 [shape = 'u32[144,128]{1,0:T(1,128)}', space=vmem, size = 0x12000, scoped, tag = 'internal scratch']
  #allocation2 [shape = 'f32[18,18,8]{2,1,0:T(8,128)}', space=vmem, size = 0x36000, scoped, tag = 'scratch operand']
  #allocation3 [shape = 'f32[8,16,72]{2,1,0:T(8,128)}', space=vmem, size = 0x10000, scoped, tag = 'scratch operand']
  %s0 = inlined_call_operand.vmem [shape: bf16[2,16,16,8], index: 0, kind: input, shape index: {}]
  %s1 = inlined_call_operand.vmem [shape: f32[1,8], index: 1, kind: input, shape index: {}]
  %s2 = inlined_call_operand.vmem [shape: f32[1,8], index: 2, kind: input, shape index: {}]
  %s3 = inlined_call_operand.vmem [shape: bf16[72,8], index: 3, kind: input, shape index: {}]
  %s4 = inlined_call_operand.vmem [shape: f32[1,8], index: 4, kind: input, shape index: {}]
  %s5 = inlined_call_operand.vmem [shape: bf16[2,16,16,8], index: 5, kind: output, shape index: {0}]
  %s6 = inlined_call_operand.vmem [shape: f32[2,1,8], index: 6, kind: output, shape index: {1}]
  %s7 = inlined_call_operand.vmem [shape: f32[2,1,8], index: 7, kind: output, shape index: {2}]
  %8 = xla_tuple %s5, %s6, %s7
  %s9 = sld [smem:[#allocation0]]
  $region73: #{double_conv_forward.4} parent=0
    _
  %s11 = ssub.s32 1, %s9
  %s12 = scalar_select 0, %s11, %s9
  loop: start=0, step=1, limit=6
  $region2: #{double_conv_forward.4} parent=0 // loop_pre_header
    _
  $region3: #{double_conv_forward.4} parent=0 // loop_header
    %s14 = sphi 0, %s18
    %p15 = scmp.ge.s32.totalorder %s14, 6
    %s21 = sphi 0, %s33
    %s22 = sphi 0, %s29
    %s23 = sphi 0, %s21
    %s24 = sphi 0, %s22
    %s25 = sphi 0, %s23
    %s26 = sphi 0, %s24
    %s36 = sphi 0, %s38
    %s39 = sphi 0, %s36
    %s40 = sphi 0, %s39
    %s56 = sphi 0, %s40
    %s60 = sphi 0, %s60
    %s62 = sphi 0, %s60
    %s63 = sphi 0, %s62
    %s77 = sphi 0, %s63
    %s81 = sphi 0, %s81
    %s83 = sphi 0, %s81
    %s84 = sphi 0, %s83
    %s98 = sphi 0, %s84
    %s102 = sphi 0, %s102
    %s104 = sphi 0, %s102
    %s105 = sphi 0, %s104
    %s119 = sphi 0, %s105
    %s123 = sphi 0, %s123
    %s125 = sphi 0, %s123
    %s126 = sphi 0, %s125
    %s140 = sphi 0, %s126
    %s148 = sphi 0, %s150
    %s151 = sphi 0, %s148
    %s152 = sphi 0, %s151
    %s168 = sphi 0, %s152
    %s174 = sphi 0, %s176
    %s177 = sphi 0, %s174
    %s178 = sphi 0, %s177
    %s194 = sphi 0, %s178
    %s200 = sphi 0, %s202
    %s203 = sphi 0, %s200
    %s204 = sphi 0, %s203
    %s220 = sphi 0, %s204
  $region4: #{double_conv_forward.4} parent=0 // loop_header_branch
    %17 = sbr.rel (%p15) target = $region8
  $region5: #{double_conv_forward.4} parent=0 // loop_body
    %s19 = ssub.s32 %s14, 1
    %s20 = ssub.s32 %s14, 2
    %s27 = sadd.s32 1, %s22
    %p28 = scmp.ge.s32.totalorder %s27, 2
    %s29 = scalar_select %p28, 0, %s27
    %s30 = sadd.s32 1, %s21
    %s31 = scalar_select %p28, %s30, %s21
    %p32 = scmp.ge.s32.totalorder %s31, 2
    %s33 = scalar_select %p32, 0, %s31
    %s34 = ssub.s32 %s21, %s33
    %p35 = scmp.eq.s32.totalorder %s34, 0
    %s37 = sadd.s32 %s36, 1
    %s38 = scalar_select %p35, %s36, %s37
    %p41 = pneg %p35
    %p42 = scmp.eq.s32.totalorder %s14, 3
    %p43 = por %p41, %p42
    %p44 = scmp.ne.s32.totalorder %s36, %s39
    %p45 = scmp.eq.s32.totalorder %s14, 0
    %p46 = por %p44, %p45
    %p47 = scmp.ne.s32.totalorder %s36, %s39
    %p48 = scmp.eq.s32.totalorder %s19, 3
    %p49 = por %p47, %p48
    %p50 = scmp.ne.s32.totalorder %s39, %s40
    %p51 = scmp.eq.s32.totalorder %s19, 0
    %p52 = por %p50, %p51
    %p53 = scmp.ne.s32.totalorder %s39, %s40
    %p54 = scmp.eq.s32.totalorder %s20, 3
    %p55 = por %p53, %p54
    %p57 = scmp.ne.s32.totalorder %s40, %s56
    %p58 = scmp.eq.s32.totalorder %s20, 0
    %p59 = por %p57, %p58
    %s61 = sadd.s32 %s60, 1
    %p64 = scmp.eq.s32.totalorder %s14, 3
    %p65 = scmp.ne.s32.totalorder %s60, %s62
    %p66 = scmp.eq.s32.totalorder %s14, 0
    %p67 = por %p65, %p66
    %p68 = scmp.ne.s32.totalorder %s60, %s62
    %p69 = scmp.eq.s32.totalorder %s19, 3
    %p70 = por %p68, %p69
    %p71 = scmp.ne.s32.totalorder %s62, %s63
    %p72 = scmp.eq.s32.totalorder %s19, 0
    %p73 = por %p71, %p72
    %p74 = scmp.ne.s32.totalorder %s62, %s63
    %p75 = scmp.eq.s32.totalorder %s20, 3
    %p76 = por %p74, %p75
    %p78 = scmp.ne.s32.totalorder %s63, %s77
    %p79 = scmp.eq.s32.totalorder %s20, 0
    %p80 = por %p78, %p79
    %s82 = sadd.s32 %s81, 1
    %p85 = scmp.eq.s32.totalorder %s14, 3
    %p86 = scmp.ne.s32.totalorder %s81, %s83
    %p87 = scmp.eq.s32.totalorder %s14, 0
    %p88 = por %p86, %p87
    %p89 = scmp.ne.s32.totalorder %s81, %s83
    %p90 = scmp.eq.s32.totalorder %s19, 3
    %p91 = por %p89, %p90
    %p92 = scmp.ne.s32.totalorder %s83, %s84
    %p93 = scmp.eq.s32.totalorder %s19, 0
    %p94 = por %p92, %p93
    %p95 = scmp.ne.s32.totalorder %s83, %s84
    %p96 = scmp.eq.s32.totalorder %s20, 3
    %p97 = por %p95, %p96
    %p99 = scmp.ne.s32.totalorder %s84, %s98
    %p100 = scmp.eq.s32.totalorder %s20, 0
    %p101 = por %p99, %p100
    %s103 = sadd.s32 %s102, 1
    %p106 = scmp.eq.s32.totalorder %s14, 3
    %p107 = scmp.ne.s32.totalorder %s102, %s104
    %p108 = scmp.eq.s32.totalorder %s14, 0
    %p109 = por %p107, %p108
    %p110 = scmp.ne.s32.totalorder %s102, %s104
    %p111 = scmp.eq.s32.totalorder %s19, 3
    %p112 = por %p110, %p111
    %p113 = scmp.ne.s32.totalorder %s104, %s105
    %p114 = scmp.eq.s32.totalorder %s19, 0
    %p115 = por %p113, %p114
    %p116 = scmp.ne.s32.totalorder %s104, %s105
    %p117 = scmp.eq.s32.totalorder %s20, 3
    %p118 = por %p116, %p117
    %p120 = scmp.ne.s32.totalorder %s105, %s119
    %p121 = scmp.eq.s32.totalorder %s20, 0
    %p122 = por %p120, %p121
    %s124 = sadd.s32 %s123, 1
    %p127 = scmp.eq.s32.totalorder %s14, 3
    %p128 = scmp.ne.s32.totalorder %s123, %s125
    %p129 = scmp.eq.s32.totalorder %s14, 0
    %p130 = por %p128, %p129
    %p131 = scmp.ne.s32.totalorder %s123, %s125
    %p132 = scmp.eq.s32.totalorder %s19, 3
    %p133 = por %p131, %p132
    %p134 = scmp.ne.s32.totalorder %s125, %s126
    %p135 = scmp.eq.s32.totalorder %s19, 0
    %p136 = por %p134, %p135
    %p137 = scmp.ne.s32.totalorder %s125, %s126
    %p138 = scmp.eq.s32.totalorder %s20, 3
    %p139 = por %p137, %p138
    %p141 = scmp.ne.s32.totalorder %s126, %s140
    %p142 = scmp.eq.s32.totalorder %s20, 0
    %p143 = por %p141, %p142
    %s144 = ssub.s32 %s21, %s33
    %s145 = ssub.s32 %s22, %s29
    %s146 = sor.u32 %s144, %s145
    %p147 = scmp.eq.s32.totalorder %s146, 0
    %s149 = sadd.s32 %s148, 1
    %s150 = scalar_select %p147, %s148, %s149
    %p153 = pneg %p147
    %p154 = scmp.eq.s32.totalorder %s14, 3
    %p155 = por %p153, %p154
    %p156 = scmp.ne.s32.totalorder %s148, %s151
    %p157 = scmp.eq.s32.totalorder %s14, 0
    %p158 = por %p156, %p157
    %p159 = scmp.ne.s32.totalorder %s148, %s151
    %p160 = scmp.eq.s32.totalorder %s19, 3
    %p161 = por %p159, %p160
    %p162 = scmp.ne.s32.totalorder %s151, %s152
    %p163 = scmp.eq.s32.totalorder %s19, 0
    %p164 = por %p162, %p163
    %p165 = scmp.ne.s32.totalorder %s151, %s152
    %p166 = scmp.eq.s32.totalorder %s20, 3
    %p167 = por %p165, %p166
    %p169 = scmp.ne.s32.totalorder %s152, %s168
    %p170 = scmp.eq.s32.totalorder %s20, 0
    %p171 = por %p169, %p170
    %s172 = ssub.s32 %s21, %s33
    %p173 = scmp.eq.s32.totalorder %s172, 0
    %s175 = sadd.s32 %s174, 1
    %s176 = scalar_select %p173, %s174, %s175
    %p179 = pneg %p173
    %p180 = scmp.eq.s32.totalorder %s14, 3
    %p181 = por %p179, %p180
    %p182 = scmp.ne.s32.totalorder %s174, %s177
    %p183 = scmp.eq.s32.totalorder %s14, 0
    %p184 = por %p182, %p183
    %p185 = scmp.ne.s32.totalorder %s174, %s177
    %p186 = scmp.eq.s32.totalorder %s19, 3
    %p187 = por %p185, %p186
    %p188 = scmp.ne.s32.totalorder %s177, %s178
    %p189 = scmp.eq.s32.totalorder %s19, 0
    %p190 = por %p188, %p189
    %p191 = scmp.ne.s32.totalorder %s177, %s178
    %p192 = scmp.eq.s32.totalorder %s20, 3
    %p193 = por %p191, %p192
    %p195 = scmp.ne.s32.totalorder %s178, %s194
    %p196 = scmp.eq.s32.totalorder %s20, 0
    %p197 = por %p195, %p196
    %s198 = ssub.s32 %s21, %s33
    %p199 = scmp.eq.s32.totalorder %s198, 0
    %s201 = sadd.s32 %s200, 1
    %s202 = scalar_select %p199, %s200, %s201
    %p205 = pneg %p199
    %p206 = scmp.eq.s32.totalorder %s14, 3
    %p207 = por %p205, %p206
    %p208 = scmp.ne.s32.totalorder %s200, %s203
    %p209 = scmp.eq.s32.totalorder %s14, 0
    %p210 = por %p208, %p209
    %p211 = scmp.ne.s32.totalorder %s200, %s203
    %p212 = scmp.eq.s32.totalorder %s19, 3
    %p213 = por %p211, %p212
    %p214 = scmp.ne.s32.totalorder %s203, %s204
    %p215 = scmp.eq.s32.totalorder %s19, 0
    %p216 = por %p214, %p215
    %p217 = scmp.ne.s32.totalorder %s203, %s204
    %p218 = scmp.eq.s32.totalorder %s20, 3
    %p219 = por %p217, %p218
    %p221 = scmp.ne.s32.totalorder %s204, %s220
    %p222 = scmp.eq.s32.totalorder %s20, 0
    %p223 = por %p221, %p222
    %p224 = scmp.le.s32.totalorder 1, %s14
    %p225 = scmp.lt.s32.totalorder %s14, 5
    %p226 = pnand %p224, %p225
    %p227 = pneg %p226
    // Predicated region
    $region9: #{double_conv_forward.4} parent=5 // pred_check
      _
    $region10: #{double_conv_forward.4} parent=5 // pred_check_branch
      %229 = sbr.rel (%p226) target = $region12
    $region11: #{double_conv_forward.4} parent=5 // pred_region
      %s230 = ssub.s32 %s14, 1
      // Predicated region
      $region13: #{double_conv_forward.4} parent=11 // pred_check
        %p231 = pneg %p73
      $region14: #{double_conv_forward.4} parent=11 // pred_check_branch
        %233 = sbr.rel (%p231) target = $region16
      $region15: #{double_conv_forward.4} parent=11 // pred_region
        _
      $region16: #{double_conv_forward.4} parent=11 // pred_fallthru
        _
      // Predicated region
      $region17: #{double_conv_forward.4} parent=11 // pred_check
        %p234 = pneg %p94
      $region18: #{double_conv_forward.4} parent=11 // pred_check_branch
        %236 = sbr.rel (%p234) target = $region20
      $region19: #{double_conv_forward.4} parent=11 // pred_region
        _
      $region20: #{double_conv_forward.4} parent=11 // pred_fallthru
        _
      // Predicated region
      $region21: #{double_conv_forward.4} parent=11 // pred_check
        %p237 = pneg %p115
      $region22: #{double_conv_forward.4} parent=11 // pred_check_branch
        %239 = sbr.rel (%p237) target = $region24
      $region23: #{double_conv_forward.4} parent=11 // pred_region
        _
      $region24: #{double_conv_forward.4} parent=11 // pred_fallthru
        _
      // Predicated region
      $region25: #{double_conv_forward.4} parent=11 // pred_check
        %p240 = pneg %p136
      $region26: #{double_conv_forward.4} parent=11 // pred_check_branch
        %242 = sbr.rel (%p240) target = $region28
      $region27: #{double_conv_forward.4} parent=11 // pred_region
        _
      $region28: #{double_conv_forward.4} parent=11 // pred_fallthru
        _
    $region12: #{double_conv_forward.4} parent=5 // pred_fallthru
      _
    %p243 = scmp.lt.s32.totalorder %s14, 4
    // Predicated region
    $region29: #{double_conv_forward.4} parent=5 // pred_check
      %p244 = pneg %p243
    $region30: #{double_conv_forward.4} parent=5 // pred_check_branch
      %246 = sbr.rel (%p244) target = $region32
    $region31: #{double_conv_forward.4} parent=5 // pred_region
      // Predicated region
      $region33: #{double_conv_forward.4} parent=31 // pred_check
        %p247 = pneg %p46
      $region34: #{double_conv_forward.4} parent=31 // pred_check_branch
        %249 = sbr.rel (%p247) target = $region36
      $region35: #{double_conv_forward.4} parent=31 // pred_region
        %p250 = scmp.lt.s32.totalorder %s21, 1
        %s251 = scalar_select %p250, %s21, 1
        %s252 = smul.addr %s251, 32
        %s253 = smul.addr %s252, 4
        %s254 = scalar_lea.vmem %s0, %s253
      $region36: #{double_conv_forward.4} parent=31 // pred_fallthru
        _
    $region32: #{double_conv_forward.4} parent=5 // pred_fallthru
      _
    %p255 = scmp.le.s32.totalorder 1, %s14
    %p256 = scmp.lt.s32.totalorder %s14, 5
    %p257 = pnand %p255, %p256
    %p258 = pneg %p257
    // Predicated region
    $region37: #{double_conv_forward.4} parent=5 // pred_check
      _
    $region38: #{double_conv_forward.4} parent=5 // pred_check_branch
      %260 = sbr.rel (%p257) target = $region40
    $region39: #{double_conv_forward.4} parent=5 // pred_region
      %s261 = ssub.s32 %s14, 1
      %p262 = scmp.lt.s32.totalorder %s23, 1
      %s263 = scalar_select %p262, %s23, 1
      %s264 = smul.addr %s263, 32
      %s265 = smul.addr %s264, 4
      %s266 = scalar_lea.vmem %s0, %s265
      %p267 = pneg %p52
      %p268 = pneg %p49
      %p269 = pneg %p73
      %p270 = pneg %p70
      %p271 = pneg %p94
      %p272 = pneg %p91
      %p273 = pneg %p115
      %p274 = pneg %p112
      %p275 = pneg %p136
      %p276 = pneg %p133
      %p277 = pneg %p164
      %p278 = pneg %p161
      %s279 = smul.u32 8, %s24
      %p280 = scmp.lt.s32.totalorder %s23, 1
      %s281 = scalar_select %p280, %s23, 1
      %p282 = scmp.lt.s32.totalorder %s279, 15
      %s283 = scalar_select %p282, %s279, 15
      %s284 = smul.addr %s283, 2
      %s285 = smul.addr %s281, 32
      %s286 = sadd.s32 %s284, %s285
      %s287 = smul.addr %s286, 4
      %s288 = scalar_lea.vmem %s5, %s287
      %p289 = pneg %p190
      %p290 = pneg %p187
      %p291 = scmp.lt.s32.totalorder %s23, 1
      %s292 = scalar_select %p291, %s23, 1
      %s293 = scalar_lea.vmem %s6, %s292
      %p294 = pneg %p216
      %p295 = pneg %p213
      %p296 = scmp.lt.s32.totalorder %s23, 1
      %s297 = scalar_select %p296, %s23, 1
      %s298 = scalar_lea.vmem %s7, %s297
      %p299 = scmp.lt.s32.totalorder %s23, 1
      %s300 = scalar_select %p299, %s23, 1
      %s301 = smul.addr %s300, 32
      %s302 = smul.addr %s301, 4
      %s303 = scalar_lea.vmem %s0, %s302
      %s304 = smul.u32 8, %s24
      %p305 = scmp.lt.s32.totalorder %s23, 1
      %s306 = scalar_select %p305, %s23, 1
      %p307 = scmp.lt.s32.totalorder %s304, 15
      %s308 = scalar_select %p307, %s304, 15
      %s309 = smul.addr %s308, 2
      %s310 = smul.addr %s306, 32
      %s311 = sadd.s32 %s309, %s310
      %s312 = smul.addr %s311, 4
      %s313 = scalar_lea.vmem %s5, %s312
      %s314 = smul.u32 8, %s24
      %p315 = scmp.lt.s32.totalorder %s23, 1
      %s316 = scalar_select %p315, %s23, 1
      %s317 = scalar_lea.vmem %s6, %s316
      %p318 = scmp.lt.s32.totalorder %s23, 1
      %s319 = scalar_select %p318, %s23, 1
      %s320 = scalar_lea.vmem %s7, %s319
      %v322 = vld [vmem:[%s1] sm:$0x1]
      %v323 = vld [vmem:[%s2] sm:$0x1]
      %p324 = scmp.eq.s32.totalorder %s24, 0
      // Predicated region
      $region41: #{double_conv_forward.4} parent=39 // pred_check
        %p325 = pneg %p324
      $region42: #{double_conv_forward.4} parent=39 // pred_check_branch
        %327 = sbr.rel (%p325) target = $region44
      $region43: #{double_conv_forward.4} parent=39 // pred_region
        %v328 = vld [vmem:[%s303] sm:$0xf]
        %v329 = vld [vmem:[%s303 + $0x4] sm:$0xf]
        %v330 = vld [vmem:[%s303 + $0x8] sm:$0xf]
        %v331 = vld [vmem:[%s303 + $0xc] sm:$0xf]
        %v332 = vld [vmem:[%s303 + $0x10] sm:$0xf]
        %v333 = vld [vmem:[%s303 + $0x14] sm:$0xf]
        %v334 = vld [vmem:[%s303 + $0x18] sm:$0xf]
        %v335 = vld [vmem:[%s303 + $0x1c] sm:$0xf]
        %v336 = vld [vmem:[%s303 + $0x20] sm:$0xf]
        %v337 = vld [vmem:[%s303 + $0x24] sm:$0xf]
        %v338 = vld [vmem:[%s303 + $0x28] sm:$0xf]
        %v339 = vld [vmem:[%s303 + $0x2c] sm:$0xf]
        %v340 = vld [vmem:[%s303 + $0x30] sm:$0xf]
        %v341 = vld [vmem:[%s303 + $0x34] sm:$0xf]
        %v342 = vld [vmem:[%s303 + $0x38] sm:$0xf]
        %v343 = vld [vmem:[%s303 + $0x3c] sm:$0xf]
        %v344 = vld [vmem:[%s303 + $0x40] sm:$0xf]
        %v345 = vld [vmem:[%s303 + $0x44] sm:$0xf]
        %v346 = vld [vmem:[%s303 + $0x48] sm:$0xf]
        %v347 = vld [vmem:[%s303 + $0x4c] sm:$0xf]
        %v348 = vld [vmem:[%s303 + $0x50] sm:$0xf]
        %v349 = vld [vmem:[%s303 + $0x54] sm:$0xf]
        %v350 = vld [vmem:[%s303 + $0x58] sm:$0xf]
        %v351 = vld [vmem:[%s303 + $0x5c] sm:$0xf]
        %v352 = vld [vmem:[%s303 + $0x60] sm:$0xf]
        %v353 = vld [vmem:[%s303 + $0x64] sm:$0xf]
        %v354 = vld [vmem:[%s303 + $0x68] sm:$0xf]
        %v355 = vld [vmem:[%s303 + $0x6c] sm:$0xf]
        %v356 = vld [vmem:[%s303 + $0x70] sm:$0xf]
        %v357 = vld [vmem:[%s303 + $0x74] sm:$0xf]
        %v358 = vld [vmem:[%s303 + $0x78] sm:$0xf]
        %v359 = vld [vmem:[%s303 + $0x7c] sm:$0xf]
        %v360 = vunpack.c.l.bf16 %v328
        %v361 = vunpack.c.l.bf16 %v329
        %v362 = vunpack.c.l.bf16 %v330
        %v363 = vunpack.c.l.bf16 %v331
        %v364 = vunpack.c.l.bf16 %v332
        %v365 = vunpack.c.l.bf16 %v333
        %v366 = vunpack.c.l.bf16 %v334
        %v367 = vunpack.c.l.bf16 %v335
        %v368 = vunpack.c.l.bf16 %v336
        %v369 = vunpack.c.l.bf16 %v337
        %v370 = vunpack.c.l.bf16 %v338
        %v371 = vunpack.c.l.bf16 %v339
        %v372 = vunpack.c.l.bf16 %v340
        %v373 = vunpack.c.l.bf16 %v341
        %v374 = vunpack.c.l.bf16 %v342
        %v375 = vunpack.c.l.bf16 %v343
        %v376 = vunpack.c.l.bf16 %v344
        %v377 = vunpack.c.l.bf16 %v345
        %v378 = vunpack.c.l.bf16 %v346
        %v379 = vunpack.c.l.bf16 %v347
        %v380 = vunpack.c.l.bf16 %v348
        %v381 = vunpack.c.l.bf16 %v349
        %v382 = vunpack.c.l.bf16 %v350
        %v383 = vunpack.c.l.bf16 %v351
        %v384 = vunpack.c.l.bf16 %v352
        %v385 = vunpack.c.l.bf16 %v353
        %v386 = vunpack.c.l.bf16 %v354
        %v387 = vunpack.c.l.bf16 %v355
        %v388 = vunpack.c.l.bf16 %v356
        %v389 = vunpack.c.l.bf16 %v357
        %v390 = vunpack.c.l.bf16 %v358
        %v391 = vunpack.c.l.bf16 %v359
        %v393 = vlaneseq
        %v394 = vshrl.u32 %v393, 7
        %v395 = vsub.s32 0, %v394
        %v396 = vrot.slane %v322, %v395
        %v398 = vmul.f32 %v360, %v396
        %v399 = vmul.f32 %v361, %v396
        %v400 = vmul.f32 %v362, %v396
        %v401 = vmul.f32 %v363, %v396
        %v402 = vmul.f32 %v364, %v396
        %v403 = vmul.f32 %v365, %v396
        %v404 = vmul.f32 %v366, %v396
        %v405 = vmul.f32 %v367, %v396
        %v406 = vmul.f32 %v368, %v396
        %v407 = vmul.f32 %v369, %v396
        %v408 = vmul.f32 %v370, %v396
        %v409 = vmul.f32 %v371, %v396
        %v410 = vmul.f32 %v372, %v396
        %v411 = vmul.f32 %v373, %v396
        %v412 = vmul.f32 %v374, %v396
        %v413 = vmul.f32 %v375, %v396
        %v414 = vmul.f32 %v376, %v396
        %v415 = vmul.f32 %v377, %v396
        %v416 = vmul.f32 %v378, %v396
        %v417 = vmul.f32 %v379, %v396
        %v418 = vmul.f32 %v380, %v396
        %v419 = vmul.f32 %v381, %v396
        %v420 = vmul.f32 %v382, %v396
        %v421 = vmul.f32 %v383, %v396
        %v422 = vmul.f32 %v384, %v396
        %v423 = vmul.f32 %v385, %v396
        %v424 = vmul.f32 %v386, %v396
        %v425 = vmul.f32 %v387, %v396
        %v426 = vmul.f32 %v388, %v396
        %v427 = vmul.f32 %v389, %v396
        %v428 = vmul.f32 %v390, %v396
        %v429 = vmul.f32 %v391, %v396
        %v431 = vlaneseq
        %v432 = vshrl.u32 %v431, 7
        %v433 = vsub.s32 0, %v432
        %v434 = vrot.slane %v323, %v433
        %v436 = vadd.f32 %v398, %v434
        %v437 = vadd.f32 %v399, %v434
        %v438 = vadd.f32 %v400, %v434
        %v439 = vadd.f32 %v401, %v434
        %v440 = vadd.f32 %v402, %v434
        %v441 = vadd.f32 %v403, %v434
        %v442 = vadd.f32 %v404, %v434
        %v443 = vadd.f32 %v405, %v434
        %v444 = vadd.f32 %v406, %v434
        %v445 = vadd.f32 %v407, %v434
        %v446 = vadd.f32 %v408, %v434
        %v447 = vadd.f32 %v409, %v434
        %v448 = vadd.f32 %v410, %v434
        %v449 = vadd.f32 %v411, %v434
        %v450 = vadd.f32 %v412, %v434
        %v451 = vadd.f32 %v413, %v434
        %v452 = vadd.f32 %v414, %v434
        %v453 = vadd.f32 %v415, %v434
        %v454 = vadd.f32 %v416, %v434
        %v455 = vadd.f32 %v417, %v434
        %v456 = vadd.f32 %v418, %v434
        %v457 = vadd.f32 %v419, %v434
        %v458 = vadd.f32 %v420, %v434
        %v459 = vadd.f32 %v421, %v434
        %v460 = vadd.f32 %v422, %v434
        %v461 = vadd.f32 %v423, %v434
        %v462 = vadd.f32 %v424, %v434
        %v463 = vadd.f32 %v425, %v434
        %v464 = vadd.f32 %v426, %v434
        %v465 = vadd.f32 %v427, %v434
        %v466 = vadd.f32 %v428, %v434
        %v467 = vadd.f32 %v429, %v434
        %v468 = vmax.f32 %v436, 0.0
        %v469 = vmax.f32 %v437, 0.0
        %v470 = vmax.f32 %v438, 0.0
        %v471 = vmax.f32 %v439, 0.0
        %v472 = vmax.f32 %v440, 0.0
        %v473 = vmax.f32 %v441, 0.0
        %v474 = vmax.f32 %v442, 0.0
        %v475 = vmax.f32 %v443, 0.0
        %v476 = vmax.f32 %v444, 0.0
        %v477 = vmax.f32 %v445, 0.0
        %v478 = vmax.f32 %v446, 0.0
        %v479 = vmax.f32 %v447, 0.0
        %v480 = vmax.f32 %v448, 0.0
        %v481 = vmax.f32 %v449, 0.0
        %v482 = vmax.f32 %v450, 0.0
        %v483 = vmax.f32 %v451, 0.0
        %v484 = vmax.f32 %v452, 0.0
        %v485 = vmax.f32 %v453, 0.0
        %v486 = vmax.f32 %v454, 0.0
        %v487 = vmax.f32 %v455, 0.0
        %v488 = vmax.f32 %v456, 0.0
        %v489 = vmax.f32 %v457, 0.0
        %v490 = vmax.f32 %v458, 0.0
        %v491 = vmax.f32 %v459, 0.0
        %v492 = vmax.f32 %v460, 0.0
        %v493 = vmax.f32 %v461, 0.0
        %v494 = vmax.f32 %v462, 0.0
        %v495 = vmax.f32 %v463, 0.0
        %v496 = vmax.f32 %v464, 0.0
        %v497 = vmax.f32 %v465, 0.0
        %v498 = vmax.f32 %v466, 0.0
        %v499 = vmax.f32 %v467, 0.0
        %vm500 = vcmask 64512
        %501 = vst.msk [vmem:[#allocation2] sm:$0xff] %vm500, 0.0
        %502 = vst.msk [vmem:[#allocation2 + $0x8] sm:$0xff] %vm500, 0.0
        %vm503 = vcmask 58368
        %504 = vst.msk [vmem:[#allocation2 + $0x10] sm:$0x3] %vm503, 0.0
        %505 = vst.msk [vmem:[#allocation2 + $0x18] sm:$0xff] %vm500, 0.0
        %506 = vst.msk [vmem:[#allocation2 + $0x20] sm:$0xff] %vm500, 0.0
        %507 = vst.msk [vmem:[#allocation2 + $0x28] sm:$0x3] %vm503, 0.0
        %508 = vst.msk [vmem:[#allocation2 + $0x30] sm:$0xff] %vm500, 0.0
        %509 = vst.msk [vmem:[#allocation2 + $0x38] sm:$0xff] %vm500, 0.0
        %510 = vst.msk [vmem:[#allocation2 + $0x40] sm:$0x3] %vm503, 0.0
        %511 = vst.msk [vmem:[#allocation2 + $0x48] sm:$0xff] %vm500, 0.0
        %512 = vst.msk [vmem:[#allocation2 + $0x50] sm:$0xff] %vm500, 0.0
        %513 = vst.msk [vmem:[#allocation2 + $0x58] sm:$0x3] %vm503, 0.0
        %514 = vst.msk [vmem:[#allocation2 + $0x60] sm:$0xff] %vm500, 0.0
        %515 = vst.msk [vmem:[#allocation2 + $0x68] sm:$0xff] %vm500, 0.0
        %516 = vst.msk [vmem:[#allocation2 + $0x70] sm:$0x3] %vm503, 0.0
        %517 = vst.msk [vmem:[#allocation2 + $0x78] sm:$0xff] %vm500, 0.0
        %518 = vst.msk [vmem:[#allocation2 + $0x80] sm:$0xff] %vm500, 0.0
        %519 = vst.msk [vmem:[#allocation2 + $0x88] sm:$0x3] %vm503, 0.0
        %520 = vst.msk [vmem:[#allocation2 + $0x90] sm:$0xff] %vm500, 0.0
        %521 = vst.msk [vmem:[#allocation2 + $0x98] sm:$0xff] %vm500, 0.0
        %522 = vst.msk [vmem:[#allocation2 + $0xa0] sm:$0x3] %vm503, 0.0
        %523 = vst.msk [vmem:[#allocation2 + $0xa8] sm:$0xff] %vm500, 0.0
        %524 = vst.msk [vmem:[#allocation2 + $0xb0] sm:$0xff] %vm500, 0.0
        %525 = vst.msk [vmem:[#allocation2 + $0xb8] sm:$0x3] %vm503, 0.0
        %526 = vst.msk [vmem:[#allocation2 + $0xc0] sm:$0xff] %vm500, 0.0
        %527 = vst.msk [vmem:[#allocation2 + $0xc8] sm:$0xff] %vm500, 0.0
        %528 = vst.msk [vmem:[#allocation2 + $0xd0] sm:$0x3] %vm503, 0.0
        %529 = vst.msk [vmem:[#allocation2 + $0xd8] sm:$0xff] %vm500, 0.0
        %530 = vst.msk [vmem:[#allocation2 + $0xe0] sm:$0xff] %vm500, 0.0
        %531 = vst.msk [vmem:[#allocation2 + $0xe8] sm:$0x3] %vm503, 0.0
        %532 = vst.msk [vmem:[#allocation2 + $0xf0] sm:$0xff] %vm500, 0.0
        %533 = vst.msk [vmem:[#allocation2 + $0xf8] sm:$0xff] %vm500, 0.0
        %534 = vst.msk [vmem:[#allocation2 + $0x100] sm:$0x3] %vm503, 0.0
        %535 = vst.msk [vmem:[#allocation2 + $0x108] sm:$0xff] %vm500, 0.0
        %536 = vst.msk [vmem:[#allocation2 + $0x110] sm:$0xff] %vm500, 0.0
        %537 = vst.msk [vmem:[#allocation2 + $0x118] sm:$0x3] %vm503, 0.0
        %538 = vst.msk [vmem:[#allocation2 + $0x120] sm:$0xff] %vm500, 0.0
        %539 = vst.msk [vmem:[#allocation2 + $0x128] sm:$0xff] %vm500, 0.0
        %540 = vst.msk [vmem:[#allocation2 + $0x130] sm:$0x3] %vm503, 0.0
        %541 = vst.msk [vmem:[#allocation2 + $0x138] sm:$0xff] %vm500, 0.0
        %542 = vst.msk [vmem:[#allocation2 + $0x140] sm:$0xff] %vm500, 0.0
        %543 = vst.msk [vmem:[#allocation2 + $0x148] sm:$0x3] %vm503, 0.0
        %544 = vst.msk [vmem:[#allocation2 + $0x150] sm:$0xff] %vm500, 0.0
        %545 = vst.msk [vmem:[#allocation2 + $0x158] sm:$0xff] %vm500, 0.0
        %546 = vst.msk [vmem:[#allocation2 + $0x160] sm:$0x3] %vm503, 0.0
        %547 = vst.msk [vmem:[#allocation2 + $0x168] sm:$0xff] %vm500, 0.0
        %548 = vst.msk [vmem:[#allocation2 + $0x170] sm:$0xff] %vm500, 0.0
        %549 = vst.msk [vmem:[#allocation2 + $0x178] sm:$0x3] %vm503, 0.0
        %550 = vst.msk [vmem:[#allocation2 + $0x180] sm:$0xff] %vm500, 0.0
        %551 = vst.msk [vmem:[#allocation2 + $0x188] sm:$0xff] %vm500, 0.0
        %552 = vst.msk [vmem:[#allocation2 + $0x190] sm:$0x3] %vm503, 0.0
        %553 = vst.msk [vmem:[#allocation2 + $0x198] sm:$0xff] %vm500, 0.0
        %554 = vst.msk [vmem:[#allocation2 + $0x1a0] sm:$0xff] %vm500, 0.0
        %555 = vst.msk [vmem:[#allocation2 + $0x1a8] sm:$0x3] %vm503, 0.0
        %s556 = scalar_lea.vmem [#allocation2], 24
        %557 = vst.msk [vmem:[%s556 + $0x1] sm:$0xff] %vm500, %v468
        %558 = vst.msk [vmem:[%s556 + $0x9] sm:$0xff] %vm500, %v469
        %559 = vst.msk [vmem:[%s556 + $0x19] sm:$0xff] %vm500, %v470
        %560 = vst.msk [vmem:[%s556 + $0x21] sm:$0xff] %vm500, %v471
        %561 = vst.msk [vmem:[%s556 + $0x31] sm:$0xff] %vm500, %v472
        %562 = vst.msk [vmem:[%s556 + $0x39] sm:$0xff] %vm500, %v473
        %563 = vst.msk [vmem:[%s556 + $0x49] sm:$0xff] %vm500, %v474
        %564 = vst.msk [vmem:[%s556 + $0x51] sm:$0xff] %vm500, %v475
        %565 = vst.msk [vmem:[%s556 + $0x61] sm:$0xff] %vm500, %v476
        %566 = vst.msk [vmem:[%s556 + $0x69] sm:$0xff] %vm500, %v477
        %567 = vst.msk [vmem:[%s556 + $0x79] sm:$0xff] %vm500, %v478
        %568 = vst.msk [vmem:[%s556 + $0x81] sm:$0xff] %vm500, %v479
        %569 = vst.msk [vmem:[%s556 + $0x91] sm:$0xff] %vm500, %v480
        %570 = vst.msk [vmem:[%s556 + $0x99] sm:$0xff] %vm500, %v481
        %571 = vst.msk [vmem:[%s556 + $0xa9] sm:$0xff] %vm500, %v482
        %572 = vst.msk [vmem:[%s556 + $0xb1] sm:$0xff] %vm500, %v483
        %573 = vst.msk [vmem:[%s556 + $0xc1] sm:$0xff] %vm500, %v484
        %574 = vst.msk [vmem:[%s556 + $0xc9] sm:$0xff] %vm500, %v485
        %575 = vst.msk [vmem:[%s556 + $0xd9] sm:$0xff] %vm500, %v486
        %576 = vst.msk [vmem:[%s556 + $0xe1] sm:$0xff] %vm500, %v487
        %577 = vst.msk [vmem:[%s556 + $0xf1] sm:$0xff] %vm500, %v488
        %578 = vst.msk [vmem:[%s556 + $0xf9] sm:$0xff] %vm500, %v489
        %579 = vst.msk [vmem:[%s556 + $0x109] sm:$0xff] %vm500, %v490
        %580 = vst.msk [vmem:[%s556 + $0x111] sm:$0xff] %vm500, %v491
        %581 = vst.msk [vmem:[%s556 + $0x121] sm:$0xff] %vm500, %v492
        %582 = vst.msk [vmem:[%s556 + $0x129] sm:$0xff] %vm500, %v493
        %583 = vst.msk [vmem:[%s556 + $0x139] sm:$0xff] %vm500, %v494
        %584 = vst.msk [vmem:[%s556 + $0x141] sm:$0xff] %vm500, %v495
        %585 = vst.msk [vmem:[%s556 + $0x151] sm:$0xff] %vm500, %v496
        %586 = vst.msk [vmem:[%s556 + $0x159] sm:$0xff] %vm500, %v497
        %587 = vst.msk [vmem:[%s556 + $0x169] sm:$0xff] %vm500, %v498
        %588 = vst.msk [vmem:[%s556 + $0x171] sm:$0xff] %vm500, %v499
        %vm589 = vcmask 57344
        %590 = vst.msk [vmem:[%s317] sm:$0x1] %vm589, 0.0
        %591 = vst.msk [vmem:[%s320] sm:$0x1] %vm589, 0.0
      $region44: #{double_conv_forward.4} parent=39 // pred_fallthru
        _
      %s592 = smul.u32 %s24, 8
      %s593 = smul.u32 %s592, 24
      %s594 = scalar_lea.vmem [#allocation2], %s593
      %v595 = vld [vmem:[%s594] sm:$0xff]
      %v596 = vld [vmem:[%s594 + $0x8] sm:$0xff]
      %v597 = vld [vmem:[%s594 + $0x10] sm:$0x3]
      %v598 = vld [vmem:[%s594 + $0x18] sm:$0xff]
      %v599 = vld [vmem:[%s594 + $0x20] sm:$0xff]
      %v600 = vld [vmem:[%s594 + $0x28] sm:$0x3]
      %v601 = vld [vmem:[%s594 + $0x30] sm:$0xff]
      %v602 = vld [vmem:[%s594 + $0x38] sm:$0xff]
      %v603 = vld [vmem:[%s594 + $0x40] sm:$0x3]
      %v604 = vld [vmem:[%s594 + $0x48] sm:$0xff]
      %v605 = vld [vmem:[%s594 + $0x50] sm:$0xff]
      %v606 = vld [vmem:[%s594 + $0x58] sm:$0x3]
      %v607 = vld [vmem:[%s594 + $0x60] sm:$0xff]
      %v608 = vld [vmem:[%s594 + $0x68] sm:$0xff]
      %v609 = vld [vmem:[%s594 + $0x70] sm:$0x3]
      %v610 = vld [vmem:[%s594 + $0x78] sm:$0xff]
      %v611 = vld [vmem:[%s594 + $0x80] sm:$0xff]
      %v612 = vld [vmem:[%s594 + $0x88] sm:$0x3]
      %v613 = vld [vmem:[%s594 + $0x90] sm:$0xff]
      %v614 = vld [vmem:[%s594 + $0x98] sm:$0xff]
      %v615 = vld [vmem:[%s594 + $0xa0] sm:$0x3]
      %v616 = vld [vmem:[%s594 + $0xa8] sm:$0xff]
      %v617 = vld [vmem:[%s594 + $0xb0] sm:$0xff]
      %v618 = vld [vmem:[%s594 + $0xb8] sm:$0x3]
      %v619 = vld [vmem:[%s594 + $0xc0] sm:$0xff]
      %v620 = vld [vmem:[%s594 + $0xc8] sm:$0xff]
      %v621 = vld [vmem:[%s594 + $0xd0] sm:$0x3]
      %v622 = vld [vmem:[%s594 + $0xd8] sm:$0xff]
      %v623 = vld [vmem:[%s594 + $0xe0] sm:$0xff]
      %v624 = vld [vmem:[%s594 + $0xe8] sm:$0x3]
      %vm625 = vcmask 64512
      %626 = vst.msk [vmem:[#allocation3] sm:$0xff] %vm625, %v595
      %627 = vst.msk [vmem:[#allocation3 + $0x8] sm:$0xff] %vm625, %v596
      %628 = vst.msk [vmem:[#allocation3 + $0x10] sm:$0xff] %vm625, %v598
      %629 = vst.msk [vmem:[#allocation3 + $0x18] sm:$0xff] %vm625, %v599
      %630 = vst.msk [vmem:[#allocation3 + $0x20] sm:$0xff] %vm625, %v601
      %631 = vst.msk [vmem:[#allocation3 + $0x28] sm:$0xff] %vm625, %v602
      %632 = vst.msk [vmem:[#allocation3 + $0x30] sm:$0xff] %vm625, %v604
      %633 = vst.msk [vmem:[#allocation3 + $0x38] sm:$0xff] %vm625, %v605
      %634 = vst.msk [vmem:[#allocation3 + $0x40] sm:$0xff] %vm625, %v607
      %635 = vst.msk [vmem:[#allocation3 + $0x48] sm:$0xff] %vm625, %v608
      %636 = vst.msk [vmem:[#allocation3 + $0x50] sm:$0xff] %vm625, %v610
      %637 = vst.msk [vmem:[#allocation3 + $0x58] sm:$0xff] %vm625, %v611
      %638 = vst.msk [vmem:[#allocation3 + $0x60] sm:$0xff] %vm625, %v613
      %639 = vst.msk [vmem:[#allocation3 + $0x68] sm:$0xff] %vm625, %v614
      %640 = vst.msk [vmem:[#allocation3 + $0x70] sm:$0xff] %vm625, %v616
      %641 = vst.msk [vmem:[#allocation3 + $0x78] sm:$0xff] %vm625, %v617
      %666 = vrot.lane.b32.xlu0 %v595, 8
      %v667 = vpop.permute.xlu0 %666
      %668 = vrot.lane.b32.xlu0 %v596, 8
      %v669 = vpop.permute.xlu0 %668
      %670 = vrot.lane.b32.xlu0 %v597, 8
      %v671 = vpop.permute.xlu0 %670
      %672 = vrot.lane.b32.xlu0 %v598, 8
      %v673 = vpop.permute.xlu0 %672
      %674 = vrot.lane.b32.xlu0 %v599, 8
      %v675 = vpop.permute.xlu0 %674
      %676 = vrot.lane.b32.xlu0 %v600, 8
      %v677 = vpop.permute.xlu0 %676
      %678 = vrot.lane.b32.xlu0 %v601, 8
      %v679 = vpop.permute.xlu0 %678
      %680 = vrot.lane.b32.xlu0 %v602, 8
      %v681 = vpop.permute.xlu0 %680
      %682 = vrot.lane.b32.xlu0 %v603, 8
      %v683 = vpop.permute.xlu0 %682
      %684 = vrot.lane.b32.xlu0 %v604, 8
      %v685 = vpop.permute.xlu0 %684
      %686 = vrot.lane.b32.xlu0 %v605, 8
      %v687 = vpop.permute.xlu0 %686
      %688 = vrot.lane.b32.xlu0 %v606, 8
      %v689 = vpop.permute.xlu0 %688
      %690 = vrot.lane.b32.xlu0 %v607, 8
      %v691 = vpop.permute.xlu0 %690
      %692 = vrot.lane.b32.xlu0 %v608, 8
      %v693 = vpop.permute.xlu0 %692
      %694 = vrot.lane.b32.xlu0 %v609, 8
      %v695 = vpop.permute.xlu0 %694
      %696 = vrot.lane.b32.xlu0 %v610, 8
      %v697 = vpop.permute.xlu0 %696
      %698 = vrot.lane.b32.xlu0 %v611, 8
      %v699 = vpop.permute.xlu0 %698
      %700 = vrot.lane.b32.xlu0 %v612, 8
      %v701 = vpop.permute.xlu0 %700
      %702 = vrot.lane.b32.xlu0 %v613, 8
      %v703 = vpop.permute.xlu0 %702
      %704 = vrot.lane.b32.xlu0 %v614, 8
      %v705 = vpop.permute.xlu0 %704
      %706 = vrot.lane.b32.xlu0 %v615, 8
      %v707 = vpop.permute.xlu0 %706
      %708 = vrot.lane.b32.xlu0 %v616, 8
      %v709 = vpop.permute.xlu0 %708
      %710 = vrot.lane.b32.xlu0 %v617, 8
      %v711 = vpop.permute.xlu0 %710
      %712 = vrot.lane.b32.xlu0 %v618, 8
      %v713 = vpop.permute.xlu0 %712
      %vm738 = vcmask 130113
      %739 = vst.msk [vmem:[#allocation3 - $0x1] sm:$0xfe] %vm738, %v667
      %vm740 = vcmask 130112
      %741 = vst.msk [vmem:[#allocation3 + $0x7] sm:$0xff] %vm740, %v669
      %vm742 = vcmask 122944
      %743 = vst.msk [vmem:[#allocation3 + $0xf] sm:$0x1] %vm742, %v671
      %744 = vst.msk [vmem:[#allocation3 + $0xf] sm:$0xfe] %vm738, %v673
      %745 = vst.msk [vmem:[#allocation3 + $0x17] sm:$0xff] %vm740, %v675
      %746 = vst.msk [vmem:[#allocation3 + $0x1f] sm:$0x1] %vm742, %v677
      %747 = vst.msk [vmem:[#allocation3 + $0x1f] sm:$0xfe] %vm738, %v679
      %748 = vst.msk [vmem:[#allocation3 + $0x27] sm:$0xff] %vm740, %v681
      %749 = vst.msk [vmem:[#allocation3 + $0x2f] sm:$0x1] %vm742, %v683
      %750 = vst.msk [vmem:[#allocation3 + $0x2f] sm:$0xfe] %vm738, %v685
      %751 = vst.msk [vmem:[#allocation3 + $0x37] sm:$0xff] %vm740, %v687
      %752 = vst.msk [vmem:[#allocation3 + $0x3f] sm:$0x1] %vm742, %v689
      %753 = vst.msk [vmem:[#allocation3 + $0x3f] sm:$0xfe] %vm738, %v691
      %754 = vst.msk [vmem:[#allocation3 + $0x47] sm:$0xff] %vm740, %v693
      %755 = vst.msk [vmem:[#allocation3 + $0x4f] sm:$0x1] %vm742, %v695
      %756 = vst.msk [vmem:[#allocation3 + $0x4f] sm:$0xfe] %vm738, %v697
      %757 = vst.msk [vmem:[#allocation3 + $0x57] sm:$0xff] %vm740, %v699
      %758 = vst.msk [vmem:[#allocation3 + $0x5f] sm:$0x1] %vm742, %v701
      %759 = vst.msk [vmem:[#allocation3 + $0x5f] sm:$0xfe] %vm738, %v703
      %760 = vst.msk [vmem:[#allocation3 + $0x67] sm:$0xff] %vm740, %v705
      %761 = vst.msk [vmem:[#allocation3 + $0x6f] sm:$0x1] %vm742, %v707
      %762 = vst.msk [vmem:[#allocation3 + $0x6f] sm:$0xfe] %vm738, %v709
      %763 = vst.msk [vmem:[#allocation3 + $0x77] sm:$0xff] %vm740, %v711
      %764 = vst.msk [vmem:[#allocation3 + $0x7f] sm:$0x1] %vm742, %v713
      %765 = vrot.lane.b32.xlu0 %v595, 16
      %v766 = vpop.permute.xlu0 %765
      %767 = vrot.lane.b32.xlu0 %v596, 16
      %v768 = vpop.permute.xlu0 %767
      %769 = vrot.lane.b32.xlu0 %v597, 16
      %v770 = vpop.permute.xlu0 %769
      %771 = vrot.lane.b32.xlu0 %v598, 16
      %v772 = vpop.permute.xlu0 %771
      %773 = vrot.lane.b32.xlu0 %v599, 16
      %v774 = vpop.permute.xlu0 %773
      %775 = vrot.lane.b32.xlu0 %v600, 16
      %v776 = vpop.permute.xlu0 %775
      %777 = vrot.lane.b32.xlu0 %v601, 16
      %v778 = vpop.permute.xlu0 %777
      %779 = vrot.lane.b32.xlu0 %v602, 16
      %v780 = vpop.permute.xlu0 %779
      %781 = vrot.lane.b32.xlu0 %v603, 16
      %v782 = vpop.permute.xlu0 %781
      %783 = vrot.lane.b32.xlu0 %v604, 16
      %v784 = vpop.permute.xlu0 %783
      %785 = vrot.lane.b32.xlu0 %v605, 16
      %v786 = vpop.permute.xlu0 %785
      %787 = vrot.lane.b32.xlu0 %v606, 16
      %v788 = vpop.permute.xlu0 %787
      %789 = vrot.lane.b32.xlu0 %v607, 16
      %v790 = vpop.permute.xlu0 %789
      %791 = vrot.lane.b32.xlu0 %v608, 16
      %v792 = vpop.permute.xlu0 %791
      %793 = vrot.lane.b32.xlu0 %v609, 16
      %v794 = vpop.permute.xlu0 %793
      %795 = vrot.lane.b32.xlu0 %v610, 16
      %v796 = vpop.permute.xlu0 %795
      %797 = vrot.lane.b32.xlu0 %v611, 16
      %v798 = vpop.permute.xlu0 %797
      %799 = vrot.lane.b32.xlu0 %v612, 16
      %v800 = vpop.permute.xlu0 %799
      %801 = vrot.lane.b32.xlu0 %v613, 16
      %v802 = vpop.permute.xlu0 %801
      %803 = vrot.lane.b32.xlu0 %v614, 16
      %v804 = vpop.permute.xlu0 %803
      %805 = vrot.lane.b32.xlu0 %v615, 16
      %v806 = vpop.permute.xlu0 %805
      %807 = vrot.lane.b32.xlu0 %v616, 16
      %v808 = vpop.permute.xlu0 %807
      %809 = vrot.lane.b32.xlu0 %v617, 16
      %v810 = vpop.permute.xlu0 %809
      %811 = vrot.lane.b32.xlu0 %v618, 16
      %v812 = vpop.permute.xlu0 %811
      %vm837 = vcmask 195714
      %838 = vst.msk [vmem:[#allocation3 - $0x2] sm:$0xfc] %vm837, %v766
      %vm839 = vcmask 195712
      %840 = vst.msk [vmem:[#allocation3 + $0x6] sm:$0xff] %vm839, %v768
      %vm841 = vcmask 189568
      %842 = vst.msk [vmem:[#allocation3 + $0xe] sm:$0x3] %vm841, %v770
      %843 = vst.msk [vmem:[#allocation3 + $0xe] sm:$0xfc] %vm837, %v772
      %844 = vst.msk [vmem:[#allocation3 + $0x16] sm:$0xff] %vm839, %v774
      %845 = vst.msk [vmem:[#allocation3 + $0x1e] sm:$0x3] %vm841, %v776
      %846 = vst.msk [vmem:[#allocation3 + $0x1e] sm:$0xfc] %vm837, %v778
      %847 = vst.msk [vmem:[#allocation3 + $0x26] sm:$0xff] %vm839, %v780
      %848 = vst.msk [vmem:[#allocation3 + $0x2e] sm:$0x3] %vm841, %v782
      %849 = vst.msk [vmem:[#allocation3 + $0x2e] sm:$0xfc] %vm837, %v784
      %850 = vst.msk [vmem:[#allocation3 + $0x36] sm:$0xff] %vm839, %v786
      %851 = vst.msk [vmem:[#allocation3 + $0x3e] sm:$0x3] %vm841, %v788
      %852 = vst.msk [vmem:[#allocation3 + $0x3e] sm:$0xfc] %vm837, %v790
      %853 = vst.msk [vmem:[#allocation3 + $0x46] sm:$0xff] %vm839, %v792
      %854 = vst.msk [vmem:[#allocation3 + $0x4e] sm:$0x3] %vm841, %v794
      %855 = vst.msk [vmem:[#allocation3 + $0x4e] sm:$0xfc] %vm837, %v796
      %856 = vst.msk [vmem:[#allocation3 + $0x56] sm:$0xff] %vm839, %v798
      %857 = vst.msk [vmem:[#allocation3 + $0x5e] sm:$0x3] %vm841, %v800
      %858 = vst.msk [vmem:[#allocation3 + $0x5e] sm:$0xfc] %vm837, %v802
      %859 = vst.msk [vmem:[#allocation3 + $0x66] sm:$0xff] %vm839, %v804
      %860 = vst.msk [vmem:[#allocation3 + $0x6e] sm:$0x3] %vm841, %v806
      %861 = vst.msk [vmem:[#allocation3 + $0x6e] sm:$0xfc] %vm837, %v808
      %862 = vst.msk [vmem:[#allocation3 + $0x76] sm:$0xff] %vm839, %v810
      %863 = vst.msk [vmem:[#allocation3 + $0x7e] sm:$0x3] %vm841, %v812
      %866 = vrot.lane.b32.xlu0 %v598, 24
      %v867 = vpop.permute.xlu0 %866
      %868 = vrot.lane.b32.xlu0 %v599, 24
      %v869 = vpop.permute.xlu0 %868
      %870 = vrot.lane.b32.xlu0 %v601, 24
      %v871 = vpop.permute.xlu0 %870
      %872 = vrot.lane.b32.xlu0 %v602, 24
      %v873 = vpop.permute.xlu0 %872
      %874 = vrot.lane.b32.xlu0 %v604, 24
      %v875 = vpop.permute.xlu0 %874
      %876 = vrot.lane.b32.xlu0 %v605, 24
      %v877 = vpop.permute.xlu0 %876
      %878 = vrot.lane.b32.xlu0 %v607, 24
      %v879 = vpop.permute.xlu0 %878
      %880 = vrot.lane.b32.xlu0 %v608, 24
      %v881 = vpop.permute.xlu0 %880
      %882 = vrot.lane.b32.xlu0 %v610, 24
      %v883 = vpop.permute.xlu0 %882
      %884 = vrot.lane.b32.xlu0 %v611, 24
      %v885 = vpop.permute.xlu0 %884
      %886 = vrot.lane.b32.xlu0 %v613, 24
      %v887 = vpop.permute.xlu0 %886
      %888 = vrot.lane.b32.xlu0 %v614, 24
      %v889 = vpop.permute.xlu0 %888
      %890 = vrot.lane.b32.xlu0 %v616, 24
      %v891 = vpop.permute.xlu0 %890
      %892 = vrot.lane.b32.xlu0 %v617, 24
      %v893 = vpop.permute.xlu0 %892
      %894 = vrot.lane.b32.xlu0 %v619, 24
      %v895 = vpop.permute.xlu0 %894
      %896 = vrot.lane.b32.xlu0 %v620, 24
      %v897 = vpop.permute.xlu0 %896
      %vm914 = vcmask 261312
      %915 = vst.msk [vmem:[#allocation3] sm:$0xff] %vm914, %v867
      %916 = vst.msk [vmem:[#allocation3 + $0x8] sm:$0xff] %vm914, %v869
      %917 = vst.msk [vmem:[#allocation3 + $0x10] sm:$0xff] %vm914, %v871
      %918 = vst.msk [vmem:[#allocation3 + $0x18] sm:$0xff] %vm914, %v873
      %919 = vst.msk [vmem:[#allocation3 + $0x20] sm:$0xff] %vm914, %v875
      %920 = vst.msk [vmem:[#allocation3 + $0x28] sm:$0xff] %vm914, %v877
      %921 = vst.msk [vmem:[#allocation3 + $0x30] sm:$0xff] %vm914, %v879
      %922 = vst.msk [vmem:[#allocation3 + $0x38] sm:$0xff] %vm914, %v881
      %923 = vst.msk [vmem:[#allocation3 + $0x40] sm:$0xff] %vm914, %v883
      %924 = vst.msk [vmem:[#allocation3 + $0x48] sm:$0xff] %vm914, %v885
      %925 = vst.msk [vmem:[#allocation3 + $0x50] sm:$0xff] %vm914, %v887
      %926 = vst.msk [vmem:[#allocation3 + $0x58] sm:$0xff] %vm914, %v889
      %927 = vst.msk [vmem:[#allocation3 + $0x60] sm:$0xff] %vm914, %v891
      %928 = vst.msk [vmem:[#allocation3 + $0x68] sm:$0xff] %vm914, %v893
      %929 = vst.msk [vmem:[#allocation3 + $0x70] sm:$0xff] %vm914, %v895
      %930 = vst.msk [vmem:[#allocation3 + $0x78] sm:$0xff] %vm914, %v897
      %932 = vrot.lane.b32.xlu0 %v598, 32
      %v933 = vpop.permute.xlu0 %932
      %934 = vrot.lane.b32.xlu0 %v599, 32
      %v935 = vpop.permute.xlu0 %934
      %936 = vrot.lane.b32.xlu0 %v600, 32
      %v937 = vpop.permute.xlu0 %936
      %938 = vrot.lane.b32.xlu0 %v601, 32
      %v939 = vpop.permute.xlu0 %938
      %940 = vrot.lane.b32.xlu0 %v602, 32
      %v941 = vpop.permute.xlu0 %940
      %942 = vrot.lane.b32.xlu0 %v603, 32
      %v943 = vpop.permute.xlu0 %942
      %944 = vrot.lane.b32.xlu0 %v604, 32
      %v945 = vpop.permute.xlu0 %944
      %946 = vrot.lane.b32.xlu0 %v605, 32
      %v947 = vpop.permute.xlu0 %946
      %948 = vrot.lane.b32.xlu0 %v606, 32
      %v949 = vpop.permute.xlu0 %948
      %950 = vrot.lane.b32.xlu0 %v607, 32
      %v951 = vpop.permute.xlu0 %950
      %952 = vrot.lane.b32.xlu0 %v608, 32
      %v953 = vpop.permute.xlu0 %952
      %954 = vrot.lane.b32.xlu0 %v609, 32
      %v955 = vpop.permute.xlu0 %954
      %956 = vrot.lane.b32.xlu0 %v610, 32
      %v957 = vpop.permute.xlu0 %956
      %958 = vrot.lane.b32.xlu0 %v611, 32
      %v959 = vpop.permute.xlu0 %958
      %960 = vrot.lane.b32.xlu0 %v612, 32
      %v961 = vpop.permute.xlu0 %960
      %962 = vrot.lane.b32.xlu0 %v613, 32
      %v963 = vpop.permute.xlu0 %962
      %964 = vrot.lane.b32.xlu0 %v614, 32
      %v965 = vpop.permute.xlu0 %964
      %966 = vrot.lane.b32.xlu0 %v615, 32
      %v967 = vpop.permute.xlu0 %966
      %968 = vrot.lane.b32.xlu0 %v616, 32
      %v969 = vpop.permute.xlu0 %968
      %970 = vrot.lane.b32.xlu0 %v617, 32
      %v971 = vpop.permute.xlu0 %970
      %972 = vrot.lane.b32.xlu0 %v618, 32
      %v973 = vpop.permute.xlu0 %972
      %974 = vrot.lane.b32.xlu0 %v619, 32
      %v975 = vpop.permute.xlu0 %974
      %976 = vrot.lane.b32.xlu0 %v620, 32
      %v977 = vpop.permute.xlu0 %976
      %978 = vrot.lane.b32.xlu0 %v621, 32
      %v979 = vpop.permute.xlu0 %978
      %vm1004 = vcmask 326913
      %1005 = vst.msk [vmem:[#allocation3 - $0x1] sm:$0xfe] %vm1004, %v933
      %vm1006 = vcmask 326912
      %1007 = vst.msk [vmem:[#allocation3 + $0x7] sm:$0xff] %vm1006, %v935
      %vm1008 = vcmask 319744
      %1009 = vst.msk [vmem:[#allocation3 + $0xf] sm:$0x1] %vm1008, %v937
      %1010 = vst.msk [vmem:[#allocation3 + $0xf] sm:$0xfe] %vm1004, %v939
      %1011 = vst.msk [vmem:[#allocation3 + $0x17] sm:$0xff] %vm1006, %v941
      %1012 = vst.msk [vmem:[#allocation3 + $0x1f] sm:$0x1] %vm1008, %v943
      %1013 = vst.msk [vmem:[#allocation3 + $0x1f] sm:$0xfe] %vm1004, %v945
      %1014 = vst.msk [vmem:[#allocation3 + $0x27] sm:$0xff] %vm1006, %v947
      %1015 = vst.msk [vmem:[#allocation3 + $0x2f] sm:$0x1] %vm1008, %v949
      %1016 = vst.msk [vmem:[#allocation3 + $0x2f] sm:$0xfe] %vm1004, %v951
      %1017 = vst.msk [vmem:[#allocation3 + $0x37] sm:$0xff] %vm1006, %v953
      %1018 = vst.msk [vmem:[#allocation3 + $0x3f] sm:$0x1] %vm1008, %v955
      %1019 = vst.msk [vmem:[#allocation3 + $0x3f] sm:$0xfe] %vm1004, %v957
      %1020 = vst.msk [vmem:[#allocation3 + $0x47] sm:$0xff] %vm1006, %v959
      %1021 = vst.msk [vmem:[#allocation3 + $0x4f] sm:$0x1] %vm1008, %v961
      %1022 = vst.msk [vmem:[#allocation3 + $0x4f] sm:$0xfe] %vm1004, %v963
      %1023 = vst.msk [vmem:[#allocation3 + $0x57] sm:$0xff] %vm1006, %v965
      %1024 = vst.msk [vmem:[#allocation3 + $0x5f] sm:$0x1] %vm1008, %v967
      %1025 = vst.msk [vmem:[#allocation3 + $0x5f] sm:$0xfe] %vm1004, %v969
      %1026 = vst.msk [vmem:[#allocation3 + $0x67] sm:$0xff] %vm1006, %v971
      %1027 = vst.msk [vmem:[#allocation3 + $0x6f] sm:$0x1] %vm1008, %v973
      %1028 = vst.msk [vmem:[#allocation3 + $0x6f] sm:$0xfe] %vm1004, %v975
      %1029 = vst.msk [vmem:[#allocation3 + $0x77] sm:$0xff] %vm1006, %v977
      %1030 = vst.msk [vmem:[#allocation3 + $0x7f] sm:$0x1] %vm1008, %v979
      %1031 = vrot.lane.b32.xlu0 %v598, 40
      %v1032 = vpop.permute.xlu0 %1031
      %1033 = vrot.lane.b32.xlu0 %v599, 40
      %v1034 = vpop.permute.xlu0 %1033
      %1035 = vrot.lane.b32.xlu0 %v600, 40
      %v1036 = vpop.permute.xlu0 %1035
      %1037 = vrot.lane.b32.xlu0 %v601, 40
      %v1038 = vpop.permute.xlu0 %1037
      %1039 = vrot.lane.b32.xlu0 %v602, 40
      %v1040 = vpop.permute.xlu0 %1039
      %1041 = vrot.lane.b32.xlu0 %v603, 40
      %v1042 = vpop.permute.xlu0 %1041
      %1043 = vrot.lane.b32.xlu0 %v604, 40
      %v1044 = vpop.permute.xlu0 %1043
      %1045 = vrot.lane.b32.xlu0 %v605, 40
      %v1046 = vpop.permute.xlu0 %1045
      %1047 = vrot.lane.b32.xlu0 %v606, 40
      %v1048 = vpop.permute.xlu0 %1047
      %1049 = vrot.lane.b32.xlu0 %v607, 40
      %v1050 = vpop.permute.xlu0 %1049
      %1051 = vrot.lane.b32.xlu0 %v608, 40
      %v1052 = vpop.permute.xlu0 %1051
      %1053 = vrot.lane.b32.xlu0 %v609, 40
      %v1054 = vpop.permute.xlu0 %1053
      %1055 = vrot.lane.b32.xlu0 %v610, 40
      %v1056 = vpop.permute.xlu0 %1055
      %1057 = vrot.lane.b32.xlu0 %v611, 40
      %v1058 = vpop.permute.xlu0 %1057
      %1059 = vrot.lane.b32.xlu0 %v612, 40
      %v1060 = vpop.permute.xlu0 %1059
      %1061 = vrot.lane.b32.xlu0 %v613, 40
      %v1062 = vpop.permute.xlu0 %1061
      %1063 = vrot.lane.b32.xlu0 %v614, 40
      %v1064 = vpop.permute.xlu0 %1063
      %1065 = vrot.lane.b32.xlu0 %v615, 40
      %v1066 = vpop.permute.xlu0 %1065
      %1067 = vrot.lane.b32.xlu0 %v616, 40
      %v1068 = vpop.permute.xlu0 %1067
      %1069 = vrot.lane.b32.xlu0 %v617, 40
      %v1070 = vpop.permute.xlu0 %1069
      %1071 = vrot.lane.b32.xlu0 %v618, 40
      %v1072 = vpop.permute.xlu0 %1071
      %1073 = vrot.lane.b32.xlu0 %v619, 40
      %v1074 = vpop.permute.xlu0 %1073
      %1075 = vrot.lane.b32.xlu0 %v620, 40
      %v1076 = vpop.permute.xlu0 %1075
      %1077 = vrot.lane.b32.xlu0 %v621, 40
      %v1078 = vpop.permute.xlu0 %1077
      %vm1103 = vcmask 392514
      %1104 = vst.msk [vmem:[#allocation3 - $0x2] sm:$0xfc] %vm1103, %v1032
      %vm1105 = vcmask 392512
      %1106 = vst.msk [vmem:[#allocation3 + $0x6] sm:$0xff] %vm1105, %v1034
      %vm1107 = vcmask 386368
      %1108 = vst.msk [vmem:[#allocation3 + $0xe] sm:$0x3] %vm1107, %v1036
      %1109 = vst.msk [vmem:[#allocation3 + $0xe] sm:$0xfc] %vm1103, %v1038
      %1110 = vst.msk [vmem:[#allocation3 + $0x16] sm:$0xff] %vm1105, %v1040
      %1111 = vst.msk [vmem:[#allocation3 + $0x1e] sm:$0x3] %vm1107, %v1042
      %1112 = vst.msk [vmem:[#allocation3 + $0x1e] sm:$0xfc] %vm1103, %v1044
      %1113 = vst.msk [vmem:[#allocation3 + $0x26] sm:$0xff] %vm1105, %v1046
      %1114 = vst.msk [vmem:[#allocation3 + $0x2e] sm:$0x3] %vm1107, %v1048
      %1115 = vst.msk [vmem:[#allocation3 + $0x2e] sm:$0xfc] %vm1103, %v1050
      %1116 = vst.msk [vmem:[#allocation3 + $0x36] sm:$0xff] %vm1105, %v1052
      %1117 = vst.msk [vmem:[#allocation3 + $0x3e] sm:$0x3] %vm1107, %v1054
      %1118 = vst.msk [vmem:[#allocation3 + $0x3e] sm:$0xfc] %vm1103, %v1056
      %1119 = vst.msk [vmem:[#allocation3 + $0x46] sm:$0xff] %vm1105, %v1058
      %1120 = vst.msk [vmem:[#allocation3 + $0x4e] sm:$0x3] %vm1107, %v1060
      %1121 = vst.msk [vmem:[#allocation3 + $0x4e] sm:$0xfc] %vm1103, %v1062
      %1122 = vst.msk [vmem:[#allocation3 + $0x56] sm:$0xff] %vm1105, %v1064
      %1123 = vst.msk [vmem:[#allocation3 + $0x5e] sm:$0x3] %vm1107, %v1066
      %1124 = vst.msk [vmem:[#allocation3 + $0x5e] sm:$0xfc] %vm1103, %v1068
      %1125 = vst.msk [vmem:[#allocation3 + $0x66] sm:$0xff] %vm1105, %v1070
      %1126 = vst.msk [vmem:[#allocation3 + $0x6e] sm:$0x3] %vm1107, %v1072
      %1127 = vst.msk [vmem:[#allocation3 + $0x6e] sm:$0xfc] %vm1103, %v1074
      %1128 = vst.msk [vmem:[#allocation3 + $0x76] sm:$0xff] %vm1105, %v1076
      %1129 = vst.msk [vmem:[#allocation3 + $0x7e] sm:$0x3] %vm1107, %v1078
      %1132 = vrot.lane.b32.xlu0 %v601, 48
      %v1133 = vpop.permute.xlu0 %1132
      %1134 = vrot.lane.b32.xlu0 %v602, 48
      %v1135 = vpop.permute.xlu0 %1134
      %1136 = vrot.lane.b32.xlu0 %v604, 48
      %v1137 = vpop.permute.xlu0 %1136
      %1138 = vrot.lane.b32.xlu0 %v605, 48
      %v1139 = vpop.permute.xlu0 %1138
      %1140 = vrot.lane.b32.xlu0 %v607, 48
      %v1141 = vpop.permute.xlu0 %1140
      %1142 = vrot.lane.b32.xlu0 %v608, 48
      %v1143 = vpop.permute.xlu0 %1142
      %1144 = vrot.lane.b32.xlu0 %v610, 48
      %v1145 = vpop.permute.xlu0 %1144
      %1146 = vrot.lane.b32.xlu0 %v611, 48
      %v1147 = vpop.permute.xlu0 %1146
      %1148 = vrot.lane.b32.xlu0 %v613, 48
      %v1149 = vpop.permute.xlu0 %1148
      %1150 = vrot.lane.b32.xlu0 %v614, 48
      %v1151 = vpop.permute.xlu0 %1150
      %1152 = vrot.lane.b32.xlu0 %v616, 48
      %v1153 = vpop.permute.xlu0 %1152
      %1154 = vrot.lane.b32.xlu0 %v617, 48
      %v1155 = vpop.permute.xlu0 %1154
      %1156 = vrot.lane.b32.xlu0 %v619, 48
      %v1157 = vpop.permute.xlu0 %1156
      %1158 = vrot.lane.b32.xlu0 %v620, 48
      %v1159 = vpop.permute.xlu0 %1158
      %1160 = vrot.lane.b32.xlu0 %v622, 48
      %v1161 = vpop.permute.xlu0 %1160
      %1162 = vrot.lane.b32.xlu0 %v623, 48
      %v1163 = vpop.permute.xlu0 %1162
      %vm1180 = vcmask 458112
      %1181 = vst.msk [vmem:[#allocation3] sm:$0xff] %vm1180, %v1133
      %1182 = vst.msk [vmem:[#allocation3 + $0x8] sm:$0xff] %vm1180, %v1135
      %1183 = vst.msk [vmem:[#allocation3 + $0x10] sm:$0xff] %vm1180, %v1137
      %1184 = vst.msk [vmem:[#allocation3 + $0x18] sm:$0xff] %vm1180, %v1139
      %1185 = vst.msk [vmem:[#allocation3 + $0x20] sm:$0xff] %vm1180, %v1141
      %1186 = vst.msk [vmem:[#allocation3 + $0x28] sm:$0xff] %vm1180, %v1143
      %1187 = vst.msk [vmem:[#allocation3 + $0x30] sm:$0xff] %vm1180, %v1145
      %1188 = vst.msk [vmem:[#allocation3 + $0x38] sm:$0xff] %vm1180, %v1147
      %1189 = vst.msk [vmem:[#allocation3 + $0x40] sm:$0xff] %vm1180, %v1149
      %1190 = vst.msk [vmem:[#allocation3 + $0x48] sm:$0xff] %vm1180, %v1151
      %1191 = vst.msk [vmem:[#allocation3 + $0x50] sm:$0xff] %vm1180, %v1153
      %1192 = vst.msk [vmem:[#allocation3 + $0x58] sm:$0xff] %vm1180, %v1155
      %1193 = vst.msk [vmem:[#allocation3 + $0x60] sm:$0xff] %vm1180, %v1157
      %1194 = vst.msk [vmem:[#allocation3 + $0x68] sm:$0xff] %vm1180, %v1159
      %1195 = vst.msk [vmem:[#allocation3 + $0x70] sm:$0xff] %vm1180, %v1161
      %1196 = vst.msk [vmem:[#allocation3 + $0x78] sm:$0xff] %vm1180, %v1163
      %1198 = vrot.lane.b32.xlu0 %v601, 56
      %v1199 = vpop.permute.xlu0 %1198
      %1200 = vrot.lane.b32.xlu0 %v602, 56
      %v1201 = vpop.permute.xlu0 %1200
      %1202 = vrot.lane.b32.xlu0 %v603, 56
      %v1203 = vpop.permute.xlu0 %1202
      %1204 = vrot.lane.b32.xlu0 %v604, 56
      %v1205 = vpop.permute.xlu0 %1204
      %1206 = vrot.lane.b32.xlu0 %v605, 56
      %v1207 = vpop.permute.xlu0 %1206
      %1208 = vrot.lane.b32.xlu0 %v606, 56
      %v1209 = vpop.permute.xlu0 %1208
      %1210 = vrot.lane.b32.xlu0 %v607, 56
      %v1211 = vpop.permute.xlu0 %1210
      %1212 = vrot.lane.b32.xlu0 %v608, 56
      %v1213 = vpop.permute.xlu0 %1212
      %1214 = vrot.lane.b32.xlu0 %v609, 56
      %v1215 = vpop.permute.xlu0 %1214
      %1216 = vrot.lane.b32.xlu0 %v610, 56
      %v1217 = vpop.permute.xlu0 %1216
      %1218 = vrot.lane.b32.xlu0 %v611, 56
      %v1219 = vpop.permute.xlu0 %1218
      %1220 = vrot.lane.b32.xlu0 %v612, 56
      %v1221 = vpop.permute.xlu0 %1220
      %1222 = vrot.lane.b32.xlu0 %v613, 56
      %v1223 = vpop.permute.xlu0 %1222
      %1224 = vrot.lane.b32.xlu0 %v614, 56
      %v1225 = vpop.permute.xlu0 %1224
      %1226 = vrot.lane.b32.xlu0 %v615, 56
      %v1227 = vpop.permute.xlu0 %1226
      %1228 = vrot.lane.b32.xlu0 %v616, 56
      %v1229 = vpop.permute.xlu0 %1228
      %1230 = vrot.lane.b32.xlu0 %v617, 56
      %v1231 = vpop.permute.xlu0 %1230
      %1232 = vrot.lane.b32.xlu0 %v618, 56
      %v1233 = vpop.permute.xlu0 %1232
      %1234 = vrot.lane.b32.xlu0 %v619, 56
      %v1235 = vpop.permute.xlu0 %1234
      %1236 = vrot.lane.b32.xlu0 %v620, 56
      %v1237 = vpop.permute.xlu0 %1236
      %1238 = vrot.lane.b32.xlu0 %v621, 56
      %v1239 = vpop.permute.xlu0 %1238
      %1240 = vrot.lane.b32.xlu0 %v622, 56
      %v1241 = vpop.permute.xlu0 %1240
      %1242 = vrot.lane.b32.xlu0 %v623, 56
      %v1243 = vpop.permute.xlu0 %1242
      %1244 = vrot.lane.b32.xlu0 %v624, 56
      %v1245 = vpop.permute.xlu0 %1244
      %vm1270 = vcmask 523713
      %1271 = vst.msk [vmem:[#allocation3 - $0x1] sm:$0xfe] %vm1270, %v1199
      %vm1272 = vcmask 523712
      %1273 = vst.msk [vmem:[#allocation3 + $0x7] sm:$0xff] %vm1272, %v1201
      %vm1274 = vcmask 516544
      %1275 = vst.msk [vmem:[#allocation3 + $0xf] sm:$0x1] %vm1274, %v1203
      %1276 = vst.msk [vmem:[#allocation3 + $0xf] sm:$0xfe] %vm1270, %v1205
      %1277 = vst.msk [vmem:[#allocation3 + $0x17] sm:$0xff] %vm1272, %v1207
      %1278 = vst.msk [vmem:[#allocation3 + $0x1f] sm:$0x1] %vm1274, %v1209
      %1279 = vst.msk [vmem:[#allocation3 + $0x1f] sm:$0xfe] %vm1270, %v1211
      %1280 = vst.msk [vmem:[#allocation3 + $0x27] sm:$0xff] %vm1272, %v1213
      %1281 = vst.msk [vmem:[#allocation3 + $0x2f] sm:$0x1] %vm1274, %v1215
      %1282 = vst.msk [vmem:[#allocation3 + $0x2f] sm:$0xfe] %vm1270, %v1217
      %1283 = vst.msk [vmem:[#allocation3 + $0x37] sm:$0xff] %vm1272, %v1219
      %1284 = vst.msk [vmem:[#allocation3 + $0x3f] sm:$0x1] %vm1274, %v1221
      %1285 = vst.msk [vmem:[#allocation3 + $0x3f] sm:$0xfe] %vm1270, %v1223
      %1286 = vst.msk [vmem:[#allocation3 + $0x47] sm:$0xff] %vm1272, %v1225
      %1287 = vst.msk [vmem:[#allocation3 + $0x4f] sm:$0x1] %vm1274, %v1227
      %1288 = vst.msk [vmem:[#allocation3 + $0x4f] sm:$0xfe] %vm1270, %v1229
      %1289 = vst.msk [vmem:[#allocation3 + $0x57] sm:$0xff] %vm1272, %v1231
      %1290 = vst.msk [vmem:[#allocation3 + $0x5f] sm:$0x1] %vm1274, %v1233
      %1291 = vst.msk [vmem:[#allocation3 + $0x5f] sm:$0xfe] %vm1270, %v1235
      %1292 = vst.msk [vmem:[#allocation3 + $0x67] sm:$0xff] %vm1272, %v1237
      %1293 = vst.msk [vmem:[#allocation3 + $0x6f] sm:$0x1] %vm1274, %v1239
      %1294 = vst.msk [vmem:[#allocation3 + $0x6f] sm:$0xfe] %vm1270, %v1241
      %1295 = vst.msk [vmem:[#allocation3 + $0x77] sm:$0xff] %vm1272, %v1243
      %1296 = vst.msk [vmem:[#allocation3 + $0x7f] sm:$0x1] %vm1274, %v1245
      %1297 = vrot.lane.b32.xlu0 %v601, 64
      %v1298 = vpop.permute.xlu0 %1297
      %1299 = vrot.lane.b32.xlu0 %v602, 64
      %v1300 = vpop.permute.xlu0 %1299
      %1301 = vrot.lane.b32.xlu0 %v603, 64
      %v1302 = vpop.permute.xlu0 %1301
      %1303 = vrot.lane.b32.xlu0 %v604, 64
      %v1304 = vpop.permute.xlu0 %1303
      %1305 = vrot.lane.b32.xlu0 %v605, 64
      %v1306 = vpop.permute.xlu0 %1305
      %1307 = vrot.lane.b32.xlu0 %v606, 64
      %v1308 = vpop.permute.xlu0 %1307
      %1309 = vrot.lane.b32.xlu0 %v607, 64
      %v1310 = vpop.permute.xlu0 %1309
      %1311 = vrot.lane.b32.xlu0 %v608, 64
      %v1312 = vpop.permute.xlu0 %1311
      %1313 = vrot.lane.b32.xlu0 %v609, 64
      %v1314 = vpop.permute.xlu0 %1313
      %1315 = vrot.lane.b32.xlu0 %v610, 64
      %v1316 = vpop.permute.xlu0 %1315
      %1317 = vrot.lane.b32.xlu0 %v611, 64
      %v1318 = vpop.permute.xlu0 %1317
      %1319 = vrot.lane.b32.xlu0 %v612, 64
      %v1320 = vpop.permute.xlu0 %1319
      %1321 = vrot.lane.b32.xlu0 %v613, 64
      %v1322 = vpop.permute.xlu0 %1321
      %1323 = vrot.lane.b32.xlu0 %v614, 64
      %v1324 = vpop.permute.xlu0 %1323
      %1325 = vrot.lane.b32.xlu0 %v615, 64
      %v1326 = vpop.permute.xlu0 %1325
      %1327 = vrot.lane.b32.xlu0 %v616, 64
      %v1328 = vpop.permute.xlu0 %1327
      %1329 = vrot.lane.b32.xlu0 %v617, 64
      %v1330 = vpop.permute.xlu0 %1329
      %1331 = vrot.lane.b32.xlu0 %v618, 64
      %v1332 = vpop.permute.xlu0 %1331
      %1333 = vrot.lane.b32.xlu0 %v619, 64
      %v1334 = vpop.permute.xlu0 %1333
      %1335 = vrot.lane.b32.xlu0 %v620, 64
      %v1336 = vpop.permute.xlu0 %1335
      %1337 = vrot.lane.b32.xlu0 %v621, 64
      %v1338 = vpop.permute.xlu0 %1337
      %1339 = vrot.lane.b32.xlu0 %v622, 64
      %v1340 = vpop.permute.xlu0 %1339
      %1341 = vrot.lane.b32.xlu0 %v623, 64
      %v1342 = vpop.permute.xlu0 %1341
      %1343 = vrot.lane.b32.xlu0 %v624, 64
      %v1344 = vpop.permute.xlu0 %1343
      %vm1369 = vcmask 589314
      %1370 = vst.msk [vmem:[#allocation3 - $0x2] sm:$0xfc] %vm1369, %v1298
      %vm1371 = vcmask 589312
      %1372 = vst.msk [vmem:[#allocation3 + $0x6] sm:$0xff] %vm1371, %v1300
      %vm1373 = vcmask 583168
      %1374 = vst.msk [vmem:[#allocation3 + $0xe] sm:$0x3] %vm1373, %v1302
      %1375 = vst.msk [vmem:[#allocation3 + $0xe] sm:$0xfc] %vm1369, %v1304
      %1376 = vst.msk [vmem:[#allocation3 + $0x16] sm:$0xff] %vm1371, %v1306
      %1377 = vst.msk [vmem:[#allocation3 + $0x1e] sm:$0x3] %vm1373, %v1308
      %1378 = vst.msk [vmem:[#allocation3 + $0x1e] sm:$0xfc] %vm1369, %v1310
      %1379 = vst.msk [vmem:[#allocation3 + $0x26] sm:$0xff] %vm1371, %v1312
      %1380 = vst.msk [vmem:[#allocation3 + $0x2e] sm:$0x3] %vm1373, %v1314
      %1381 = vst.msk [vmem:[#allocation3 + $0x2e] sm:$0xfc] %vm1369, %v1316
      %1382 = vst.msk [vmem:[#allocation3 + $0x36] sm:$0xff] %vm1371, %v1318
      %1383 = vst.msk [vmem:[#allocation3 + $0x3e] sm:$0x3] %vm1373, %v1320
      %1384 = vst.msk [vmem:[#allocation3 + $0x3e] sm:$0xfc] %vm1369, %v1322
      %1385 = vst.msk [vmem:[#allocation3 + $0x46] sm:$0xff] %vm1371, %v1324
      %1386 = vst.msk [vmem:[#allocation3 + $0x4e] sm:$0x3] %vm1373, %v1326
      %1387 = vst.msk [vmem:[#allocation3 + $0x4e] sm:$0xfc] %vm1369, %v1328
      %1388 = vst.msk [vmem:[#allocation3 + $0x56] sm:$0xff] %vm1371, %v1330
      %1389 = vst.msk [vmem:[#allocation3 + $0x5e] sm:$0x3] %vm1373, %v1332
      %1390 = vst.msk [vmem:[#allocation3 + $0x5e] sm:$0xfc] %vm1369, %v1334
      %1391 = vst.msk [vmem:[#allocation3 + $0x66] sm:$0xff] %vm1371, %v1336
      %1392 = vst.msk [vmem:[#allocation3 + $0x6e] sm:$0x3] %vm1373, %v1338
      %1393 = vst.msk [vmem:[#allocation3 + $0x6e] sm:$0xfc] %vm1369, %v1340
      %1394 = vst.msk [vmem:[#allocation3 + $0x76] sm:$0xff] %vm1371, %v1342
      %1395 = vst.msk [vmem:[#allocation3 + $0x7e] sm:$0x3] %vm1373, %v1344
      %v1396 = vld [vmem:[#allocation3] sm:$0xff]
      %v1397 = vld [vmem:[#allocation3 + $0x8] sm:$0xff]
      %v1398 = vld [vmem:[#allocation3 + $0x10] sm:$0xff]
      %v1399 = vld [vmem:[#allocation3 + $0x18] sm:$0xff]
      %v1400 = vld [vmem:[#allocation3 + $0x20] sm:$0xff]
      %v1401 = vld [vmem:[#allocation3 + $0x28] sm:$0xff]
      %v1402 = vld [vmem:[#allocation3 + $0x30] sm:$0xff]
      %v1403 = vld [vmem:[#allocation3 + $0x38] sm:$0xff]
      %v1404 = vld [vmem:[#allocation3 + $0x40] sm:$0xff]
      %v1405 = vld [vmem:[#allocation3 + $0x48] sm:$0xff]
      %v1406 = vld [vmem:[#allocation3 + $0x50] sm:$0xff]
      %v1407 = vld [vmem:[#allocation3 + $0x58] sm:$0xff]
      %v1408 = vld [vmem:[#allocation3 + $0x60] sm:$0xff]
      %v1409 = vld [vmem:[#allocation3 + $0x68] sm:$0xff]
      %v1410 = vld [vmem:[#allocation3 + $0x70] sm:$0xff]
      %v1411 = vld [vmem:[#allocation3 + $0x78] sm:$0xff]
      %v1412 = vpack.c.bf16 %v1397, %v1396
      %v1413 = vpack.c.bf16 %v1399, %v1398
      %v1414 = vpack.c.bf16 %v1401, %v1400
      %v1415 = vpack.c.bf16 %v1403, %v1402
      %v1416 = vpack.c.bf16 %v1405, %v1404
      %v1417 = vpack.c.bf16 %v1407, %v1406
      %v1418 = vpack.c.bf16 %v1409, %v1408
      %v1419 = vpack.c.bf16 %v1411, %v1410
      %v1420 = vld [vmem:[%s3] sm:$0xf]
      %v1421 = vld [vmem:[%s3 + $0x4] sm:$0xf]
      %v1422 = vld [vmem:[%s3 + $0x8] sm:$0xf]
      %v1423 = vld [vmem:[%s3 + $0xc] sm:$0xf]
      %v1424 = vld [vmem:[%s3 + $0x10] sm:$0xf]
      %v1425 = vld [vmem:[%s3 + $0x14] sm:$0xf]
      %v1426 = vld [vmem:[%s3 + $0x18] sm:$0xf]
      %v1427 = vld [vmem:[%s3 + $0x1c] sm:$0xf]
      %v1428 = vld [vmem:[%s3 + $0x20] sm:$0xf]
      %v1429 = vld [vmem:[%s4] sm:$0x1]
      %v1431 = vlaneseq
      %v1432 = vshrl.u32 %v1431, 7
      %v1433 = vsub.s32 0, %v1432
      %v1434 = vrot.slane %v1429, %v1433
      %v1445 = vunpack.c.l.b16 %v1420
      %v1446 = vunpack.c.l.b16 %v1421
      %v1447 = vunpack.c.l.b16 %v1422
      %v1448 = vunpack.c.l.b16 %v1423
      %v1449 = vunpack.c.l.b16 %v1424
      %v1450 = vunpack.c.l.b16 %v1425
      %v1451 = vunpack.c.l.b16 %v1426
      %v1452 = vunpack.c.l.b16 %v1427
      %v1453 = vunpack.c.l.b16 %v1428
      %v1454 = vpack.c.b16 %v1446, %v1445
      %v1455 = vpack.c.b16 %v1448, %v1447
      %v1456 = vpack.c.b16 %v1450, %v1449
      %v1457 = vpack.c.b16 %v1452, %v1451
      %v1458 = vpack.c.b16 %v1453, %v1453
      %vm1463 = vcmask 588800
      %v1465 = vsel %vm1463, %v1412, 0
      %v1468 = vsel %vm1463, %v1413, 0
      %v1471 = vsel %vm1463, %v1414, 0
      %v1474 = vsel %vm1463, %v1415, 0
      %v1477 = vsel %vm1463, %v1416, 0
      %v1480 = vsel %vm1463, %v1417, 0
      %v1483 = vsel %vm1463, %v1418, 0
      %v1486 = vsel %vm1463, %v1419, 0
      %vm1488 = vcmask 1043456
      %v1490 = vsel %vm1488, %v1458, 0
      %1492 = vmatprep.subr.bf16.mxu0 0
      %1493 = vmatpush1.bf16.msra.mxu0 %v1454
      %1494 = vmatprep.subr.bf16.mxu0 0
      %1495 = vmatpush1.bf16.msra.mxu0 %v1455
      %1496 = vmatprep.subr.bf16.mxu0 0
      %1497 = vmatpush1.bf16.msra.mxu0 %v1456
      %1498 = vmatprep.subr.bf16.mxu0 0
      %1499 = vmatpush1.bf16.msra.mxu0 %v1457
      %1500 = vmatprep.subr.bf16.mxu0 0
      %1501 = vmatpush1.bf16.msra.mxu0 %v1490
      %1502 = vmatprep.subr.bf16.mxu0 0
      %1503 = vmatpush1.bf16.msra.mxu0 0
      %1504 = vmatprep.subr.bf16.mxu0 0
      %1505 = vmatpush1.bf16.msra.mxu0 0
      %1506 = vmatprep.subr.bf16.mxu0 0
      %1507 = vmatpush1.bf16.msra.mxu0 0
      %1508 = vmatprep.subr.bf16.mxu0 0
      %1509 = vmatpush1.bf16.msra.mxu0 0
      %1510 = vmatprep.subr.bf16.mxu0 0
      %1511 = vmatpush1.bf16.msra.mxu0 0
      %1512 = vmatprep.subr.bf16.mxu0 0
      %1513 = vmatpush1.bf16.msra.mxu0 0
      %1514 = vmatprep.subr.bf16.mxu0 0
      %1515 = vmatpush1.bf16.msra.mxu0 0
      %1516 = vmatprep.subr.bf16.mxu0 0
      %1517 = vmatpush1.bf16.msra.mxu0 0
      %1518 = vmatprep.subr.bf16.mxu0 0
      %1519 = vmatpush1.bf16.msra.mxu0 0
      %1520 = vmatprep.subr.bf16.mxu0 0
      %1521 = vmatpush1.bf16.msra.mxu0 0
      %1522 = vmatprep.subr.bf16.mxu0 0
      %1523 = vmatpush1.bf16.msra.mxu0 0
      %1524 = vmatprep.mubr.bf16.mxu0 0
      %1525 = vmatmul.mubr.bf16.gmra.mrb[0].mxu0 %v1465
      %v1526 = vpop.f32.mrb[0].mxu0
      %v1527 = vadd.f32 %v1434, %v1526
      %v1528 = vpop.f32.mrb[0].mxu0
      %v1529 = vpop.f32.mrb[0].mxu0
      %v1530 = vadd.f32 %v1434, %v1529
      %v1531 = vpop.f32.mrb[0].mxu0
      %1532 = vmatprep.mubr.bf16.mxu0 0
      %1533 = vmatmul.mubr.bf16.gmra.mrb[0].mxu0 %v1468
      %v1534 = vpop.f32.mrb[0].mxu0
      %v1535 = vadd.f32 %v1434, %v1534
      %v1536 = vpop.f32.mrb[0].mxu0
      %v1537 = vpop.f32.mrb[0].mxu0
      %v1538 = vadd.f32 %v1434, %v1537
      %v1539 = vpop.f32.mrb[0].mxu0
      %1540 = vmatprep.mubr.bf16.mxu0 0
      %1541 = vmatmul.mubr.bf16.gmra.mrb[0].mxu0 %v1471
      %v1542 = vpop.f32.mrb[0].mxu0
      %v1543 = vadd.f32 %v1434, %v1542
      %v1544 = vpop.f32.mrb[0].mxu0
      %v1545 = vpop.f32.mrb[0].mxu0
      %v1546 = vadd.f32 %v1434, %v1545
      %v1547 = vpop.f32.mrb[0].mxu0
      %1548 = vmatprep.mubr.bf16.mxu0 0
      %1549 = vmatmul.mubr.bf16.gmra.mrb[0].mxu0 %v1474
      %v1550 = vpop.f32.mrb[0].mxu0
      %v1551 = vadd.f32 %v1434, %v1550
      %v1552 = vpop.f32.mrb[0].mxu0
      %v1553 = vpop.f32.mrb[0].mxu0
      %v1554 = vadd.f32 %v1434, %v1553
      %v1555 = vpop.f32.mrb[0].mxu0
      %1556 = vmatprep.mubr.bf16.mxu0 0
      %1557 = vmatmul.mubr.bf16.gmra.mrb[0].mxu0 %v1477
      %v1558 = vpop.f32.mrb[0].mxu0
      %v1559 = vadd.f32 %v1434, %v1558
      %v1560 = vpop.f32.mrb[0].mxu0
      %v1561 = vpop.f32.mrb[0].mxu0
      %v1562 = vadd.f32 %v1434, %v1561
      %v1563 = vpop.f32.mrb[0].mxu0
      %1564 = vmatprep.mubr.bf16.mxu0 0
      %1565 = vmatmul.mubr.bf16.gmra.mrb[0].mxu0 %v1480
      %v1566 = vpop.f32.mrb[0].mxu0
      %v1567 = vadd.f32 %v1434, %v1566
      %v1568 = vpop.f32.mrb[0].mxu0
      %v1569 = vpop.f32.mrb[0].mxu0
      %v1570 = vadd.f32 %v1434, %v1569
      %v1571 = vpop.f32.mrb[0].mxu0
      %1572 = vmatprep.mubr.bf16.mxu0 0
      %1573 = vmatmul.mubr.bf16.gmra.mrb[0].mxu0 %v1483
      %v1574 = vpop.f32.mrb[0].mxu0
      %v1575 = vadd.f32 %v1434, %v1574
      %v1576 = vpop.f32.mrb[0].mxu0
      %v1577 = vpop.f32.mrb[0].mxu0
      %v1578 = vadd.f32 %v1434, %v1577
      %v1579 = vpop.f32.mrb[0].mxu0
      %1580 = vmatprep.mubr.bf16.mxu0 0
      %1581 = vmatmul.mubr.bf16.gmra.mrb[0].mxu0 %v1486
      %v1582 = vpop.f32.mrb[0].mxu0
      %v1583 = vadd.f32 %v1434, %v1582
      %v1584 = vpop.f32.mrb[0].mxu0
      %v1585 = vpop.f32.mrb[0].mxu0
      %v1586 = vadd.f32 %v1434, %v1585
      %v1587 = vpop.f32.mrb[0].mxu0
      %1588 = vdwg.mxu0
      %v1589 = vld [vmem:[%s317] sm:$0x1]
      %v1590 = vsel %vm625, %v1527, 0.0
      %v1591 = vsel %vm625, %v1530, 0.0
      %v1592 = vadd.f32 %v1590, %v1591
      %v1593 = vsel %vm625, %v1535, 0.0
      %v1594 = vadd.f32 %v1592, %v1593
      %v1595 = vsel %vm625, %v1538, 0.0
      %v1596 = vadd.f32 %v1594, %v1595
      %v1597 = vsel %vm625, %v1543, 0.0
      %v1598 = vadd.f32 %v1596, %v1597
      %v1599 = vsel %vm625, %v1546, 0.0
      %v1600 = vadd.f32 %v1598, %v1599
      %v1601 = vsel %vm625, %v1551, 0.0
      %v1602 = vadd.f32 %v1600, %v1601
      %v1603 = vsel %vm625, %v1554, 0.0
      %v1604 = vadd.f32 %v1602, %v1603
      %v1605 = vsel %vm625, %v1559, 0.0
      %v1606 = vadd.f32 %v1604, %v1605
      %v1607 = vsel %vm625, %v1562, 0.0
      %v1608 = vadd.f32 %v1606, %v1607
      %v1609 = vsel %vm625, %v1567, 0.0
      %v1610 = vadd.f32 %v1608, %v1609
      %v1611 = vsel %vm625, %v1570, 0.0
      %v1612 = vadd.f32 %v1610, %v1611
      %v1613 = vsel %vm625, %v1575, 0.0
      %v1614 = vadd.f32 %v1612, %v1613
      %v1615 = vsel %vm625, %v1578, 0.0
      %v1616 = vadd.f32 %v1614, %v1615
      %v1617 = vsel %vm625, %v1583, 0.0
      %v1618 = vadd.f32 %v1616, %v1617
      %v1619 = vsel %vm625, %v1586, 0.0
      %v1620 = vadd.f32 %v1618, %v1619
      %v1621 = vrot.slane %v1620, 4
      %v1622 = vadd.f32 %v1620, %v1621
      %v1623 = vrot.slane %v1622, 2
      %v1624 = vadd.f32 %v1622, %v1623
      %v1625 = vrot.slane %v1624, 1
      %v1626 = vadd.f32 %v1624, %v1625
      %v1627 = vadd.f32 %v1589, %v1626
      %vm1628 = vcmask 57344
      %1629 = vst.msk [vmem:[%s317] sm:$0x1] %vm1628, %v1627
      %v1630 = vld [vmem:[%s320] sm:$0x1]
      %v1631 = vmul.f32 %v1527, %v1527
      %v1632 = vmul.f32 %v1530, %v1530
      %v1633 = vmul.f32 %v1535, %v1535
      %v1634 = vmul.f32 %v1538, %v1538
      %v1635 = vmul.f32 %v1543, %v1543
      %v1636 = vmul.f32 %v1546, %v1546
      %v1637 = vmul.f32 %v1551, %v1551
      %v1638 = vmul.f32 %v1554, %v1554
      %v1639 = vmul.f32 %v1559, %v1559
      %v1640 = vmul.f32 %v1562, %v1562
      %v1641 = vmul.f32 %v1567, %v1567
      %v1642 = vmul.f32 %v1570, %v1570
      %v1643 = vmul.f32 %v1575, %v1575
      %v1644 = vmul.f32 %v1578, %v1578
      %v1645 = vmul.f32 %v1583, %v1583
      %v1646 = vmul.f32 %v1586, %v1586
      %v1647 = vsel %vm625, %v1631, 0.0
      %v1648 = vsel %vm625, %v1632, 0.0
      %v1649 = vadd.f32 %v1647, %v1648
      %v1650 = vsel %vm625, %v1633, 0.0
      %v1651 = vadd.f32 %v1649, %v1650
      %v1652 = vsel %vm625, %v1634, 0.0
      %v1653 = vadd.f32 %v1651, %v1652
      %v1654 = vsel %vm625, %v1635, 0.0
      %v1655 = vadd.f32 %v1653, %v1654
      %v1656 = vsel %vm625, %v1636, 0.0
      %v1657 = vadd.f32 %v1655, %v1656
      %v1658 = vsel %vm625, %v1637, 0.0
      %v1659 = vadd.f32 %v1657, %v1658
      %v1660 = vsel %vm625, %v1638, 0.0
      %v1661 = vadd.f32 %v1659, %v1660
      %v1662 = vsel %vm625, %v1639, 0.0
      %v1663 = vadd.f32 %v1661, %v1662
      %v1664 = vsel %vm625, %v1640, 0.0
      %v1665 = vadd.f32 %v1663, %v1664
      %v1666 = vsel %vm625, %v1641, 0.0
      %v1667 = vadd.f32 %v1665, %v1666
      %v1668 = vsel %vm625, %v1642, 0.0
      %v1669 = vadd.f32 %v1667, %v1668
      %v1670 = vsel %vm625, %v1643, 0.0
      %v1671 = vadd.f32 %v1669, %v1670
      %v1672 = vsel %vm625, %v1644, 0.0
      %v1673 = vadd.f32 %v1671, %v1672
      %v1674 = vsel %vm625, %v1645, 0.0
      %v1675 = vadd.f32 %v1673, %v1674
      %v1676 = vsel %vm625, %v1646, 0.0
      %v1677 = vadd.f32 %v1675, %v1676
      %v1678 = vrot.slane %v1677, 4
      %v1679 = vadd.f32 %v1677, %v1678
      %v1680 = vrot.slane %v1679, 2
      %v1681 = vadd.f32 %v1679, %v1680
      %v1682 = vrot.slane %v1681, 1
      %v1683 = vadd.f32 %v1681, %v1682
      %v1684 = vadd.f32 %v1630, %v1683
      %1685 = vst.msk [vmem:[%s320] sm:$0x1] %vm1628, %v1684
      %v1686 = vpack.c.bf16 %v1530, %v1527
      %v1687 = vpack.c.bf16 %v1538, %v1535
      %v1688 = vpack.c.bf16 %v1546, %v1543
      %v1689 = vpack.c.bf16 %v1554, %v1551
      %v1690 = vpack.c.bf16 %v1562, %v1559
      %v1691 = vpack.c.bf16 %v1570, %v1567
      %v1692 = vpack.c.bf16 %v1578, %v1575
      %v1693 = vpack.c.bf16 %v1586, %v1583
      %v1702 = vunpack.c.l.b16 %v1686
      %v1703 = vunpack.c.h.b16 %v1686
      %v1704 = vunpack.c.l.b16 %v1687
      %v1705 = vunpack.c.h.b16 %v1687
      %v1706 = vunpack.c.l.b16 %v1688
      %v1707 = vunpack.c.h.b16 %v1688
      %v1708 = vunpack.c.l.b16 %v1689
      %v1709 = vunpack.c.h.b16 %v1689
      %v1710 = vunpack.c.l.b16 %v1690
      %v1711 = vunpack.c.h.b16 %v1690
      %v1712 = vunpack.c.l.b16 %v1691
      %v1713 = vunpack.c.h.b16 %v1691
      %v1714 = vunpack.c.l.b16 %v1692
      %v1715 = vunpack.c.h.b16 %v1692
      %v1716 = vunpack.c.l.b16 %v1693
      %v1717 = vunpack.c.h.b16 %v1693
      %v1718 = vpack.c.b16 %v1702, %v1702
      %v1719 = vpack.c.b16 %v1703, %v1703
      %v1720 = vpack.c.b16 %v1704, %v1704
      %v1721 = vpack.c.b16 %v1705, %v1705
      %v1722 = vpack.c.b16 %v1706, %v1706
      %v1723 = vpack.c.b16 %v1707, %v1707
      %v1724 = vpack.c.b16 %v1708, %v1708
      %v1725 = vpack.c.b16 %v1709, %v1709
      %v1726 = vpack.c.b16 %v1710, %v1710
      %v1727 = vpack.c.b16 %v1711, %v1711
      %v1728 = vpack.c.b16 %v1712, %v1712
      %v1729 = vpack.c.b16 %v1713, %v1713
      %v1730 = vpack.c.b16 %v1714, %v1714
      %v1731 = vpack.c.b16 %v1715, %v1715
      %v1732 = vpack.c.b16 %v1716, %v1716
      %v1733 = vpack.c.b16 %v1717, %v1717
      %vm1750 = vcmask 60416
      %1751 = vst.msk [vmem:[%s313] sm:$0xf] %vm1750, %v1718
      %1752 = vst.msk [vmem:[%s313 + $0x4] sm:$0xf] %vm1750, %v1719
      %1753 = vst.msk [vmem:[%s313 + $0x8] sm:$0xf] %vm1750, %v1720
      %1754 = vst.msk [vmem:[%s313 + $0xc] sm:$0xf] %vm1750, %v1721
      %1755 = vst.msk [vmem:[%s313 + $0x10] sm:$0xf] %vm1750, %v1722
      %1756 = vst.msk [vmem:[%s313 + $0x14] sm:$0xf] %vm1750, %v1723
      %1757 = vst.msk [vmem:[%s313 + $0x18] sm:$0xf] %vm1750, %v1724
      %1758 = vst.msk [vmem:[%s313 + $0x1c] sm:$0xf] %vm1750, %v1725
      %1759 = vst.msk [vmem:[%s313 + $0x20] sm:$0xf] %vm1750, %v1726
      %1760 = vst.msk [vmem:[%s313 + $0x24] sm:$0xf] %vm1750, %v1727
      %1761 = vst.msk [vmem:[%s313 + $0x28] sm:$0xf] %vm1750, %v1728
      %1762 = vst.msk [vmem:[%s313 + $0x2c] sm:$0xf] %vm1750, %v1729
      %1763 = vst.msk [vmem:[%s313 + $0x30] sm:$0xf] %vm1750, %v1730
      %1764 = vst.msk [vmem:[%s313 + $0x34] sm:$0xf] %vm1750, %v1731
      %1765 = vst.msk [vmem:[%s313 + $0x38] sm:$0xf] %vm1750, %v1732
      %1766 = vst.msk [vmem:[%s313 + $0x3c] sm:$0xf] %vm1750, %v1733
      %s1767 = smul.u32 8, %s24
      %p1768 = scmp.lt.s32.totalorder %s23, 1
      %s1769 = scalar_select %p1768, %s23, 1
      %p1770 = scmp.lt.s32.totalorder %s1767, 15
      %s1771 = scalar_select %p1770, %s1767, 15
      %s1772 = smul.addr %s1771, 2
      %s1773 = smul.addr %s1769, 32
      %s1774 = sadd.s32 %s1772, %s1773
      %s1775 = smul.addr %s1774, 4
      %s1776 = scalar_lea.vmem %s5, %s1775
      %p1777 = scmp.lt.s32.totalorder %s23, 1
      %s1778 = scalar_select %p1777, %s23, 1
      %s1779 = scalar_lea.vmem %s6, %s1778
      %p1780 = scmp.lt.s32.totalorder %s23, 1
      %s1781 = scalar_select %p1780, %s23, 1
      %s1782 = scalar_lea.vmem %s7, %s1781
      // Predicated region
      $region45: #{double_conv_forward.4} parent=39 // pred_check
        %p1783 = pneg %p161
      $region46: #{double_conv_forward.4} parent=39 // pred_check_branch
        %1785 = sbr.rel (%p1783) target = $region48
      $region47: #{double_conv_forward.4} parent=39 // pred_region
        %s1786 = smul.u32 8, %s24
      $region48: #{double_conv_forward.4} parent=39 // pred_fallthru
        _
      // Predicated region
      $region49: #{double_conv_forward.4} parent=39 // pred_check
        %p1787 = pneg %p187
      $region50: #{double_conv_forward.4} parent=39 // pred_check_branch
        %1789 = sbr.rel (%p1787) target = $region52
      $region51: #{double_conv_forward.4} parent=39 // pred_region
        _
      $region52: #{double_conv_forward.4} parent=39 // pred_fallthru
        _
      // Predicated region
      $region53: #{double_conv_forward.4} parent=39 // pred_check
        %p1790 = pneg %p213
      $region54: #{double_conv_forward.4} parent=39 // pred_check_branch
        %1792 = sbr.rel (%p1790) target = $region56
      $region55: #{double_conv_forward.4} parent=39 // pred_region
        _
      $region56: #{double_conv_forward.4} parent=39 // pred_fallthru
        _
    $region40: #{double_conv_forward.4} parent=5 // pred_fallthru
      _
    %p1793 = scmp.le.s32.totalorder 2, %s14
    // Predicated region
    $region57: #{double_conv_forward.4} parent=5 // pred_check
      %p1794 = pneg %p1793
    $region58: #{double_conv_forward.4} parent=5 // pred_check_branch
      %1796 = sbr.rel (%p1794) target = $region60
    $region59: #{double_conv_forward.4} parent=5 // pred_region
      %s1797 = ssub.s32 %s14, 2
      // Predicated region
      $region61: #{double_conv_forward.4} parent=59 // pred_check
        %p1798 = pneg %p167
      $region62: #{double_conv_forward.4} parent=59 // pred_check_branch
        %1800 = sbr.rel (%p1798) target = $region64
      $region63: #{double_conv_forward.4} parent=59 // pred_region
        %s1801 = smul.u32 8, %s26
        %p1802 = scmp.lt.s32.totalorder %s25, 1
        %s1803 = scalar_select %p1802, %s25, 1
        %p1804 = scmp.lt.s32.totalorder %s1801, 15
        %s1805 = scalar_select %p1804, %s1801, 15
        %s1806 = smul.addr %s1805, 2
        %s1807 = smul.addr %s1803, 32
        %s1808 = sadd.s32 %s1806, %s1807
        %s1809 = smul.addr %s1808, 4
        %s1810 = scalar_lea.vmem %s5, %s1809
      $region64: #{double_conv_forward.4} parent=59 // pred_fallthru
        _
      // Predicated region
      $region65: #{double_conv_forward.4} parent=59 // pred_check
        %p1811 = pneg %p193
      $region66: #{double_conv_forward.4} parent=59 // pred_check_branch
        %1813 = sbr.rel (%p1811) target = $region68
      $region67: #{double_conv_forward.4} parent=59 // pred_region
        %p1814 = scmp.lt.s32.totalorder %s25, 1
        %s1815 = scalar_select %p1814, %s25, 1
        %s1816 = scalar_lea.vmem %s6, %s1815
      $region68: #{double_conv_forward.4} parent=59 // pred_fallthru
        _
      // Predicated region
      $region69: #{double_conv_forward.4} parent=59 // pred_check
        %p1817 = pneg %p219
      $region70: #{double_conv_forward.4} parent=59 // pred_check_branch
        %1819 = sbr.rel (%p1817) target = $region72
      $region71: #{double_conv_forward.4} parent=59 // pred_region
        %p1820 = scmp.lt.s32.totalorder %s25, 1
        %s1821 = scalar_select %p1820, %s25, 1
        %s1822 = scalar_lea.vmem %s7, %s1821
      $region72: #{double_conv_forward.4} parent=59 // pred_fallthru
        _
    $region60: #{double_conv_forward.4} parent=5 // pred_fallthru
      _
  $region6: #{double_conv_forward.4} parent=0 // loop_footer
    %s18 = sadd.s32 1, %s14
  $region7: #{double_conv_forward.4} parent=0 // loop_footer_branch
    %13 = sbr.rel target = $region3
  $region8: #{double_conv_forward.4} parent=0 // loop_exit
    _

// kernel: double_conv_forward.3
$region0: #{double_conv_forward.3}
  #allocation0 [shape = 'u32[]', space=smem, size = 0x4, offset = 0x4, fixed_abs, tag = 'smem constant byte address 0x4 - core index']
  #allocation1 [shape = 'u32[144,128]{1,0:T(1,128)}', space=vmem, size = 0x12000, scoped, tag = 'internal scratch']
  #allocation2 [shape = 'f32[18,18,4]{2,1,0:T(8,128)}', space=vmem, size = 0x36000, scoped, tag = 'scratch operand']
  #allocation3 [shape = 'f32[8,16,36]{2,1,0:T(8,128)}', space=vmem, size = 0x10000, scoped, tag = 'scratch operand']
  %s0 = inlined_call_operand.vmem [shape: bf16[2,16,16,4], index: 0, kind: input, shape index: {}]
  %s1 = inlined_call_operand.vmem [shape: bf16[36,8], index: 1, kind: input, shape index: {}]
  %s2 = inlined_call_operand.vmem [shape: f32[1,8], index: 2, kind: input, shape index: {}]
  %s3 = inlined_call_operand.vmem [shape: bf16[2,16,16,8], index: 3, kind: output, shape index: {0}]
  %s4 = inlined_call_operand.vmem [shape: f32[2,1,8], index: 4, kind: output, shape index: {1}]
  %s5 = inlined_call_operand.vmem [shape: f32[2,1,8], index: 5, kind: output, shape index: {2}]
  %6 = xla_tuple %s3, %s4, %s5
  %s7 = sld [smem:[#allocation0]]
  $region65: #{double_conv_forward.3} parent=0
    _
  %s9 = ssub.s32 1, %s7
  %s10 = scalar_select 0, %s9, %s7
  loop: start=0, step=1, limit=6
  $region2: #{double_conv_forward.3} parent=0 // loop_pre_header
    _
  $region3: #{double_conv_forward.3} parent=0 // loop_header
    %s12 = sphi 0, %s16
    %p13 = scmp.ge.s32.totalorder %s12, 6
    %s19 = sphi 0, %s31
    %s20 = sphi 0, %s27
    %s21 = sphi 0, %s19
    %s22 = sphi 0, %s20
    %s23 = sphi 0, %s21
    %s24 = sphi 0, %s22
    %s34 = sphi 0, %s36
    %s37 = sphi 0, %s34
    %s38 = sphi 0, %s37
    %s54 = sphi 0, %s38
    %s58 = sphi 0, %s58
    %s60 = sphi 0, %s58
    %s61 = sphi 0, %s60
    %s75 = sphi 0, %s61
    %s79 = sphi 0, %s79
    %s81 = sphi 0, %s79
    %s82 = sphi 0, %s81
    %s96 = sphi 0, %s82
    %s104 = sphi 0, %s106
    %s107 = sphi 0, %s104
    %s108 = sphi 0, %s107
    %s124 = sphi 0, %s108
    %s130 = sphi 0, %s132
    %s133 = sphi 0, %s130
    %s134 = sphi 0, %s133
    %s150 = sphi 0, %s134
    %s156 = sphi 0, %s158
    %s159 = sphi 0, %s156
    %s160 = sphi 0, %s159
    %s176 = sphi 0, %s160
  $region4: #{double_conv_forward.3} parent=0 // loop_header_branch
    %15 = sbr.rel (%p13) target = $region8
  $region5: #{double_conv_forward.3} parent=0 // loop_body
    %s17 = ssub.s32 %s12, 1
    %s18 = ssub.s32 %s12, 2
    %s25 = sadd.s32 1, %s20
    %p26 = scmp.ge.s32.totalorder %s25, 2
    %s27 = scalar_select %p26, 0, %s25
    %s28 = sadd.s32 1, %s19
    %s29 = scalar_select %p26, %s28, %s19
    %p30 = scmp.ge.s32.totalorder %s29, 2
    %s31 = scalar_select %p30, 0, %s29
    %s32 = ssub.s32 %s19, %s31
    %p33 = scmp.eq.s32.totalorder %s32, 0
    %s35 = sadd.s32 %s34, 1
    %s36 = scalar_select %p33, %s34, %s35
    %p39 = pneg %p33
    %p40 = scmp.eq.s32.totalorder %s12, 3
    %p41 = por %p39, %p40
    %p42 = scmp.ne.s32.totalorder %s34, %s37
    %p43 = scmp.eq.s32.totalorder %s12, 0
    %p44 = por %p42, %p43
    %p45 = scmp.ne.s32.totalorder %s34, %s37
    %p46 = scmp.eq.s32.totalorder %s17, 3
    %p47 = por %p45, %p46
    %p48 = scmp.ne.s32.totalorder %s37, %s38
    %p49 = scmp.eq.s32.totalorder %s17, 0
    %p50 = por %p48, %p49
    %p51 = scmp.ne.s32.totalorder %s37, %s38
    %p52 = scmp.eq.s32.totalorder %s18, 3
    %p53 = por %p51, %p52
    %p55 = scmp.ne.s32.totalorder %s38, %s54
    %p56 = scmp.eq.s32.totalorder %s18, 0
    %p57 = por %p55, %p56
    %s59 = sadd.s32 %s58, 1
    %p62 = scmp.eq.s32.totalorder %s12, 3
    %p63 = scmp.ne.s32.totalorder %s58, %s60
    %p64 = scmp.eq.s32.totalorder %s12, 0
    %p65 = por %p63, %p64
    %p66 = scmp.ne.s32.totalorder %s58, %s60
    %p67 = scmp.eq.s32.totalorder %s17, 3
    %p68 = por %p66, %p67
    %p69 = scmp.ne.s32.totalorder %s60, %s61
    %p70 = scmp.eq.s32.totalorder %s17, 0
    %p71 = por %p69, %p70
    %p72 = scmp.ne.s32.totalorder %s60, %s61
    %p73 = scmp.eq.s32.totalorder %s18, 3
    %p74 = por %p72, %p73
    %p76 = scmp.ne.s32.totalorder %s61, %s75
    %p77 = scmp.eq.s32.totalorder %s18, 0
    %p78 = por %p76, %p77
    %s80 = sadd.s32 %s79, 1
    %p83 = scmp.eq.s32.totalorder %s12, 3
    %p84 = scmp.ne.s32.totalorder %s79, %s81
    %p85 = scmp.eq.s32.totalorder %s12, 0
    %p86 = por %p84, %p85
    %p87 = scmp.ne.s32.totalorder %s79, %s81
    %p88 = scmp.eq.s32.totalorder %s17, 3
    %p89 = por %p87, %p88
    %p90 = scmp.ne.s32.totalorder %s81, %s82
    %p91 = scmp.eq.s32.totalorder %s17, 0
    %p92 = por %p90, %p91
    %p93 = scmp.ne.s32.totalorder %s81, %s82
    %p94 = scmp.eq.s32.totalorder %s18, 3
    %p95 = por %p93, %p94
    %p97 = scmp.ne.s32.totalorder %s82, %s96
    %p98 = scmp.eq.s32.totalorder %s18, 0
    %p99 = por %p97, %p98
    %s100 = ssub.s32 %s19, %s31
    %s101 = ssub.s32 %s20, %s27
    %s102 = sor.u32 %s100, %s101
    %p103 = scmp.eq.s32.totalorder %s102, 0
    %s105 = sadd.s32 %s104, 1
    %s106 = scalar_select %p103, %s104, %s105
    %p109 = pneg %p103
    %p110 = scmp.eq.s32.totalorder %s12, 3
    %p111 = por %p109, %p110
    %p112 = scmp.ne.s32.totalorder %s104, %s107
    %p113 = scmp.eq.s32.totalorder %s12, 0
    %p114 = por %p112, %p113
    %p115 = scmp.ne.s32.totalorder %s104, %s107
    %p116 = scmp.eq.s32.totalorder %s17, 3
    %p117 = por %p115, %p116
    %p118 = scmp.ne.s32.totalorder %s107, %s108
    %p119 = scmp.eq.s32.totalorder %s17, 0
    %p120 = por %p118, %p119
    %p121 = scmp.ne.s32.totalorder %s107, %s108
    %p122 = scmp.eq.s32.totalorder %s18, 3
    %p123 = por %p121, %p122
    %p125 = scmp.ne.s32.totalorder %s108, %s124
    %p126 = scmp.eq.s32.totalorder %s18, 0
    %p127 = por %p125, %p126
    %s128 = ssub.s32 %s19, %s31
    %p129 = scmp.eq.s32.totalorder %s128, 0
    %s131 = sadd.s32 %s130, 1
    %s132 = scalar_select %p129, %s130, %s131
    %p135 = pneg %p129
    %p136 = scmp.eq.s32.totalorder %s12, 3
    %p137 = por %p135, %p136
    %p138 = scmp.ne.s32.totalorder %s130, %s133
    %p139 = scmp.eq.s32.totalorder %s12, 0
    %p140 = por %p138, %p139
    %p141 = scmp.ne.s32.totalorder %s130, %s133
    %p142 = scmp.eq.s32.totalorder %s17, 3
    %p143 = por %p141, %p142
    %p144 = scmp.ne.s32.totalorder %s133, %s134
    %p145 = scmp.eq.s32.totalorder %s17, 0
    %p146 = por %p144, %p145
    %p147 = scmp.ne.s32.totalorder %s133, %s134
    %p148 = scmp.eq.s32.totalorder %s18, 3
    %p149 = por %p147, %p148
    %p151 = scmp.ne.s32.totalorder %s134, %s150
    %p152 = scmp.eq.s32.totalorder %s18, 0
    %p153 = por %p151, %p152
    %s154 = ssub.s32 %s19, %s31
    %p155 = scmp.eq.s32.totalorder %s154, 0
    %s157 = sadd.s32 %s156, 1
    %s158 = scalar_select %p155, %s156, %s157
    %p161 = pneg %p155
    %p162 = scmp.eq.s32.totalorder %s12, 3
    %p163 = por %p161, %p162
    %p164 = scmp.ne.s32.totalorder %s156, %s159
    %p165 = scmp.eq.s32.totalorder %s12, 0
    %p166 = por %p164, %p165
    %p167 = scmp.ne.s32.totalorder %s156, %s159
    %p168 = scmp.eq.s32.totalorder %s17, 3
    %p169 = por %p167, %p168
    %p170 = scmp.ne.s32.totalorder %s159, %s160
    %p171 = scmp.eq.s32.totalorder %s17, 0
    %p172 = por %p170, %p171
    %p173 = scmp.ne.s32.totalorder %s159, %s160
    %p174 = scmp.eq.s32.totalorder %s18, 3
    %p175 = por %p173, %p174
    %p177 = scmp.ne.s32.totalorder %s160, %s176
    %p178 = scmp.eq.s32.totalorder %s18, 0
    %p179 = por %p177, %p178
    %p180 = scmp.le.s32.totalorder 1, %s12
    %p181 = scmp.lt.s32.totalorder %s12, 5
    %p182 = pnand %p180, %p181
    %p183 = pneg %p182
    // Predicated region
    $region9: #{double_conv_forward.3} parent=5 // pred_check
      _
    $region10: #{double_conv_forward.3} parent=5 // pred_check_branch
      %185 = sbr.rel (%p182) target = $region12
    $region11: #{double_conv_forward.3} parent=5 // pred_region
      %s186 = ssub.s32 %s12, 1
      // Predicated region
      $region13: #{double_conv_forward.3} parent=11 // pred_check
        %p187 = pneg %p71
      $region14: #{double_conv_forward.3} parent=11 // pred_check_branch
        %189 = sbr.rel (%p187) target = $region16
      $region15: #{double_conv_forward.3} parent=11 // pred_region
        _
      $region16: #{double_conv_forward.3} parent=11 // pred_fallthru
        _
      // Predicated region
      $region17: #{double_conv_forward.3} parent=11 // pred_check
        %p190 = pneg %p92
      $region18: #{double_conv_forward.3} parent=11 // pred_check_branch
        %192 = sbr.rel (%p190) target = $region20
      $region19: #{double_conv_forward.3} parent=11 // pred_region
        _
      $region20: #{double_conv_forward.3} parent=11 // pred_fallthru
        _
    $region12: #{double_conv_forward.3} parent=5 // pred_fallthru
      _
    %p193 = scmp.lt.s32.totalorder %s12, 4
    // Predicated region
    $region21: #{double_conv_forward.3} parent=5 // pred_check
      %p194 = pneg %p193
    $region22: #{double_conv_forward.3} parent=5 // pred_check_branch
      %196 = sbr.rel (%p194) target = $region24
    $region23: #{double_conv_forward.3} parent=5 // pred_region
      // Predicated region
      $region25: #{double_conv_forward.3} parent=23 // pred_check
        %p197 = pneg %p44
      $region26: #{double_conv_forward.3} parent=23 // pred_check_branch
        %199 = sbr.rel (%p197) target = $region28
      $region27: #{double_conv_forward.3} parent=23 // pred_region
        %p200 = scmp.lt.s32.totalorder %s19, 1
        %s201 = scalar_select %p200, %s19, 1
        %s202 = smul.addr %s201, 32
        %s203 = smul.addr %s202, 4
        %s204 = scalar_lea.vmem %s0, %s203
      $region28: #{double_conv_forward.3} parent=23 // pred_fallthru
        _
    $region24: #{double_conv_forward.3} parent=5 // pred_fallthru
      _
    %p205 = scmp.le.s32.totalorder 1, %s12
    %p206 = scmp.lt.s32.totalorder %s12, 5
    %p207 = pnand %p205, %p206
    %p208 = pneg %p207
    // Predicated region
    $region29: #{double_conv_forward.3} parent=5 // pred_check
      _
    $region30: #{double_conv_forward.3} parent=5 // pred_check_branch
      %210 = sbr.rel (%p207) target = $region32
    $region31: #{double_conv_forward.3} parent=5 // pred_region
      %s211 = ssub.s32 %s12, 1
      %p212 = scmp.lt.s32.totalorder %s21, 1
      %s213 = scalar_select %p212, %s21, 1
      %s214 = smul.addr %s213, 32
      %s215 = smul.addr %s214, 4
      %s216 = scalar_lea.vmem %s0, %s215
      %p217 = pneg %p50
      %p218 = pneg %p47
      %p219 = pneg %p71
      %p220 = pneg %p68
      %p221 = pneg %p92
      %p222 = pneg %p89
      %p223 = pneg %p120
      %p224 = pneg %p117
      %s225 = smul.u32 8, %s22
      %p226 = scmp.lt.s32.totalorder %s21, 1
      %s227 = scalar_select %p226, %s21, 1
      %p228 = scmp.lt.s32.totalorder %s225, 15
      %s229 = scalar_select %p228, %s225, 15
      %s230 = smul.addr %s229, 2
      %s231 = smul.addr %s227, 32
      %s232 = sadd.s32 %s230, %s231
      %s233 = smul.addr %s232, 4
      %s234 = scalar_lea.vmem %s3, %s233
      %p235 = pneg %p146
      %p236 = pneg %p143
      %p237 = scmp.lt.s32.totalorder %s21, 1
      %s238 = scalar_select %p237, %s21, 1
      %s239 = scalar_lea.vmem %s4, %s238
      %p240 = pneg %p172
      %p241 = pneg %p169
      %p242 = scmp.lt.s32.totalorder %s21, 1
      %s243 = scalar_select %p242, %s21, 1
      %s244 = scalar_lea.vmem %s5, %s243
      %p245 = scmp.lt.s32.totalorder %s21, 1
      %s246 = scalar_select %p245, %s21, 1
      %s247 = smul.addr %s246, 32
      %s248 = smul.addr %s247, 4
      %s249 = scalar_lea.vmem %s0, %s248
      %s250 = smul.u32 8, %s22
      %p251 = scmp.lt.s32.totalorder %s21, 1
      %s252 = scalar_select %p251, %s21, 1
      %p253 = scmp.lt.s32.totalorder %s250, 15
      %s254 = scalar_select %p253, %s250, 15
      %s255 = smul.addr %s254, 2
      %s256 = smul.addr %s252, 32
      %s257 = sadd.s32 %s255, %s256
      %s258 = smul.addr %s257, 4
      %s259 = scalar_lea.vmem %s3, %s258
      %s260 = smul.u32 8, %s22
      %p261 = scmp.lt.s32.totalorder %s21, 1
      %s262 = scalar_select %p261, %s21, 1
      %s263 = scalar_lea.vmem %s4, %s262
      %p264 = scmp.lt.s32.totalorder %s21, 1
      %s265 = scalar_select %p264, %s21, 1
      %s266 = scalar_lea.vmem %s5, %s265
      %p268 = scmp.eq.s32.totalorder %s22, 0
      // Predicated region
      $region33: #{double_conv_forward.3} parent=31 // pred_check
        %p269 = pneg %p268
      $region34: #{double_conv_forward.3} parent=31 // pred_check_branch
        %271 = sbr.rel (%p269) target = $region36
      $region35: #{double_conv_forward.3} parent=31 // pred_region
        %v272 = vld [vmem:[%s249] sm:$0xf]
        %v273 = vld [vmem:[%s249 + $0x4] sm:$0xf]
        %v274 = vld [vmem:[%s249 + $0x8] sm:$0xf]
        %v275 = vld [vmem:[%s249 + $0xc] sm:$0xf]
        %v276 = vld [vmem:[%s249 + $0x10] sm:$0xf]
        %v277 = vld [vmem:[%s249 + $0x14] sm:$0xf]
        %v278 = vld [vmem:[%s249 + $0x18] sm:$0xf]
        %v279 = vld [vmem:[%s249 + $0x1c] sm:$0xf]
        %v280 = vld [vmem:[%s249 + $0x20] sm:$0xf]
        %v281 = vld [vmem:[%s249 + $0x24] sm:$0xf]
        %v282 = vld [vmem:[%s249 + $0x28] sm:$0xf]
        %v283 = vld [vmem:[%s249 + $0x2c] sm:$0xf]
        %v284 = vld [vmem:[%s249 + $0x30] sm:$0xf]
        %v285 = vld [vmem:[%s249 + $0x34] sm:$0xf]
        %v286 = vld [vmem:[%s249 + $0x38] sm:$0xf]
        %v287 = vld [vmem:[%s249 + $0x3c] sm:$0xf]
        %v288 = vld [vmem:[%s249 + $0x40] sm:$0xf]
        %v289 = vld [vmem:[%s249 + $0x44] sm:$0xf]
        %v290 = vld [vmem:[%s249 + $0x48] sm:$0xf]
        %v291 = vld [vmem:[%s249 + $0x4c] sm:$0xf]
        %v292 = vld [vmem:[%s249 + $0x50] sm:$0xf]
        %v293 = vld [vmem:[%s249 + $0x54] sm:$0xf]
        %v294 = vld [vmem:[%s249 + $0x58] sm:$0xf]
        %v295 = vld [vmem:[%s249 + $0x5c] sm:$0xf]
        %v296 = vld [vmem:[%s249 + $0x60] sm:$0xf]
        %v297 = vld [vmem:[%s249 + $0x64] sm:$0xf]
        %v298 = vld [vmem:[%s249 + $0x68] sm:$0xf]
        %v299 = vld [vmem:[%s249 + $0x6c] sm:$0xf]
        %v300 = vld [vmem:[%s249 + $0x70] sm:$0xf]
        %v301 = vld [vmem:[%s249 + $0x74] sm:$0xf]
        %v302 = vld [vmem:[%s249 + $0x78] sm:$0xf]
        %v303 = vld [vmem:[%s249 + $0x7c] sm:$0xf]
        %v304 = vunpack.c.l.bf16 %v272
        %v305 = vunpack.c.l.bf16 %v273
        %v306 = vunpack.c.l.bf16 %v274
        %v307 = vunpack.c.l.bf16 %v275
        %v308 = vunpack.c.l.bf16 %v276
        %v309 = vunpack.c.l.bf16 %v277
        %v310 = vunpack.c.l.bf16 %v278
        %v311 = vunpack.c.l.bf16 %v279
        %v312 = vunpack.c.l.bf16 %v280
        %v313 = vunpack.c.l.bf16 %v281
        %v314 = vunpack.c.l.bf16 %v282
        %v315 = vunpack.c.l.bf16 %v283
        %v316 = vunpack.c.l.bf16 %v284
        %v317 = vunpack.c.l.bf16 %v285
        %v318 = vunpack.c.l.bf16 %v286
        %v319 = vunpack.c.l.bf16 %v287
        %v320 = vunpack.c.l.bf16 %v288
        %v321 = vunpack.c.l.bf16 %v289
        %v322 = vunpack.c.l.bf16 %v290
        %v323 = vunpack.c.l.bf16 %v291
        %v324 = vunpack.c.l.bf16 %v292
        %v325 = vunpack.c.l.bf16 %v293
        %v326 = vunpack.c.l.bf16 %v294
        %v327 = vunpack.c.l.bf16 %v295
        %v328 = vunpack.c.l.bf16 %v296
        %v329 = vunpack.c.l.bf16 %v297
        %v330 = vunpack.c.l.bf16 %v298
        %v331 = vunpack.c.l.bf16 %v299
        %v332 = vunpack.c.l.bf16 %v300
        %v333 = vunpack.c.l.bf16 %v301
        %v334 = vunpack.c.l.bf16 %v302
        %v335 = vunpack.c.l.bf16 %v303
        %vm336 = vcmask 31744
        %337 = vst.msk [vmem:[#allocation2] sm:$0xff] %vm336, 0.0
        %338 = vst.msk [vmem:[#allocation2 + $0x8] sm:$0xff] %vm336, 0.0
        %vm339 = vcmask 25600
        %340 = vst.msk [vmem:[#allocation2 + $0x10] sm:$0x3] %vm339, 0.0
        %341 = vst.msk [vmem:[#allocation2 + $0x18] sm:$0xff] %vm336, 0.0
        %342 = vst.msk [vmem:[#allocation2 + $0x20] sm:$0xff] %vm336, 0.0
        %343 = vst.msk [vmem:[#allocation2 + $0x28] sm:$0x3] %vm339, 0.0
        %344 = vst.msk [vmem:[#allocation2 + $0x30] sm:$0xff] %vm336, 0.0
        %345 = vst.msk [vmem:[#allocation2 + $0x38] sm:$0xff] %vm336, 0.0
        %346 = vst.msk [vmem:[#allocation2 + $0x40] sm:$0x3] %vm339, 0.0
        %347 = vst.msk [vmem:[#allocation2 + $0x48] sm:$0xff] %vm336, 0.0
        %348 = vst.msk [vmem:[#allocation2 + $0x50] sm:$0xff] %vm336, 0.0
        %349 = vst.msk [vmem:[#allocation2 + $0x58] sm:$0x3] %vm339, 0.0
        %350 = vst.msk [vmem:[#allocation2 + $0x60] sm:$0xff] %vm336, 0.0
        %351 = vst.msk [vmem:[#allocation2 + $0x68] sm:$0xff] %vm336, 0.0
        %352 = vst.msk [vmem:[#allocation2 + $0x70] sm:$0x3] %vm339, 0.0
        %353 = vst.msk [vmem:[#allocation2 + $0x78] sm:$0xff] %vm336, 0.0
        %354 = vst.msk [vmem:[#allocation2 + $0x80] sm:$0xff] %vm336, 0.0
        %355 = vst.msk [vmem:[#allocation2 + $0x88] sm:$0x3] %vm339, 0.0
        %356 = vst.msk [vmem:[#allocation2 + $0x90] sm:$0xff] %vm336, 0.0
        %357 = vst.msk [vmem:[#allocation2 + $0x98] sm:$0xff] %vm336, 0.0
        %358 = vst.msk [vmem:[#allocation2 + $0xa0] sm:$0x3] %vm339, 0.0
        %359 = vst.msk [vmem:[#allocation2 + $0xa8] sm:$0xff] %vm336, 0.0
        %360 = vst.msk [vmem:[#allocation2 + $0xb0] sm:$0xff] %vm336, 0.0
        %361 = vst.msk [vmem:[#allocation2 + $0xb8] sm:$0x3] %vm339, 0.0
        %362 = vst.msk [vmem:[#allocation2 + $0xc0] sm:$0xff] %vm336, 0.0
        %363 = vst.msk [vmem:[#allocation2 + $0xc8] sm:$0xff] %vm336, 0.0
        %364 = vst.msk [vmem:[#allocation2 + $0xd0] sm:$0x3] %vm339, 0.0
        %365 = vst.msk [vmem:[#allocation2 + $0xd8] sm:$0xff] %vm336, 0.0
        %366 = vst.msk [vmem:[#allocation2 + $0xe0] sm:$0xff] %vm336, 0.0
        %367 = vst.msk [vmem:[#allocation2 + $0xe8] sm:$0x3] %vm339, 0.0
        %368 = vst.msk [vmem:[#allocation2 + $0xf0] sm:$0xff] %vm336, 0.0
        %369 = vst.msk [vmem:[#allocation2 + $0xf8] sm:$0xff] %vm336, 0.0
        %370 = vst.msk [vmem:[#allocation2 + $0x100] sm:$0x3] %vm339, 0.0
        %371 = vst.msk [vmem:[#allocation2 + $0x108] sm:$0xff] %vm336, 0.0
        %372 = vst.msk [vmem:[#allocation2 + $0x110] sm:$0xff] %vm336, 0.0
        %373 = vst.msk [vmem:[#allocation2 + $0x118] sm:$0x3] %vm339, 0.0
        %374 = vst.msk [vmem:[#allocation2 + $0x120] sm:$0xff] %vm336, 0.0
        %375 = vst.msk [vmem:[#allocation2 + $0x128] sm:$0xff] %vm336, 0.0
        %376 = vst.msk [vmem:[#allocation2 + $0x130] sm:$0x3] %vm339, 0.0
        %377 = vst.msk [vmem:[#allocation2 + $0x138] sm:$0xff] %vm336, 0.0
        %378 = vst.msk [vmem:[#allocation2 + $0x140] sm:$0xff] %vm336, 0.0
        %379 = vst.msk [vmem:[#allocation2 + $0x148] sm:$0x3] %vm339, 0.0
        %380 = vst.msk [vmem:[#allocation2 + $0x150] sm:$0xff] %vm336, 0.0
        %381 = vst.msk [vmem:[#allocation2 + $0x158] sm:$0xff] %vm336, 0.0
        %382 = vst.msk [vmem:[#allocation2 + $0x160] sm:$0x3] %vm339, 0.0
        %383 = vst.msk [vmem:[#allocation2 + $0x168] sm:$0xff] %vm336, 0.0
        %384 = vst.msk [vmem:[#allocation2 + $0x170] sm:$0xff] %vm336, 0.0
        %385 = vst.msk [vmem:[#allocation2 + $0x178] sm:$0x3] %vm339, 0.0
        %386 = vst.msk [vmem:[#allocation2 + $0x180] sm:$0xff] %vm336, 0.0
        %387 = vst.msk [vmem:[#allocation2 + $0x188] sm:$0xff] %vm336, 0.0
        %388 = vst.msk [vmem:[#allocation2 + $0x190] sm:$0x3] %vm339, 0.0
        %389 = vst.msk [vmem:[#allocation2 + $0x198] sm:$0xff] %vm336, 0.0
        %390 = vst.msk [vmem:[#allocation2 + $0x1a0] sm:$0xff] %vm336, 0.0
        %391 = vst.msk [vmem:[#allocation2 + $0x1a8] sm:$0x3] %vm339, 0.0
        %s392 = scalar_lea.vmem [#allocation2], 24
        %393 = vst.msk [vmem:[%s392 + $0x1] sm:$0xff] %vm336, %v304
        %394 = vst.msk [vmem:[%s392 + $0x9] sm:$0xff] %vm336, %v305
        %395 = vst.msk [vmem:[%s392 + $0x19] sm:$0xff] %vm336, %v306
        %396 = vst.msk [vmem:[%s392 + $0x21] sm:$0xff] %vm336, %v307
        %397 = vst.msk [vmem:[%s392 + $0x31] sm:$0xff] %vm336, %v308
        %398 = vst.msk [vmem:[%s392 + $0x39] sm:$0xff] %vm336, %v309
        %399 = vst.msk [vmem:[%s392 + $0x49] sm:$0xff] %vm336, %v310
        %400 = vst.msk [vmem:[%s392 + $0x51] sm:$0xff] %vm336, %v311
        %401 = vst.msk [vmem:[%s392 + $0x61] sm:$0xff] %vm336, %v312
        %402 = vst.msk [vmem:[%s392 + $0x69] sm:$0xff] %vm336, %v313
        %403 = vst.msk [vmem:[%s392 + $0x79] sm:$0xff] %vm336, %v314
        %404 = vst.msk [vmem:[%s392 + $0x81] sm:$0xff] %vm336, %v315
        %405 = vst.msk [vmem:[%s392 + $0x91] sm:$0xff] %vm336, %v316
        %406 = vst.msk [vmem:[%s392 + $0x99] sm:$0xff] %vm336, %v317
        %407 = vst.msk [vmem:[%s392 + $0xa9] sm:$0xff] %vm336, %v318
        %408 = vst.msk [vmem:[%s392 + $0xb1] sm:$0xff] %vm336, %v319
        %409 = vst.msk [vmem:[%s392 + $0xc1] sm:$0xff] %vm336, %v320
        %410 = vst.msk [vmem:[%s392 + $0xc9] sm:$0xff] %vm336, %v321
        %411 = vst.msk [vmem:[%s392 + $0xd9] sm:$0xff] %vm336, %v322
        %412 = vst.msk [vmem:[%s392 + $0xe1] sm:$0xff] %vm336, %v323
        %413 = vst.msk [vmem:[%s392 + $0xf1] sm:$0xff] %vm336, %v324
        %414 = vst.msk [vmem:[%s392 + $0xf9] sm:$0xff] %vm336, %v325
        %415 = vst.msk [vmem:[%s392 + $0x109] sm:$0xff] %vm336, %v326
        %416 = vst.msk [vmem:[%s392 + $0x111] sm:$0xff] %vm336, %v327
        %417 = vst.msk [vmem:[%s392 + $0x121] sm:$0xff] %vm336, %v328
        %418 = vst.msk [vmem:[%s392 + $0x129] sm:$0xff] %vm336, %v329
        %419 = vst.msk [vmem:[%s392 + $0x139] sm:$0xff] %vm336, %v330
        %420 = vst.msk [vmem:[%s392 + $0x141] sm:$0xff] %vm336, %v331
        %421 = vst.msk [vmem:[%s392 + $0x151] sm:$0xff] %vm336, %v332
        %422 = vst.msk [vmem:[%s392 + $0x159] sm:$0xff] %vm336, %v333
        %423 = vst.msk [vmem:[%s392 + $0x169] sm:$0xff] %vm336, %v334
        %424 = vst.msk [vmem:[%s392 + $0x171] sm:$0xff] %vm336, %v335
        %vm425 = vcmask 57344
        %426 = vst.msk [vmem:[%s263] sm:$0x1] %vm425, 0.0
        %427 = vst.msk [vmem:[%s266] sm:$0x1] %vm425, 0.0
      $region36: #{double_conv_forward.3} parent=31 // pred_fallthru
        _
      %s428 = smul.u32 %s22, 8
      %s429 = smul.u32 %s428, 24
      %s430 = scalar_lea.vmem [#allocation2], %s429
      %v431 = vld [vmem:[%s430] sm:$0xff]
      %v432 = vld [vmem:[%s430 + $0x8] sm:$0xff]
      %v433 = vld [vmem:[%s430 + $0x10] sm:$0x3]
      %v434 = vld [vmem:[%s430 + $0x18] sm:$0xff]
      %v435 = vld [vmem:[%s430 + $0x20] sm:$0xff]
      %v436 = vld [vmem:[%s430 + $0x28] sm:$0x3]
      %v437 = vld [vmem:[%s430 + $0x30] sm:$0xff]
      %v438 = vld [vmem:[%s430 + $0x38] sm:$0xff]
      %v439 = vld [vmem:[%s430 + $0x40] sm:$0x3]
      %v440 = vld [vmem:[%s430 + $0x48] sm:$0xff]
      %v441 = vld [vmem:[%s430 + $0x50] sm:$0xff]
      %v442 = vld [vmem:[%s430 + $0x58] sm:$0x3]
      %v443 = vld [vmem:[%s430 + $0x60] sm:$0xff]
      %v444 = vld [vmem:[%s430 + $0x68] sm:$0xff]
      %v445 = vld [vmem:[%s430 + $0x70] sm:$0x3]
      %v446 = vld [vmem:[%s430 + $0x78] sm:$0xff]
      %v447 = vld [vmem:[%s430 + $0x80] sm:$0xff]
      %v448 = vld [vmem:[%s430 + $0x88] sm:$0x3]
      %v449 = vld [vmem:[%s430 + $0x90] sm:$0xff]
      %v450 = vld [vmem:[%s430 + $0x98] sm:$0xff]
      %v451 = vld [vmem:[%s430 + $0xa0] sm:$0x3]
      %v452 = vld [vmem:[%s430 + $0xa8] sm:$0xff]
      %v453 = vld [vmem:[%s430 + $0xb0] sm:$0xff]
      %v454 = vld [vmem:[%s430 + $0xb8] sm:$0x3]
      %v455 = vld [vmem:[%s430 + $0xc0] sm:$0xff]
      %v456 = vld [vmem:[%s430 + $0xc8] sm:$0xff]
      %v457 = vld [vmem:[%s430 + $0xd0] sm:$0x3]
      %v458 = vld [vmem:[%s430 + $0xd8] sm:$0xff]
      %v459 = vld [vmem:[%s430 + $0xe0] sm:$0xff]
      %v460 = vld [vmem:[%s430 + $0xe8] sm:$0x3]
      %vm461 = vcmask 31744
      %462 = vst.msk [vmem:[#allocation3] sm:$0xff] %vm461, %v431
      %463 = vst.msk [vmem:[#allocation3 + $0x8] sm:$0xff] %vm461, %v432
      %464 = vst.msk [vmem:[#allocation3 + $0x10] sm:$0xff] %vm461, %v434
      %465 = vst.msk [vmem:[#allocation3 + $0x18] sm:$0xff] %vm461, %v435
      %466 = vst.msk [vmem:[#allocation3 + $0x20] sm:$0xff] %vm461, %v437
      %467 = vst.msk [vmem:[#allocation3 + $0x28] sm:$0xff] %vm461, %v438
      %468 = vst.msk [vmem:[#allocation3 + $0x30] sm:$0xff] %vm461, %v440
      %469 = vst.msk [vmem:[#allocation3 + $0x38] sm:$0xff] %vm461, %v441
      %470 = vst.msk [vmem:[#allocation3 + $0x40] sm:$0xff] %vm461, %v443
      %471 = vst.msk [vmem:[#allocation3 + $0x48] sm:$0xff] %vm461, %v444
      %472 = vst.msk [vmem:[#allocation3 + $0x50] sm:$0xff] %vm461, %v446
      %473 = vst.msk [vmem:[#allocation3 + $0x58] sm:$0xff] %vm461, %v447
      %474 = vst.msk [vmem:[#allocation3 + $0x60] sm:$0xff] %vm461, %v449
      %475 = vst.msk [vmem:[#allocation3 + $0x68] sm:$0xff] %vm461, %v450
      %476 = vst.msk [vmem:[#allocation3 + $0x70] sm:$0xff] %vm461, %v452
      %477 = vst.msk [vmem:[#allocation3 + $0x78] sm:$0xff] %vm461, %v453
      %502 = vrot.lane.b32.xlu0 %v431, 4
      %v503 = vpop.permute.xlu0 %502
      %504 = vrot.lane.b32.xlu0 %v432, 4
      %v505 = vpop.permute.xlu0 %504
      %506 = vrot.lane.b32.xlu0 %v433, 4
      %v507 = vpop.permute.xlu0 %506
      %508 = vrot.lane.b32.xlu0 %v434, 4
      %v509 = vpop.permute.xlu0 %508
      %510 = vrot.lane.b32.xlu0 %v435, 4
      %v511 = vpop.permute.xlu0 %510
      %512 = vrot.lane.b32.xlu0 %v436, 4
      %v513 = vpop.permute.xlu0 %512
      %514 = vrot.lane.b32.xlu0 %v437, 4
      %v515 = vpop.permute.xlu0 %514
      %516 = vrot.lane.b32.xlu0 %v438, 4
      %v517 = vpop.permute.xlu0 %516
      %518 = vrot.lane.b32.xlu0 %v439, 4
      %v519 = vpop.permute.xlu0 %518
      %520 = vrot.lane.b32.xlu0 %v440, 4
      %v521 = vpop.permute.xlu0 %520
      %522 = vrot.lane.b32.xlu0 %v441, 4
      %v523 = vpop.permute.xlu0 %522
      %524 = vrot.lane.b32.xlu0 %v442, 4
      %v525 = vpop.permute.xlu0 %524
      %526 = vrot.lane.b32.xlu0 %v443, 4
      %v527 = vpop.permute.xlu0 %526
      %528 = vrot.lane.b32.xlu0 %v444, 4
      %v529 = vpop.permute.xlu0 %528
      %530 = vrot.lane.b32.xlu0 %v445, 4
      %v531 = vpop.permute.xlu0 %530
      %532 = vrot.lane.b32.xlu0 %v446, 4
      %v533 = vpop.permute.xlu0 %532
      %534 = vrot.lane.b32.xlu0 %v447, 4
      %v535 = vpop.permute.xlu0 %534
      %536 = vrot.lane.b32.xlu0 %v448, 4
      %v537 = vpop.permute.xlu0 %536
      %538 = vrot.lane.b32.xlu0 %v449, 4
      %v539 = vpop.permute.xlu0 %538
      %540 = vrot.lane.b32.xlu0 %v450, 4
      %v541 = vpop.permute.xlu0 %540
      %542 = vrot.lane.b32.xlu0 %v451, 4
      %v543 = vpop.permute.xlu0 %542
      %544 = vrot.lane.b32.xlu0 %v452, 4
      %v545 = vpop.permute.xlu0 %544
      %546 = vrot.lane.b32.xlu0 %v453, 4
      %v547 = vpop.permute.xlu0 %546
      %548 = vrot.lane.b32.xlu0 %v454, 4
      %v549 = vpop.permute.xlu0 %548
      %vm574 = vcmask 64545
      %575 = vst.msk [vmem:[#allocation3 - $0x1] sm:$0xfe] %vm574, %v503
      %vm576 = vcmask 64544
      %577 = vst.msk [vmem:[#allocation3 + $0x7] sm:$0xff] %vm576, %v505
      %vm578 = vcmask 57376
      %579 = vst.msk [vmem:[#allocation3 + $0xf] sm:$0x1] %vm578, %v507
      %580 = vst.msk [vmem:[#allocation3 + $0xf] sm:$0xfe] %vm574, %v509
      %581 = vst.msk [vmem:[#allocation3 + $0x17] sm:$0xff] %vm576, %v511
      %582 = vst.msk [vmem:[#allocation3 + $0x1f] sm:$0x1] %vm578, %v513
      %583 = vst.msk [vmem:[#allocation3 + $0x1f] sm:$0xfe] %vm574, %v515
      %584 = vst.msk [vmem:[#allocation3 + $0x27] sm:$0xff] %vm576, %v517
      %585 = vst.msk [vmem:[#allocation3 + $0x2f] sm:$0x1] %vm578, %v519
      %586 = vst.msk [vmem:[#allocation3 + $0x2f] sm:$0xfe] %vm574, %v521
      %587 = vst.msk [vmem:[#allocation3 + $0x37] sm:$0xff] %vm576, %v523
      %588 = vst.msk [vmem:[#allocation3 + $0x3f] sm:$0x1] %vm578, %v525
      %589 = vst.msk [vmem:[#allocation3 + $0x3f] sm:$0xfe] %vm574, %v527
      %590 = vst.msk [vmem:[#allocation3 + $0x47] sm:$0xff] %vm576, %v529
      %591 = vst.msk [vmem:[#allocation3 + $0x4f] sm:$0x1] %vm578, %v531
      %592 = vst.msk [vmem:[#allocation3 + $0x4f] sm:$0xfe] %vm574, %v533
      %593 = vst.msk [vmem:[#allocation3 + $0x57] sm:$0xff] %vm576, %v535
      %594 = vst.msk [vmem:[#allocation3 + $0x5f] sm:$0x1] %vm578, %v537
      %595 = vst.msk [vmem:[#allocation3 + $0x5f] sm:$0xfe] %vm574, %v539
      %596 = vst.msk [vmem:[#allocation3 + $0x67] sm:$0xff] %vm576, %v541
      %597 = vst.msk [vmem:[#allocation3 + $0x6f] sm:$0x1] %vm578, %v543
      %598 = vst.msk [vmem:[#allocation3 + $0x6f] sm:$0xfe] %vm574, %v545
      %599 = vst.msk [vmem:[#allocation3 + $0x77] sm:$0xff] %vm576, %v547
      %600 = vst.msk [vmem:[#allocation3 + $0x7f] sm:$0x1] %vm578, %v549
      %601 = vrot.lane.b32.xlu0 %v431, 8
      %v602 = vpop.permute.xlu0 %601
      %603 = vrot.lane.b32.xlu0 %v432, 8
      %v604 = vpop.permute.xlu0 %603
      %605 = vrot.lane.b32.xlu0 %v433, 8
      %v606 = vpop.permute.xlu0 %605
      %607 = vrot.lane.b32.xlu0 %v434, 8
      %v608 = vpop.permute.xlu0 %607
      %609 = vrot.lane.b32.xlu0 %v435, 8
      %v610 = vpop.permute.xlu0 %609
      %611 = vrot.lane.b32.xlu0 %v436, 8
      %v612 = vpop.permute.xlu0 %611
      %613 = vrot.lane.b32.xlu0 %v437, 8
      %v614 = vpop.permute.xlu0 %613
      %615 = vrot.lane.b32.xlu0 %v438, 8
      %v616 = vpop.permute.xlu0 %615
      %617 = vrot.lane.b32.xlu0 %v439, 8
      %v618 = vpop.permute.xlu0 %617
      %619 = vrot.lane.b32.xlu0 %v440, 8
      %v620 = vpop.permute.xlu0 %619
      %621 = vrot.lane.b32.xlu0 %v441, 8
      %v622 = vpop.permute.xlu0 %621
      %623 = vrot.lane.b32.xlu0 %v442, 8
      %v624 = vpop.permute.xlu0 %623
      %625 = vrot.lane.b32.xlu0 %v443, 8
      %v626 = vpop.permute.xlu0 %625
      %627 = vrot.lane.b32.xlu0 %v444, 8
      %v628 = vpop.permute.xlu0 %627
      %629 = vrot.lane.b32.xlu0 %v445, 8
      %v630 = vpop.permute.xlu0 %629
      %631 = vrot.lane.b32.xlu0 %v446, 8
      %v632 = vpop.permute.xlu0 %631
      %633 = vrot.lane.b32.xlu0 %v447, 8
      %v634 = vpop.permute.xlu0 %633
      %635 = vrot.lane.b32.xlu0 %v448, 8
      %v636 = vpop.permute.xlu0 %635
      %637 = vrot.lane.b32.xlu0 %v449, 8
      %v638 = vpop.permute.xlu0 %637
      %639 = vrot.lane.b32.xlu0 %v450, 8
      %v640 = vpop.permute.xlu0 %639
      %641 = vrot.lane.b32.xlu0 %v451, 8
      %v642 = vpop.permute.xlu0 %641
      %643 = vrot.lane.b32.xlu0 %v452, 8
      %v644 = vpop.permute.xlu0 %643
      %645 = vrot.lane.b32.xlu0 %v453, 8
      %v646 = vpop.permute.xlu0 %645
      %647 = vrot.lane.b32.xlu0 %v454, 8
      %v648 = vpop.permute.xlu0 %647
      %vm673 = vcmask 97346
      %674 = vst.msk [vmem:[#allocation3 - $0x2] sm:$0xfc] %vm673, %v602
      %vm675 = vcmask 97344
      %676 = vst.msk [vmem:[#allocation3 + $0x6] sm:$0xff] %vm675, %v604
      %vm677 = vcmask 91200
      %678 = vst.msk [vmem:[#allocation3 + $0xe] sm:$0x3] %vm677, %v606
      %679 = vst.msk [vmem:[#allocation3 + $0xe] sm:$0xfc] %vm673, %v608
      %680 = vst.msk [vmem:[#allocation3 + $0x16] sm:$0xff] %vm675, %v610
      %681 = vst.msk [vmem:[#allocation3 + $0x1e] sm:$0x3] %vm677, %v612
      %682 = vst.msk [vmem:[#allocation3 + $0x1e] sm:$0xfc] %vm673, %v614
      %683 = vst.msk [vmem:[#allocation3 + $0x26] sm:$0xff] %vm675, %v616
      %684 = vst.msk [vmem:[#allocation3 + $0x2e] sm:$0x3] %vm677, %v618
      %685 = vst.msk [vmem:[#allocation3 + $0x2e] sm:$0xfc] %vm673, %v620
      %686 = vst.msk [vmem:[#allocation3 + $0x36] sm:$0xff] %vm675, %v622
      %687 = vst.msk [vmem:[#allocation3 + $0x3e] sm:$0x3] %vm677, %v624
      %688 = vst.msk [vmem:[#allocation3 + $0x3e] sm:$0xfc] %vm673, %v626
      %689 = vst.msk [vmem:[#allocation3 + $0x46] sm:$0xff] %vm675, %v628
      %690 = vst.msk [vmem:[#allocation3 + $0x4e] sm:$0x3] %vm677, %v630
      %691 = vst.msk [vmem:[#allocation3 + $0x4e] sm:$0xfc] %vm673, %v632
      %692 = vst.msk [vmem:[#allocation3 + $0x56] sm:$0xff] %vm675, %v634
      %693 = vst.msk [vmem:[#allocation3 + $0x5e] sm:$0x3] %vm677, %v636
      %694 = vst.msk [vmem:[#allocation3 + $0x5e] sm:$0xfc] %vm673, %v638
      %695 = vst.msk [vmem:[#allocation3 + $0x66] sm:$0xff] %vm675, %v640
      %696 = vst.msk [vmem:[#allocation3 + $0x6e] sm:$0x3] %vm677, %v642
      %697 = vst.msk [vmem:[#allocation3 + $0x6e] sm:$0xfc] %vm673, %v644
      %698 = vst.msk [vmem:[#allocation3 + $0x76] sm:$0xff] %vm675, %v646
      %699 = vst.msk [vmem:[#allocation3 + $0x7e] sm:$0x3] %vm677, %v648
      %702 = vrot.lane.b32.xlu0 %v434, 12
      %v703 = vpop.permute.xlu0 %702
      %704 = vrot.lane.b32.xlu0 %v435, 12
      %v705 = vpop.permute.xlu0 %704
      %706 = vrot.lane.b32.xlu0 %v437, 12
      %v707 = vpop.permute.xlu0 %706
      %708 = vrot.lane.b32.xlu0 %v438, 12
      %v709 = vpop.permute.xlu0 %708
      %710 = vrot.lane.b32.xlu0 %v440, 12
      %v711 = vpop.permute.xlu0 %710
      %712 = vrot.lane.b32.xlu0 %v441, 12
      %v713 = vpop.permute.xlu0 %712
      %714 = vrot.lane.b32.xlu0 %v443, 12
      %v715 = vpop.permute.xlu0 %714
      %716 = vrot.lane.b32.xlu0 %v444, 12
      %v717 = vpop.permute.xlu0 %716
      %718 = vrot.lane.b32.xlu0 %v446, 12
      %v719 = vpop.permute.xlu0 %718
      %720 = vrot.lane.b32.xlu0 %v447, 12
      %v721 = vpop.permute.xlu0 %720
      %722 = vrot.lane.b32.xlu0 %v449, 12
      %v723 = vpop.permute.xlu0 %722
      %724 = vrot.lane.b32.xlu0 %v450, 12
      %v725 = vpop.permute.xlu0 %724
      %726 = vrot.lane.b32.xlu0 %v452, 12
      %v727 = vpop.permute.xlu0 %726
      %728 = vrot.lane.b32.xlu0 %v453, 12
      %v729 = vpop.permute.xlu0 %728
      %730 = vrot.lane.b32.xlu0 %v455, 12
      %v731 = vpop.permute.xlu0 %730
      %732 = vrot.lane.b32.xlu0 %v456, 12
      %v733 = vpop.permute.xlu0 %732
      %vm750 = vcmask 130144
      %751 = vst.msk [vmem:[#allocation3] sm:$0xff] %vm750, %v703
      %752 = vst.msk [vmem:[#allocation3 + $0x8] sm:$0xff] %vm750, %v705
      %753 = vst.msk [vmem:[#allocation3 + $0x10] sm:$0xff] %vm750, %v707
      %754 = vst.msk [vmem:[#allocation3 + $0x18] sm:$0xff] %vm750, %v709
      %755 = vst.msk [vmem:[#allocation3 + $0x20] sm:$0xff] %vm750, %v711
      %756 = vst.msk [vmem:[#allocation3 + $0x28] sm:$0xff] %vm750, %v713
      %757 = vst.msk [vmem:[#allocation3 + $0x30] sm:$0xff] %vm750, %v715
      %758 = vst.msk [vmem:[#allocation3 + $0x38] sm:$0xff] %vm750, %v717
      %759 = vst.msk [vmem:[#allocation3 + $0x40] sm:$0xff] %vm750, %v719
      %760 = vst.msk [vmem:[#allocation3 + $0x48] sm:$0xff] %vm750, %v721
      %761 = vst.msk [vmem:[#allocation3 + $0x50] sm:$0xff] %vm750, %v723
      %762 = vst.msk [vmem:[#allocation3 + $0x58] sm:$0xff] %vm750, %v725
      %763 = vst.msk [vmem:[#allocation3 + $0x60] sm:$0xff] %vm750, %v727
      %764 = vst.msk [vmem:[#allocation3 + $0x68] sm:$0xff] %vm750, %v729
      %765 = vst.msk [vmem:[#allocation3 + $0x70] sm:$0xff] %vm750, %v731
      %766 = vst.msk [vmem:[#allocation3 + $0x78] sm:$0xff] %vm750, %v733
      %768 = vrot.lane.b32.xlu0 %v434, 16
      %v769 = vpop.permute.xlu0 %768
      %770 = vrot.lane.b32.xlu0 %v435, 16
      %v771 = vpop.permute.xlu0 %770
      %772 = vrot.lane.b32.xlu0 %v436, 16
      %v773 = vpop.permute.xlu0 %772
      %774 = vrot.lane.b32.xlu0 %v437, 16
      %v775 = vpop.permute.xlu0 %774
      %776 = vrot.lane.b32.xlu0 %v438, 16
      %v777 = vpop.permute.xlu0 %776
      %778 = vrot.lane.b32.xlu0 %v439, 16
      %v779 = vpop.permute.xlu0 %778
      %780 = vrot.lane.b32.xlu0 %v440, 16
      %v781 = vpop.permute.xlu0 %780
      %782 = vrot.lane.b32.xlu0 %v441, 16
      %v783 = vpop.permute.xlu0 %782
      %784 = vrot.lane.b32.xlu0 %v442, 16
      %v785 = vpop.permute.xlu0 %784
      %786 = vrot.lane.b32.xlu0 %v443, 16
      %v787 = vpop.permute.xlu0 %786
      %788 = vrot.lane.b32.xlu0 %v444, 16
      %v789 = vpop.permute.xlu0 %788
      %790 = vrot.lane.b32.xlu0 %v445, 16
      %v791 = vpop.permute.xlu0 %790
      %792 = vrot.lane.b32.xlu0 %v446, 16
      %v793 = vpop.permute.xlu0 %792
      %794 = vrot.lane.b32.xlu0 %v447, 16
      %v795 = vpop.permute.xlu0 %794
      %796 = vrot.lane.b32.xlu0 %v448, 16
      %v797 = vpop.permute.xlu0 %796
      %798 = vrot.lane.b32.xlu0 %v449, 16
      %v799 = vpop.permute.xlu0 %798
      %800 = vrot.lane.b32.xlu0 %v450, 16
      %v801 = vpop.permute.xlu0 %800
      %802 = vrot.lane.b32.xlu0 %v451, 16
      %v803 = vpop.permute.xlu0 %802
      %804 = vrot.lane.b32.xlu0 %v452, 16
      %v805 = vpop.permute.xlu0 %804
      %806 = vrot.lane.b32.xlu0 %v453, 16
      %v807 = vpop.permute.xlu0 %806
      %808 = vrot.lane.b32.xlu0 %v454, 16
      %v809 = vpop.permute.xlu0 %808
      %810 = vrot.lane.b32.xlu0 %v455, 16
      %v811 = vpop.permute.xlu0 %810
      %812 = vrot.lane.b32.xlu0 %v456, 16
      %v813 = vpop.permute.xlu0 %812
      %814 = vrot.lane.b32.xlu0 %v457, 16
      %v815 = vpop.permute.xlu0 %814
      %vm840 = vcmask 162945
      %841 = vst.msk [vmem:[#allocation3 - $0x1] sm:$0xfe] %vm840, %v769
      %vm842 = vcmask 162944
      %843 = vst.msk [vmem:[#allocation3 + $0x7] sm:$0xff] %vm842, %v771
      %vm844 = vcmask 155776
      %845 = vst.msk [vmem:[#allocation3 + $0xf] sm:$0x1] %vm844, %v773
      %846 = vst.msk [vmem:[#allocation3 + $0xf] sm:$0xfe] %vm840, %v775
      %847 = vst.msk [vmem:[#allocation3 + $0x17] sm:$0xff] %vm842, %v777
      %848 = vst.msk [vmem:[#allocation3 + $0x1f] sm:$0x1] %vm844, %v779
      %849 = vst.msk [vmem:[#allocation3 + $0x1f] sm:$0xfe] %vm840, %v781
      %850 = vst.msk [vmem:[#allocation3 + $0x27] sm:$0xff] %vm842, %v783
      %851 = vst.msk [vmem:[#allocation3 + $0x2f] sm:$0x1] %vm844, %v785
      %852 = vst.msk [vmem:[#allocation3 + $0x2f] sm:$0xfe] %vm840, %v787
      %853 = vst.msk [vmem:[#allocation3 + $0x37] sm:$0xff] %vm842, %v789
      %854 = vst.msk [vmem:[#allocation3 + $0x3f] sm:$0x1] %vm844, %v791
      %855 = vst.msk [vmem:[#allocation3 + $0x3f] sm:$0xfe] %vm840, %v793
      %856 = vst.msk [vmem:[#allocation3 + $0x47] sm:$0xff] %vm842, %v795
      %857 = vst.msk [vmem:[#allocation3 + $0x4f] sm:$0x1] %vm844, %v797
      %858 = vst.msk [vmem:[#allocation3 + $0x4f] sm:$0xfe] %vm840, %v799
      %859 = vst.msk [vmem:[#allocation3 + $0x57] sm:$0xff] %vm842, %v801
      %860 = vst.msk [vmem:[#allocation3 + $0x5f] sm:$0x1] %vm844, %v803
      %861 = vst.msk [vmem:[#allocation3 + $0x5f] sm:$0xfe] %vm840, %v805
      %862 = vst.msk [vmem:[#allocation3 + $0x67] sm:$0xff] %vm842, %v807
      %863 = vst.msk [vmem:[#allocation3 + $0x6f] sm:$0x1] %vm844, %v809
      %864 = vst.msk [vmem:[#allocation3 + $0x6f] sm:$0xfe] %vm840, %v811
      %865 = vst.msk [vmem:[#allocation3 + $0x77] sm:$0xff] %vm842, %v813
      %866 = vst.msk [vmem:[#allocation3 + $0x7f] sm:$0x1] %vm844, %v815
      %867 = vrot.lane.b32.xlu0 %v434, 20
      %v868 = vpop.permute.xlu0 %867
      %869 = vrot.lane.b32.xlu0 %v435, 20
      %v870 = vpop.permute.xlu0 %869
      %871 = vrot.lane.b32.xlu0 %v436, 20
      %v872 = vpop.permute.xlu0 %871
      %873 = vrot.lane.b32.xlu0 %v437, 20
      %v874 = vpop.permute.xlu0 %873
      %875 = vrot.lane.b32.xlu0 %v438, 20
      %v876 = vpop.permute.xlu0 %875
      %877 = vrot.lane.b32.xlu0 %v439, 20
      %v878 = vpop.permute.xlu0 %877
      %879 = vrot.lane.b32.xlu0 %v440, 20
      %v880 = vpop.permute.xlu0 %879
      %881 = vrot.lane.b32.xlu0 %v441, 20
      %v882 = vpop.permute.xlu0 %881
      %883 = vrot.lane.b32.xlu0 %v442, 20
      %v884 = vpop.permute.xlu0 %883
      %885 = vrot.lane.b32.xlu0 %v443, 20
      %v886 = vpop.permute.xlu0 %885
      %887 = vrot.lane.b32.xlu0 %v444, 20
      %v888 = vpop.permute.xlu0 %887
      %889 = vrot.lane.b32.xlu0 %v445, 20
      %v890 = vpop.permute.xlu0 %889
      %891 = vrot.lane.b32.xlu0 %v446, 20
      %v892 = vpop.permute.xlu0 %891
      %893 = vrot.lane.b32.xlu0 %v447, 20
      %v894 = vpop.permute.xlu0 %893
      %895 = vrot.lane.b32.xlu0 %v448, 20
      %v896 = vpop.permute.xlu0 %895
      %897 = vrot.lane.b32.xlu0 %v449, 20
      %v898 = vpop.permute.xlu0 %897
      %899 = vrot.lane.b32.xlu0 %v450, 20
      %v900 = vpop.permute.xlu0 %899
      %901 = vrot.lane.b32.xlu0 %v451, 20
      %v902 = vpop.permute.xlu0 %901
      %903 = vrot.lane.b32.xlu0 %v452, 20
      %v904 = vpop.permute.xlu0 %903
      %905 = vrot.lane.b32.xlu0 %v453, 20
      %v906 = vpop.permute.xlu0 %905
      %907 = vrot.lane.b32.xlu0 %v454, 20
      %v908 = vpop.permute.xlu0 %907
      %909 = vrot.lane.b32.xlu0 %v455, 20
      %v910 = vpop.permute.xlu0 %909
      %911 = vrot.lane.b32.xlu0 %v456, 20
      %v912 = vpop.permute.xlu0 %911
      %913 = vrot.lane.b32.xlu0 %v457, 20
      %v914 = vpop.permute.xlu0 %913
      %vm939 = vcmask 195746
      %940 = vst.msk [vmem:[#allocation3 - $0x2] sm:$0xfc] %vm939, %v868
      %vm941 = vcmask 195744
      %942 = vst.msk [vmem:[#allocation3 + $0x6] sm:$0xff] %vm941, %v870
      %vm943 = vcmask 189600
      %944 = vst.msk [vmem:[#allocation3 + $0xe] sm:$0x3] %vm943, %v872
      %945 = vst.msk [vmem:[#allocation3 + $0xe] sm:$0xfc] %vm939, %v874
      %946 = vst.msk [vmem:[#allocation3 + $0x16] sm:$0xff] %vm941, %v876
      %947 = vst.msk [vmem:[#allocation3 + $0x1e] sm:$0x3] %vm943, %v878
      %948 = vst.msk [vmem:[#allocation3 + $0x1e] sm:$0xfc] %vm939, %v880
      %949 = vst.msk [vmem:[#allocation3 + $0x26] sm:$0xff] %vm941, %v882
      %950 = vst.msk [vmem:[#allocation3 + $0x2e] sm:$0x3] %vm943, %v884
      %951 = vst.msk [vmem:[#allocation3 + $0x2e] sm:$0xfc] %vm939, %v886
      %952 = vst.msk [vmem:[#allocation3 + $0x36] sm:$0xff] %vm941, %v888
      %953 = vst.msk [vmem:[#allocation3 + $0x3e] sm:$0x3] %vm943, %v890
      %954 = vst.msk [vmem:[#allocation3 + $0x3e] sm:$0xfc] %vm939, %v892
      %955 = vst.msk [vmem:[#allocation3 + $0x46] sm:$0xff] %vm941, %v894
      %956 = vst.msk [vmem:[#allocation3 + $0x4e] sm:$0x3] %vm943, %v896
      %957 = vst.msk [vmem:[#allocation3 + $0x4e] sm:$0xfc] %vm939, %v898
      %958 = vst.msk [vmem:[#allocation3 + $0x56] sm:$0xff] %vm941, %v900
      %959 = vst.msk [vmem:[#allocation3 + $0x5e] sm:$0x3] %vm943, %v902
      %960 = vst.msk [vmem:[#allocation3 + $0x5e] sm:$0xfc] %vm939, %v904
      %961 = vst.msk [vmem:[#allocation3 + $0x66] sm:$0xff] %vm941, %v906
      %962 = vst.msk [vmem:[#allocation3 + $0x6e] sm:$0x3] %vm943, %v908
      %963 = vst.msk [vmem:[#allocation3 + $0x6e] sm:$0xfc] %vm939, %v910
      %964 = vst.msk [vmem:[#allocation3 + $0x76] sm:$0xff] %vm941, %v912
      %965 = vst.msk [vmem:[#allocation3 + $0x7e] sm:$0x3] %vm943, %v914
      %968 = vrot.lane.b32.xlu0 %v437, 24
      %v969 = vpop.permute.xlu0 %968
      %970 = vrot.lane.b32.xlu0 %v438, 24
      %v971 = vpop.permute.xlu0 %970
      %972 = vrot.lane.b32.xlu0 %v440, 24
      %v973 = vpop.permute.xlu0 %972
      %974 = vrot.lane.b32.xlu0 %v441, 24
      %v975 = vpop.permute.xlu0 %974
      %976 = vrot.lane.b32.xlu0 %v443, 24
      %v977 = vpop.permute.xlu0 %976
      %978 = vrot.lane.b32.xlu0 %v444, 24
      %v979 = vpop.permute.xlu0 %978
      %980 = vrot.lane.b32.xlu0 %v446, 24
      %v981 = vpop.permute.xlu0 %980
      %982 = vrot.lane.b32.xlu0 %v447, 24
      %v983 = vpop.permute.xlu0 %982
      %984 = vrot.lane.b32.xlu0 %v449, 24
      %v985 = vpop.permute.xlu0 %984
      %986 = vrot.lane.b32.xlu0 %v450, 24
      %v987 = vpop.permute.xlu0 %986
      %988 = vrot.lane.b32.xlu0 %v452, 24
      %v989 = vpop.permute.xlu0 %988
      %990 = vrot.lane.b32.xlu0 %v453, 24
      %v991 = vpop.permute.xlu0 %990
      %992 = vrot.lane.b32.xlu0 %v455, 24
      %v993 = vpop.permute.xlu0 %992
      %994 = vrot.lane.b32.xlu0 %v456, 24
      %v995 = vpop.permute.xlu0 %994
      %996 = vrot.lane.b32.xlu0 %v458, 24
      %v997 = vpop.permute.xlu0 %996
      %998 = vrot.lane.b32.xlu0 %v459, 24
      %v999 = vpop.permute.xlu0 %998
      %vm1016 = vcmask 228544
      %1017 = vst.msk [vmem:[#allocation3] sm:$0xff] %vm1016, %v969
      %1018 = vst.msk [vmem:[#allocation3 + $0x8] sm:$0xff] %vm1016, %v971
      %1019 = vst.msk [vmem:[#allocation3 + $0x10] sm:$0xff] %vm1016, %v973
      %1020 = vst.msk [vmem:[#allocation3 + $0x18] sm:$0xff] %vm1016, %v975
      %1021 = vst.msk [vmem:[#allocation3 + $0x20] sm:$0xff] %vm1016, %v977
      %1022 = vst.msk [vmem:[#allocation3 + $0x28] sm:$0xff] %vm1016, %v979
      %1023 = vst.msk [vmem:[#allocation3 + $0x30] sm:$0xff] %vm1016, %v981
      %1024 = vst.msk [vmem:[#allocation3 + $0x38] sm:$0xff] %vm1016, %v983
      %1025 = vst.msk [vmem:[#allocation3 + $0x40] sm:$0xff] %vm1016, %v985
      %1026 = vst.msk [vmem:[#allocation3 + $0x48] sm:$0xff] %vm1016, %v987
      %1027 = vst.msk [vmem:[#allocation3 + $0x50] sm:$0xff] %vm1016, %v989
      %1028 = vst.msk [vmem:[#allocation3 + $0x58] sm:$0xff] %vm1016, %v991
      %1029 = vst.msk [vmem:[#allocation3 + $0x60] sm:$0xff] %vm1016, %v993
      %1030 = vst.msk [vmem:[#allocation3 + $0x68] sm:$0xff] %vm1016, %v995
      %1031 = vst.msk [vmem:[#allocation3 + $0x70] sm:$0xff] %vm1016, %v997
      %1032 = vst.msk [vmem:[#allocation3 + $0x78] sm:$0xff] %vm1016, %v999
      %1034 = vrot.lane.b32.xlu0 %v437, 28
      %v1035 = vpop.permute.xlu0 %1034
      %1036 = vrot.lane.b32.xlu0 %v438, 28
      %v1037 = vpop.permute.xlu0 %1036
      %1038 = vrot.lane.b32.xlu0 %v439, 28
      %v1039 = vpop.permute.xlu0 %1038
      %1040 = vrot.lane.b32.xlu0 %v440, 28
      %v1041 = vpop.permute.xlu0 %1040
      %1042 = vrot.lane.b32.xlu0 %v441, 28
      %v1043 = vpop.permute.xlu0 %1042
      %1044 = vrot.lane.b32.xlu0 %v442, 28
      %v1045 = vpop.permute.xlu0 %1044
      %1046 = vrot.lane.b32.xlu0 %v443, 28
      %v1047 = vpop.permute.xlu0 %1046
      %1048 = vrot.lane.b32.xlu0 %v444, 28
      %v1049 = vpop.permute.xlu0 %1048
      %1050 = vrot.lane.b32.xlu0 %v445, 28
      %v1051 = vpop.permute.xlu0 %1050
      %1052 = vrot.lane.b32.xlu0 %v446, 28
      %v1053 = vpop.permute.xlu0 %1052
      %1054 = vrot.lane.b32.xlu0 %v447, 28
      %v1055 = vpop.permute.xlu0 %1054
      %1056 = vrot.lane.b32.xlu0 %v448, 28
      %v1057 = vpop.permute.xlu0 %1056
      %1058 = vrot.lane.b32.xlu0 %v449, 28
      %v1059 = vpop.permute.xlu0 %1058
      %1060 = vrot.lane.b32.xlu0 %v450, 28
      %v1061 = vpop.permute.xlu0 %1060
      %1062 = vrot.lane.b32.xlu0 %v451, 28
      %v1063 = vpop.permute.xlu0 %1062
      %1064 = vrot.lane.b32.xlu0 %v452, 28
      %v1065 = vpop.permute.xlu0 %1064
      %1066 = vrot.lane.b32.xlu0 %v453, 28
      %v1067 = vpop.permute.xlu0 %1066
      %1068 = vrot.lane.b32.xlu0 %v454, 28
      %v1069 = vpop.permute.xlu0 %1068
      %1070 = vrot.lane.b32.xlu0 %v455, 28
      %v1071 = vpop.permute.xlu0 %1070
      %1072 = vrot.lane.b32.xlu0 %v456, 28
      %v1073 = vpop.permute.xlu0 %1072
      %1074 = vrot.lane.b32.xlu0 %v457, 28
      %v1075 = vpop.permute.xlu0 %1074
      %1076 = vrot.lane.b32.xlu0 %v458, 28
      %v1077 = vpop.permute.xlu0 %1076
      %1078 = vrot.lane.b32.xlu0 %v459, 28
      %v1079 = vpop.permute.xlu0 %1078
      %1080 = vrot.lane.b32.xlu0 %v460, 28
      %v1081 = vpop.permute.xlu0 %1080
      %vm1106 = vcmask 261345
      %1107 = vst.msk [vmem:[#allocation3 - $0x1] sm:$0xfe] %vm1106, %v1035
      %vm1108 = vcmask 261344
      %1109 = vst.msk [vmem:[#allocation3 + $0x7] sm:$0xff] %vm1108, %v1037
      %vm1110 = vcmask 254176
      %1111 = vst.msk [vmem:[#allocation3 + $0xf] sm:$0x1] %vm1110, %v1039
      %1112 = vst.msk [vmem:[#allocation3 + $0xf] sm:$0xfe] %vm1106, %v1041
      %1113 = vst.msk [vmem:[#allocation3 + $0x17] sm:$0xff] %vm1108, %v1043
      %1114 = vst.msk [vmem:[#allocation3 + $0x1f] sm:$0x1] %vm1110, %v1045
      %1115 = vst.msk [vmem:[#allocation3 + $0x1f] sm:$0xfe] %vm1106, %v1047
      %1116 = vst.msk [vmem:[#allocation3 + $0x27] sm:$0xff] %vm1108, %v1049
      %1117 = vst.msk [vmem:[#allocation3 + $0x2f] sm:$0x1] %vm1110, %v1051
      %1118 = vst.msk [vmem:[#allocation3 + $0x2f] sm:$0xfe] %vm1106, %v1053
      %1119 = vst.msk [vmem:[#allocation3 + $0x37] sm:$0xff] %vm1108, %v1055
      %1120 = vst.msk [vmem:[#allocation3 + $0x3f] sm:$0x1] %vm1110, %v1057
      %1121 = vst.msk [vmem:[#allocation3 + $0x3f] sm:$0xfe] %vm1106, %v1059
      %1122 = vst.msk [vmem:[#allocation3 + $0x47] sm:$0xff] %vm1108, %v1061
      %1123 = vst.msk [vmem:[#allocation3 + $0x4f] sm:$0x1] %vm1110, %v1063
      %1124 = vst.msk [vmem:[#allocation3 + $0x4f] sm:$0xfe] %vm1106, %v1065
      %1125 = vst.msk [vmem:[#allocation3 + $0x57] sm:$0xff] %vm1108, %v1067
      %1126 = vst.msk [vmem:[#allocation3 + $0x5f] sm:$0x1] %vm1110, %v1069
      %1127 = vst.msk [vmem:[#allocation3 + $0x5f] sm:$0xfe] %vm1106, %v1071
      %1128 = vst.msk [vmem:[#allocation3 + $0x67] sm:$0xff] %vm1108, %v1073
      %1129 = vst.msk [vmem:[#allocation3 + $0x6f] sm:$0x1] %vm1110, %v1075
      %1130 = vst.msk [vmem:[#allocation3 + $0x6f] sm:$0xfe] %vm1106, %v1077
      %1131 = vst.msk [vmem:[#allocation3 + $0x77] sm:$0xff] %vm1108, %v1079
      %1132 = vst.msk [vmem:[#allocation3 + $0x7f] sm:$0x1] %vm1110, %v1081
      %1133 = vrot.lane.b32.xlu0 %v437, 32
      %v1134 = vpop.permute.xlu0 %1133
      %1135 = vrot.lane.b32.xlu0 %v438, 32
      %v1136 = vpop.permute.xlu0 %1135
      %1137 = vrot.lane.b32.xlu0 %v439, 32
      %v1138 = vpop.permute.xlu0 %1137
      %1139 = vrot.lane.b32.xlu0 %v440, 32
      %v1140 = vpop.permute.xlu0 %1139
      %1141 = vrot.lane.b32.xlu0 %v441, 32
      %v1142 = vpop.permute.xlu0 %1141
      %1143 = vrot.lane.b32.xlu0 %v442, 32
      %v1144 = vpop.permute.xlu0 %1143
      %1145 = vrot.lane.b32.xlu0 %v443, 32
      %v1146 = vpop.permute.xlu0 %1145
      %1147 = vrot.lane.b32.xlu0 %v444, 32
      %v1148 = vpop.permute.xlu0 %1147
      %1149 = vrot.lane.b32.xlu0 %v445, 32
      %v1150 = vpop.permute.xlu0 %1149
      %1151 = vrot.lane.b32.xlu0 %v446, 32
      %v1152 = vpop.permute.xlu0 %1151
      %1153 = vrot.lane.b32.xlu0 %v447, 32
      %v1154 = vpop.permute.xlu0 %1153
      %1155 = vrot.lane.b32.xlu0 %v448, 32
      %v1156 = vpop.permute.xlu0 %1155
      %1157 = vrot.lane.b32.xlu0 %v449, 32
      %v1158 = vpop.permute.xlu0 %1157
      %1159 = vrot.lane.b32.xlu0 %v450, 32
      %v1160 = vpop.permute.xlu0 %1159
      %1161 = vrot.lane.b32.xlu0 %v451, 32
      %v1162 = vpop.permute.xlu0 %1161
      %1163 = vrot.lane.b32.xlu0 %v452, 32
      %v1164 = vpop.permute.xlu0 %1163
      %1165 = vrot.lane.b32.xlu0 %v453, 32
      %v1166 = vpop.permute.xlu0 %1165
      %1167 = vrot.lane.b32.xlu0 %v454, 32
      %v1168 = vpop.permute.xlu0 %1167
      %1169 = vrot.lane.b32.xlu0 %v455, 32
      %v1170 = vpop.permute.xlu0 %1169
      %1171 = vrot.lane.b32.xlu0 %v456, 32
      %v1172 = vpop.permute.xlu0 %1171
      %1173 = vrot.lane.b32.xlu0 %v457, 32
      %v1174 = vpop.permute.xlu0 %1173
      %1175 = vrot.lane.b32.xlu0 %v458, 32
      %v1176 = vpop.permute.xlu0 %1175
      %1177 = vrot.lane.b32.xlu0 %v459, 32
      %v1178 = vpop.permute.xlu0 %1177
      %1179 = vrot.lane.b32.xlu0 %v460, 32
      %v1180 = vpop.permute.xlu0 %1179
      %vm1205 = vcmask 294146
      %1206 = vst.msk [vmem:[#allocation3 - $0x2] sm:$0xfc] %vm1205, %v1134
      %vm1207 = vcmask 294144
      %1208 = vst.msk [vmem:[#allocation3 + $0x6] sm:$0xff] %vm1207, %v1136
      %vm1209 = vcmask 288000
      %1210 = vst.msk [vmem:[#allocation3 + $0xe] sm:$0x3] %vm1209, %v1138
      %1211 = vst.msk [vmem:[#allocation3 + $0xe] sm:$0xfc] %vm1205, %v1140
      %1212 = vst.msk [vmem:[#allocation3 + $0x16] sm:$0xff] %vm1207, %v1142
      %1213 = vst.msk [vmem:[#allocation3 + $0x1e] sm:$0x3] %vm1209, %v1144
      %1214 = vst.msk [vmem:[#allocation3 + $0x1e] sm:$0xfc] %vm1205, %v1146
      %1215 = vst.msk [vmem:[#allocation3 + $0x26] sm:$0xff] %vm1207, %v1148
      %1216 = vst.msk [vmem:[#allocation3 + $0x2e] sm:$0x3] %vm1209, %v1150
      %1217 = vst.msk [vmem:[#allocation3 + $0x2e] sm:$0xfc] %vm1205, %v1152
      %1218 = vst.msk [vmem:[#allocation3 + $0x36] sm:$0xff] %vm1207, %v1154
      %1219 = vst.msk [vmem:[#allocation3 + $0x3e] sm:$0x3] %vm1209, %v1156
      %1220 = vst.msk [vmem:[#allocation3 + $0x3e] sm:$0xfc] %vm1205, %v1158
      %1221 = vst.msk [vmem:[#allocation3 + $0x46] sm:$0xff] %vm1207, %v1160
      %1222 = vst.msk [vmem:[#allocation3 + $0x4e] sm:$0x3] %vm1209, %v1162
      %1223 = vst.msk [vmem:[#allocation3 + $0x4e] sm:$0xfc] %vm1205, %v1164
      %1224 = vst.msk [vmem:[#allocation3 + $0x56] sm:$0xff] %vm1207, %v1166
      %1225 = vst.msk [vmem:[#allocation3 + $0x5e] sm:$0x3] %vm1209, %v1168
      %1226 = vst.msk [vmem:[#allocation3 + $0x5e] sm:$0xfc] %vm1205, %v1170
      %1227 = vst.msk [vmem:[#allocation3 + $0x66] sm:$0xff] %vm1207, %v1172
      %1228 = vst.msk [vmem:[#allocation3 + $0x6e] sm:$0x3] %vm1209, %v1174
      %1229 = vst.msk [vmem:[#allocation3 + $0x6e] sm:$0xfc] %vm1205, %v1176
      %1230 = vst.msk [vmem:[#allocation3 + $0x76] sm:$0xff] %vm1207, %v1178
      %1231 = vst.msk [vmem:[#allocation3 + $0x7e] sm:$0x3] %vm1209, %v1180
      %v1232 = vld [vmem:[#allocation3] sm:$0xff]
      %v1233 = vld [vmem:[#allocation3 + $0x8] sm:$0xff]
      %v1234 = vld [vmem:[#allocation3 + $0x10] sm:$0xff]
      %v1235 = vld [vmem:[#allocation3 + $0x18] sm:$0xff]
      %v1236 = vld [vmem:[#allocation3 + $0x20] sm:$0xff]
      %v1237 = vld [vmem:[#allocation3 + $0x28] sm:$0xff]
      %v1238 = vld [vmem:[#allocation3 + $0x30] sm:$0xff]
      %v1239 = vld [vmem:[#allocation3 + $0x38] sm:$0xff]
      %v1240 = vld [vmem:[#allocation3 + $0x40] sm:$0xff]
      %v1241 = vld [vmem:[#allocation3 + $0x48] sm:$0xff]
      %v1242 = vld [vmem:[#allocation3 + $0x50] sm:$0xff]
      %v1243 = vld [vmem:[#allocation3 + $0x58] sm:$0xff]
      %v1244 = vld [vmem:[#allocation3 + $0x60] sm:$0xff]
      %v1245 = vld [vmem:[#allocation3 + $0x68] sm:$0xff]
      %v1246 = vld [vmem:[#allocation3 + $0x70] sm:$0xff]
      %v1247 = vld [vmem:[#allocation3 + $0x78] sm:$0xff]
      %v1248 = vpack.c.bf16 %v1233, %v1232
      %v1249 = vpack.c.bf16 %v1235, %v1234
      %v1250 = vpack.c.bf16 %v1237, %v1236
      %v1251 = vpack.c.bf16 %v1239, %v1238
      %v1252 = vpack.c.bf16 %v1241, %v1240
      %v1253 = vpack.c.bf16 %v1243, %v1242
      %v1254 = vpack.c.bf16 %v1245, %v1244
      %v1255 = vpack.c.bf16 %v1247, %v1246
      %v1256 = vld [vmem:[%s1] sm:$0xf]
      %v1257 = vld [vmem:[%s1 + $0x4] sm:$0xf]
      %v1258 = vld [vmem:[%s1 + $0x8] sm:$0xf]
      %v1259 = vld [vmem:[%s1 + $0xc] sm:$0xf]
      %v1260 = vld [vmem:[%s1 + $0x10] sm:$0x3]
      %v1261 = vld [vmem:[%s2] sm:$0x1]
      %v1263 = vlaneseq
      %v1264 = vshrl.u32 %v1263, 7
      %v1265 = vsub.s32 0, %v1264
      %v1266 = vrot.slane %v1261, %v1265
      %v1273 = vunpack.c.l.b16 %v1256
      %v1274 = vunpack.c.l.b16 %v1257
      %v1275 = vunpack.c.l.b16 %v1258
      %v1276 = vunpack.c.l.b16 %v1259
      %v1277 = vunpack.c.l.b16 %v1260
      %v1278 = vpack.c.b16 %v1274, %v1273
      %v1279 = vpack.c.b16 %v1276, %v1275
      %v1280 = vpack.c.b16 %v1277, %v1277
      %vm1283 = vcmask 293888
      %v1285 = vsel %vm1283, %v1248, 0
      %v1288 = vsel %vm1283, %v1249, 0
      %v1291 = vsel %vm1283, %v1250, 0
      %v1294 = vsel %vm1283, %v1251, 0
      %v1297 = vsel %vm1283, %v1252, 0
      %v1300 = vsel %vm1283, %v1253, 0
      %v1303 = vsel %vm1283, %v1254, 0
      %v1306 = vsel %vm1283, %v1255, 0
      %vm1308 = vcmask 1041408
      %v1310 = vsel %vm1308, %v1280, 0
      %1312 = vmatprep.subr.bf16.mxu0 0
      %1313 = vmatpush1.bf16.msra.mxu0 %v1278
      %1314 = vmatprep.subr.bf16.mxu0 0
      %1315 = vmatpush1.bf16.msra.mxu0 %v1279
      %1316 = vmatprep.subr.bf16.mxu0 0
      %1317 = vmatpush1.bf16.msra.mxu0 %v1310
      %1318 = vmatprep.subr.bf16.mxu0 0
      %1319 = vmatpush1.bf16.msra.mxu0 0
      %1320 = vmatprep.subr.bf16.mxu0 0
      %1321 = vmatpush1.bf16.msra.mxu0 0
      %1322 = vmatprep.subr.bf16.mxu0 0
      %1323 = vmatpush1.bf16.msra.mxu0 0
      %1324 = vmatprep.subr.bf16.mxu0 0
      %1325 = vmatpush1.bf16.msra.mxu0 0
      %1326 = vmatprep.subr.bf16.mxu0 0
      %1327 = vmatpush1.bf16.msra.mxu0 0
      %1328 = vmatprep.subr.bf16.mxu0 0
      %1329 = vmatpush1.bf16.msra.mxu0 0
      %1330 = vmatprep.subr.bf16.mxu0 0
      %1331 = vmatpush1.bf16.msra.mxu0 0
      %1332 = vmatprep.subr.bf16.mxu0 0
      %1333 = vmatpush1.bf16.msra.mxu0 0
      %1334 = vmatprep.subr.bf16.mxu0 0
      %1335 = vmatpush1.bf16.msra.mxu0 0
      %1336 = vmatprep.subr.bf16.mxu0 0
      %1337 = vmatpush1.bf16.msra.mxu0 0
      %1338 = vmatprep.subr.bf16.mxu0 0
      %1339 = vmatpush1.bf16.msra.mxu0 0
      %1340 = vmatprep.subr.bf16.mxu0 0
      %1341 = vmatpush1.bf16.msra.mxu0 0
      %1342 = vmatprep.subr.bf16.mxu0 0
      %1343 = vmatpush1.bf16.msra.mxu0 0
      %1344 = vmatprep.mubr.bf16.mxu0 0
      %1345 = vmatmul.mubr.bf16.gmra.mrb[0].mxu0 %v1285
      %v1346 = vpop.f32.mrb[0].mxu0
      %v1347 = vadd.f32 %v1266, %v1346
      %v1348 = vpop.f32.mrb[0].mxu0
      %v1349 = vpop.f32.mrb[0].mxu0
      %v1350 = vadd.f32 %v1266, %v1349
      %v1351 = vpop.f32.mrb[0].mxu0
      %1352 = vmatprep.mubr.bf16.mxu0 0
      %1353 = vmatmul.mubr.bf16.gmra.mrb[0].mxu0 %v1288
      %v1354 = vpop.f32.mrb[0].mxu0
      %v1355 = vadd.f32 %v1266, %v1354
      %v1356 = vpop.f32.mrb[0].mxu0
      %v1357 = vpop.f32.mrb[0].mxu0
      %v1358 = vadd.f32 %v1266, %v1357
      %v1359 = vpop.f32.mrb[0].mxu0
      %1360 = vmatprep.mubr.bf16.mxu0 0
      %1361 = vmatmul.mubr.bf16.gmra.mrb[0].mxu0 %v1291
      %v1362 = vpop.f32.mrb[0].mxu0
      %v1363 = vadd.f32 %v1266, %v1362
      %v1364 = vpop.f32.mrb[0].mxu0
      %v1365 = vpop.f32.mrb[0].mxu0
      %v1366 = vadd.f32 %v1266, %v1365
      %v1367 = vpop.f32.mrb[0].mxu0
      %1368 = vmatprep.mubr.bf16.mxu0 0
      %1369 = vmatmul.mubr.bf16.gmra.mrb[0].mxu0 %v1294
      %v1370 = vpop.f32.mrb[0].mxu0
      %v1371 = vadd.f32 %v1266, %v1370
      %v1372 = vpop.f32.mrb[0].mxu0
      %v1373 = vpop.f32.mrb[0].mxu0
      %v1374 = vadd.f32 %v1266, %v1373
      %v1375 = vpop.f32.mrb[0].mxu0
      %1376 = vmatprep.mubr.bf16.mxu0 0
      %1377 = vmatmul.mubr.bf16.gmra.mrb[0].mxu0 %v1297
      %v1378 = vpop.f32.mrb[0].mxu0
      %v1379 = vadd.f32 %v1266, %v1378
      %v1380 = vpop.f32.mrb[0].mxu0
      %v1381 = vpop.f32.mrb[0].mxu0
      %v1382 = vadd.f32 %v1266, %v1381
      %v1383 = vpop.f32.mrb[0].mxu0
      %1384 = vmatprep.mubr.bf16.mxu0 0
      %1385 = vmatmul.mubr.bf16.gmra.mrb[0].mxu0 %v1300
      %v1386 = vpop.f32.mrb[0].mxu0
      %v1387 = vadd.f32 %v1266, %v1386
      %v1388 = vpop.f32.mrb[0].mxu0
      %v1389 = vpop.f32.mrb[0].mxu0
      %v1390 = vadd.f32 %v1266, %v1389
      %v1391 = vpop.f32.mrb[0].mxu0
      %1392 = vmatprep.mubr.bf16.mxu0 0
      %1393 = vmatmul.mubr.bf16.gmra.mrb[0].mxu0 %v1303
      %v1394 = vpop.f32.mrb[0].mxu0
      %v1395 = vadd.f32 %v1266, %v1394
      %v1396 = vpop.f32.mrb[0].mxu0
      %v1397 = vpop.f32.mrb[0].mxu0
      %v1398 = vadd.f32 %v1266, %v1397
      %v1399 = vpop.f32.mrb[0].mxu0
      %1400 = vmatprep.mubr.bf16.mxu0 0
      %1401 = vmatmul.mubr.bf16.gmra.mrb[0].mxu0 %v1306
      %v1402 = vpop.f32.mrb[0].mxu0
      %v1403 = vadd.f32 %v1266, %v1402
      %v1404 = vpop.f32.mrb[0].mxu0
      %v1405 = vpop.f32.mrb[0].mxu0
      %v1406 = vadd.f32 %v1266, %v1405
      %v1407 = vpop.f32.mrb[0].mxu0
      %1408 = vdwg.mxu0
      %v1409 = vld [vmem:[%s263] sm:$0x1]
      %vm1410 = vcmask 64512
      %v1411 = vsel %vm1410, %v1347, 0.0
      %v1412 = vsel %vm1410, %v1350, 0.0
      %v1413 = vadd.f32 %v1411, %v1412
      %v1414 = vsel %vm1410, %v1355, 0.0
      %v1415 = vadd.f32 %v1413, %v1414
      %v1416 = vsel %vm1410, %v1358, 0.0
      %v1417 = vadd.f32 %v1415, %v1416
      %v1418 = vsel %vm1410, %v1363, 0.0
      %v1419 = vadd.f32 %v1417, %v1418
      %v1420 = vsel %vm1410, %v1366, 0.0
      %v1421 = vadd.f32 %v1419, %v1420
      %v1422 = vsel %vm1410, %v1371, 0.0
      %v1423 = vadd.f32 %v1421, %v1422
      %v1424 = vsel %vm1410, %v1374, 0.0
      %v1425 = vadd.f32 %v1423, %v1424
      %v1426 = vsel %vm1410, %v1379, 0.0
      %v1427 = vadd.f32 %v1425, %v1426
      %v1428 = vsel %vm1410, %v1382, 0.0
      %v1429 = vadd.f32 %v1427, %v1428
      %v1430 = vsel %vm1410, %v1387, 0.0
      %v1431 = vadd.f32 %v1429, %v1430
      %v1432 = vsel %vm1410, %v1390, 0.0
      %v1433 = vadd.f32 %v1431, %v1432
      %v1434 = vsel %vm1410, %v1395, 0.0
      %v1435 = vadd.f32 %v1433, %v1434
      %v1436 = vsel %vm1410, %v1398, 0.0
      %v1437 = vadd.f32 %v1435, %v1436
      %v1438 = vsel %vm1410, %v1403, 0.0
      %v1439 = vadd.f32 %v1437, %v1438
      %v1440 = vsel %vm1410, %v1406, 0.0
      %v1441 = vadd.f32 %v1439, %v1440
      %v1442 = vrot.slane %v1441, 4
      %v1443 = vadd.f32 %v1441, %v1442
      %v1444 = vrot.slane %v1443, 2
      %v1445 = vadd.f32 %v1443, %v1444
      %v1446 = vrot.slane %v1445, 1
      %v1447 = vadd.f32 %v1445, %v1446
      %v1448 = vadd.f32 %v1409, %v1447
      %vm1449 = vcmask 57344
      %1450 = vst.msk [vmem:[%s263] sm:$0x1] %vm1449, %v1448
      %v1451 = vld [vmem:[%s266] sm:$0x1]
      %v1452 = vmul.f32 %v1347, %v1347
      %v1453 = vmul.f32 %v1350, %v1350
      %v1454 = vmul.f32 %v1355, %v1355
      %v1455 = vmul.f32 %v1358, %v1358
      %v1456 = vmul.f32 %v1363, %v1363
      %v1457 = vmul.f32 %v1366, %v1366
      %v1458 = vmul.f32 %v1371, %v1371
      %v1459 = vmul.f32 %v1374, %v1374
      %v1460 = vmul.f32 %v1379, %v1379
      %v1461 = vmul.f32 %v1382, %v1382
      %v1462 = vmul.f32 %v1387, %v1387
      %v1463 = vmul.f32 %v1390, %v1390
      %v1464 = vmul.f32 %v1395, %v1395
      %v1465 = vmul.f32 %v1398, %v1398
      %v1466 = vmul.f32 %v1403, %v1403
      %v1467 = vmul.f32 %v1406, %v1406
      %v1468 = vsel %vm1410, %v1452, 0.0
      %v1469 = vsel %vm1410, %v1453, 0.0
      %v1470 = vadd.f32 %v1468, %v1469
      %v1471 = vsel %vm1410, %v1454, 0.0
      %v1472 = vadd.f32 %v1470, %v1471
      %v1473 = vsel %vm1410, %v1455, 0.0
      %v1474 = vadd.f32 %v1472, %v1473
      %v1475 = vsel %vm1410, %v1456, 0.0
      %v1476 = vadd.f32 %v1474, %v1475
      %v1477 = vsel %vm1410, %v1457, 0.0
      %v1478 = vadd.f32 %v1476, %v1477
      %v1479 = vsel %vm1410, %v1458, 0.0
      %v1480 = vadd.f32 %v1478, %v1479
      %v1481 = vsel %vm1410, %v1459, 0.0
      %v1482 = vadd.f32 %v1480, %v1481
      %v1483 = vsel %vm1410, %v1460, 0.0
      %v1484 = vadd.f32 %v1482, %v1483
      %v1485 = vsel %vm1410, %v1461, 0.0
      %v1486 = vadd.f32 %v1484, %v1485
      %v1487 = vsel %vm1410, %v1462, 0.0
      %v1488 = vadd.f32 %v1486, %v1487
      %v1489 = vsel %vm1410, %v1463, 0.0
      %v1490 = vadd.f32 %v1488, %v1489
      %v1491 = vsel %vm1410, %v1464, 0.0
      %v1492 = vadd.f32 %v1490, %v1491
      %v1493 = vsel %vm1410, %v1465, 0.0
      %v1494 = vadd.f32 %v1492, %v1493
      %v1495 = vsel %vm1410, %v1466, 0.0
      %v1496 = vadd.f32 %v1494, %v1495
      %v1497 = vsel %vm1410, %v1467, 0.0
      %v1498 = vadd.f32 %v1496, %v1497
      %v1499 = vrot.slane %v1498, 4
      %v1500 = vadd.f32 %v1498, %v1499
      %v1501 = vrot.slane %v1500, 2
      %v1502 = vadd.f32 %v1500, %v1501
      %v1503 = vrot.slane %v1502, 1
      %v1504 = vadd.f32 %v1502, %v1503
      %v1505 = vadd.f32 %v1451, %v1504
      %1506 = vst.msk [vmem:[%s266] sm:$0x1] %vm1449, %v1505
      %v1507 = vpack.c.bf16 %v1350, %v1347
      %v1508 = vpack.c.bf16 %v1358, %v1355
      %v1509 = vpack.c.bf16 %v1366, %v1363
      %v1510 = vpack.c.bf16 %v1374, %v1371
      %v1511 = vpack.c.bf16 %v1382, %v1379
      %v1512 = vpack.c.bf16 %v1390, %v1387
      %v1513 = vpack.c.bf16 %v1398, %v1395
      %v1514 = vpack.c.bf16 %v1406, %v1403
      %v1523 = vunpack.c.l.b16 %v1507
      %v1524 = vunpack.c.h.b16 %v1507
      %v1525 = vunpack.c.l.b16 %v1508
      %v1526 = vunpack.c.h.b16 %v1508
      %v1527 = vunpack.c.l.b16 %v1509
      %v1528 = vunpack.c.h.b16 %v1509
      %v1529 = vunpack.c.l.b16 %v1510
      %v1530 = vunpack.c.h.b16 %v1510
      %v1531 = vunpack.c.l.b16 %v1511
      %v1532 = vunpack.c.h.b16 %v1511
      %v1533 = vunpack.c.l.b16 %v1512
      %v1534 = vunpack.c.h.b16 %v1512
      %v1535 = vunpack.c.l.b16 %v1513
      %v1536 = vunpack.c.h.b16 %v1513
      %v1537 = vunpack.c.l.b16 %v1514
      %v1538 = vunpack.c.h.b16 %v1514
      %v1539 = vpack.c.b16 %v1523, %v1523
      %v1540 = vpack.c.b16 %v1524, %v1524
      %v1541 = vpack.c.b16 %v1525, %v1525
      %v1542 = vpack.c.b16 %v1526, %v1526
      %v1543 = vpack.c.b16 %v1527, %v1527
      %v1544 = vpack.c.b16 %v1528, %v1528
      %v1545 = vpack.c.b16 %v1529, %v1529
      %v1546 = vpack.c.b16 %v1530, %v1530
      %v1547 = vpack.c.b16 %v1531, %v1531
      %v1548 = vpack.c.b16 %v1532, %v1532
      %v1549 = vpack.c.b16 %v1533, %v1533
      %v1550 = vpack.c.b16 %v1534, %v1534
      %v1551 = vpack.c.b16 %v1535, %v1535
      %v1552 = vpack.c.b16 %v1536, %v1536
      %v1553 = vpack.c.b16 %v1537, %v1537
      %v1554 = vpack.c.b16 %v1538, %v1538
      %vm1571 = vcmask 60416
      %1572 = vst.msk [vmem:[%s259] sm:$0xf] %vm1571, %v1539
      %1573 = vst.msk [vmem:[%s259 + $0x4] sm:$0xf] %vm1571, %v1540
      %1574 = vst.msk [vmem:[%s259 + $0x8] sm:$0xf] %vm1571, %v1541
      %1575 = vst.msk [vmem:[%s259 + $0xc] sm:$0xf] %vm1571, %v1542
      %1576 = vst.msk [vmem:[%s259 + $0x10] sm:$0xf] %vm1571, %v1543
      %1577 = vst.msk [vmem:[%s259 + $0x14] sm:$0xf] %vm1571, %v1544
      %1578 = vst.msk [vmem:[%s259 + $0x18] sm:$0xf] %vm1571, %v1545
      %1579 = vst.msk [vmem:[%s259 + $0x1c] sm:$0xf] %vm1571, %v1546
      %1580 = vst.msk [vmem:[%s259 + $0x20] sm:$0xf] %vm1571, %v1547
      %1581 = vst.msk [vmem:[%s259 + $0x24] sm:$0xf] %vm1571, %v1548
      %1582 = vst.msk [vmem:[%s259 + $0x28] sm:$0xf] %vm1571, %v1549
      %1583 = vst.msk [vmem:[%s259 + $0x2c] sm:$0xf] %vm1571, %v1550
      %1584 = vst.msk [vmem:[%s259 + $0x30] sm:$0xf] %vm1571, %v1551
      %1585 = vst.msk [vmem:[%s259 + $0x34] sm:$0xf] %vm1571, %v1552
      %1586 = vst.msk [vmem:[%s259 + $0x38] sm:$0xf] %vm1571, %v1553
      %1587 = vst.msk [vmem:[%s259 + $0x3c] sm:$0xf] %vm1571, %v1554
      %s1588 = smul.u32 8, %s22
      %p1589 = scmp.lt.s32.totalorder %s21, 1
      %s1590 = scalar_select %p1589, %s21, 1
      %p1591 = scmp.lt.s32.totalorder %s1588, 15
      %s1592 = scalar_select %p1591, %s1588, 15
      %s1593 = smul.addr %s1592, 2
      %s1594 = smul.addr %s1590, 32
      %s1595 = sadd.s32 %s1593, %s1594
      %s1596 = smul.addr %s1595, 4
      %s1597 = scalar_lea.vmem %s3, %s1596
      %p1598 = scmp.lt.s32.totalorder %s21, 1
      %s1599 = scalar_select %p1598, %s21, 1
      %s1600 = scalar_lea.vmem %s4, %s1599
      %p1601 = scmp.lt.s32.totalorder %s21, 1
      %s1602 = scalar_select %p1601, %s21, 1
      %s1603 = scalar_lea.vmem %s5, %s1602
      // Predicated region
      $region37: #{double_conv_forward.3} parent=31 // pred_check
        %p1604 = pneg %p117
      $region38: #{double_conv_forward.3} parent=31 // pred_check_branch
        %1606 = sbr.rel (%p1604) target = $region40
      $region39: #{double_conv_forward.3} parent=31 // pred_region
        %s1607 = smul.u32 8, %s22
      $region40: #{double_conv_forward.3} parent=31 // pred_fallthru
        _
      // Predicated region
      $region41: #{double_conv_forward.3} parent=31 // pred_check
        %p1608 = pneg %p143
      $region42: #{double_conv_forward.3} parent=31 // pred_check_branch
        %1610 = sbr.rel (%p1608) target = $region44
      $region43: #{double_conv_forward.3} parent=31 // pred_region
        _
      $region44: #{double_conv_forward.3} parent=31 // pred_fallthru
        _
      // Predicated region
      $region45: #{double_conv_forward.3} parent=31 // pred_check
        %p1611 = pneg %p169
      $region46: #{double_conv_forward.3} parent=31 // pred_check_branch
        %1613 = sbr.rel (%p1611) target = $region48
      $region47: #{double_conv_forward.3} parent=31 // pred_region
        _
      $region48: #{double_conv_forward.3} parent=31 // pred_fallthru
        _
    $region32: #{double_conv_forward.3} parent=5 // pred_fallthru
      _
    %p1614 = scmp.le.s32.totalorder 2, %s12
    // Predicated region
    $region49: #{double_conv_forward.3} parent=5 // pred_check
      %p1615 = pneg %p1614
    $region50: #{double_conv_forward.3} parent=5 // pred_check_branch
      %1617 = sbr.rel (%p1615) target = $region52
    $region51: #{double_conv_forward.3} parent=5 // pred_region
      %s1618 = ssub.s32 %s12, 2
      // Predicated region
      $region53: #{double_conv_forward.3} parent=51 // pred_check
        %p1619 = pneg %p123
      $region54: #{double_conv_forward.3} parent=51 // pred_check_branch
        %1621 = sbr.rel (%p1619) target = $region56
      $region55: #{double_conv_forward.3} parent=51 // pred_region
        %s1622 = smul.u32 8, %s24
        %p1623 = scmp.lt.s32.totalorder %s23, 1
        %s1624 = scalar_select %p1623, %s23, 1
        %p1625 = scmp.lt.s32.totalorder %s1622, 15
        %s1626 = scalar_select %p1625, %s1622, 15
        %s1627 = smul.addr %s1626, 2
        %s1628 = smul.addr %s1624, 32
        %s1629 = sadd.s32 %s1627, %s1628
        %s1630 = smul.addr %s1629, 4
        %s1631 = scalar_lea.vmem %s3, %s1630
      $region56: #{double_conv_forward.3} parent=51 // pred_fallthru
        _
      // Predicated region
      $region57: #{double_conv_forward.3} parent=51 // pred_check
        %p1632 = pneg %p149
      $region58: #{double_conv_forward.3} parent=51 // pred_check_branch
        %1634 = sbr.rel (%p1632) target = $region60
      $region59: #{double_conv_forward.3} parent=51 // pred_region
        %p1635 = scmp.lt.s32.totalorder %s23, 1
        %s1636 = scalar_select %p1635, %s23, 1
        %s1637 = scalar_lea.vmem %s4, %s1636
      $region60: #{double_conv_forward.3} parent=51 // pred_fallthru
        _
      // Predicated region
      $region61: #{double_conv_forward.3} parent=51 // pred_check
        %p1638 = pneg %p175
      $region62: #{double_conv_forward.3} parent=51 // pred_check_branch
        %1640 = sbr.rel (%p1638) target = $region64
      $region63: #{double_conv_forward.3} parent=51 // pred_region
        %p1641 = scmp.lt.s32.totalorder %s23, 1
        %s1642 = scalar_select %p1641, %s23, 1
        %s1643 = scalar_lea.vmem %s5, %s1642
      $region64: #{double_conv_forward.3} parent=51 // pred_fallthru
        _
    $region52: #{double_conv_forward.3} parent=5 // pred_fallthru
      _
  $region6: #{double_conv_forward.3} parent=0 // loop_footer
    %s16 = sadd.s32 1, %s12
  $region7: #{double_conv_forward.3} parent=0 // loop_footer_branch
    %11 = sbr.rel target = $region3
  $region8: #{double_conv_forward.3} parent=0 // loop_exit
    _

</llo_original>
